<compile_context>
chip_gen: v6e
topology: v6e:2x2x1
jax: 0.10.0
libtpu: 0.0.40
codegen_flags: <defaults>
</compile_context>

<pallas_src>
import functools

import jax
import jax.numpy as jnp
from jax.experimental import pallas as pl
from jax.experimental.pallas import tpu as pltpu


def _fused_conv_kernel(p1_ref, w1_ref, w2_ref, b2_ref, w3_ref, b3_ref,
                       o_ref, col_ref, *, ext, rows_p, chunk, c1, c2, deltas):
    """One batch image per grid step.

    p1_ref  : (1, rows_p, 10)  conv1 im2col patches (cols 0..8) + interior
                               indicator (col 9) in padded-output row space
    w1_ref  : (10, c1)         conv1 weight (rows 0..8) with b1 folded in (row 9)
    w2_ref  : (9*c1, c2)       conv2 weight, rows ordered (tap, cin)
    b2_ref  : (1, c2)
    w3_ref  : (c2, c3)         conv3 (1x1) weight
    b3_ref  : (1, c3)
    o_ref   : (1, rows_p, c3)  flat padded conv3 output (post-ReLU)
    col_ref : VMEM (rows_p + 2*ext, 9*c1) conv2 im2col scratch (row apron = ext)
    """
    # Zero only the apron bands some taps never overwrite; the interior rows
    # of every tap column-block are fully rewritten below, every step.
    zero_band = jnp.zeros((2 * ext, 9 * c1), jnp.float32)
    col_ref[0:2 * ext, :] = zero_band
    col_ref[rows_p:rows_p + 2 * ext, :] = zero_band

    w1 = w1_ref[...]

    # ---- conv1 (+ folded bias) + ReLU, scattered into conv2 im2col layout ----
    # Border / tail rows have all-zero patches AND indicator 0, so z1 == 0
    # there -> they act as conv2's zero padding automatically.
    for m0 in range(0, rows_p, chunk):
        z1 = jnp.maximum(
            jnp.dot(p1_ref[0, m0:m0 + chunk, :], w1,
                    preferred_element_type=jnp.float32), 0.0)      # (chunk, c1)
        for t, d in enumerate(deltas):
            r0 = ext + m0 - d                      # static, in-bounds by apron
            col_ref[r0:r0 + chunk, t * c1:(t + 1) * c1] = z1

    b2 = b2_ref[...]
    w3 = w3_ref[...]
    b3 = b3_ref[...]

    # ---- conv2 (single K=9*c1 MXU matmul) + ReLU + border mask, fused with
    # ---- conv3 (1x1) + ReLU, per aligned 128-row chunk ----
    for m0 in range(0, rows_p, chunk):
        acc = jnp.dot(col_ref[ext + m0:ext + m0 + chunk, :], w2_ref[...],
                      preferred_element_type=jnp.float32)          # (chunk, c2)
        mask = p1_ref[0, m0:m0 + chunk, 9:10]      # interior indicator column
        a2 = jnp.maximum(acc + b2, 0.0) * mask     # zero border -> conv3 ring = relu(b3)
        z3 = jnp.dot(a2, w3, preferred_element_type=jnp.float32) + b3
        o_ref[0, m0:m0 + chunk, :] = jnp.maximum(z3, 0.0).astype(o_ref.dtype)


def model_forward(x_nchw, params):
    """PyTorch-equivalent forward: NCHW in, NCHW out."""
    (w1, b1), (w2, b2), (w3, b3) = params
    N, cin, H, W = x_nchw.shape
    assert cin == 1, "module spec has conv1 in_channels == 1"
    c1 = w1.shape[0]               # 64
    c2 = w2.shape[0]               # 64
    c3 = w3.shape[0]               # 128
    Hp, Wp = H + 2, W + 2
    rows = Hp * Wp
    chunk = 128
    rows_p = ((rows + chunk - 1) // chunk) * chunk          # 384 for 16x16
    ext = ((Wp + 1 + 7) // 8) * 8                           # apron >= max|delta|
    assert rows_p >= 2 * ext

    # --- tiny host-side prep: conv1 im2col (+ indicator col), weight reshapes ---
    x2d = x_nchw[:, 0].astype(jnp.float32)                   # (N, H, W)
    xp = jnp.pad(x2d, ((0, 0), (1, 1), (1, 1)))              # (N, Hp, Wp)
    taps = [xp[:, kh:kh + H, kw:kw + W] for kh in range(3) for kw in range(3)]
    p_core = jnp.stack(taps, axis=-1)                        # (N, H, W, 9)
    p_core = jnp.pad(p_core, ((0, 0), (1, 1), (1, 1), (0, 0)))   # (N, Hp, Wp, 9)
    ind = jnp.zeros((Hp, Wp), jnp.float32).at[1:H + 1, 1:W + 1].set(1.0)
    ind = jnp.broadcast_to(ind[None, :, :, None], (N, Hp, Wp, 1))
    p1 = jnp.concatenate([p_core, ind], axis=-1)             # (N, Hp, Wp, 10)
    p1 = p1.reshape(N, rows, 10)
    p1 = jnp.pad(p1, ((0, 0), (0, rows_p - rows), (0, 0)))   # (N, rows_p, 10)

    # (Cout, Cin, kh, kw) -> (kh*kw*Cin, Cout); fold b1 into an extra w1 row.
    w1f = jnp.transpose(w1, (2, 3, 1, 0)).reshape(9, c1)
    w1f = jnp.concatenate([w1f, b1[None, :]], axis=0)        # (10, c1)
    w2f = jnp.transpose(w2, (2, 3, 1, 0)).reshape(9 * c1, c2)
    w3f = jnp.transpose(w3, (2, 3, 1, 0)).reshape(c2, c3)

    deltas = tuple((kh - 1) * Wp + (kw - 1)
                   for kh in range(3) for kw in range(3))

    kernel = functools.partial(_fused_conv_kernel, ext=ext, rows_p=rows_p,
                               chunk=chunk, c1=c1, c2=c2, deltas=deltas)

    out_flat = pl.pallas_call(
        kernel,
        out_shape=jax.ShapeDtypeStruct((N, rows_p, c3), jnp.float32),
        grid=(N,),
        in_specs=[
            pl.BlockSpec((1, rows_p, 10), lambda n: (n, 0, 0)),   # p1 patches
            pl.BlockSpec((10, c1), lambda n: (0, 0)),             # w1 (+b1)
            pl.BlockSpec((9 * c1, c2), lambda n: (0, 0)),         # w2
            pl.BlockSpec((1, c2), lambda n: (0, 0)),              # b2
            pl.BlockSpec((c2, c3), lambda n: (0, 0)),             # w3
            pl.BlockSpec((1, c3), lambda n: (0, 0)),              # b3
        ],
        out_specs=pl.BlockSpec((1, rows_p, c3), lambda n: (n, 0, 0)),
        scratch_shapes=[pltpu.VMEM((rows_p + 2 * ext, 9 * c1), jnp.float32)],
        compiler_params=pltpu.CompilerParams(
            dimension_semantics=("parallel",)),
    )(p1, w1f, w2f, b2[None, :], w3f, b3[None, :])

    out = out_flat[:, :rows, :].reshape(N, Hp, Wp, c3)
    return jnp.transpose(out, (0, 3, 1, 2))                  # -> NCHW


def _reference_forward(x_nchw, params):
    """Pure-JAX reference (lax conv) for validation."""
    out = x_nchw
    for (w, b), (k, pad) in zip(params, ((3, 1), (3, 1), (1, 1))):
        out = jax.lax.conv_general_dilated(
            out, w, window_strides=(1, 1), padding=((pad, pad), (pad, pad)),
            dimension_numbers=("NCHW", "OIHW", "NCHW"))
        out = jax.nn.relu(out + b[None, :, None, None])
    return out


def _init_params(key):
    def conv_init(key, cout, cin, k):
        kw_, kb_ = jax.random.split(key)
        fan_in = cin * k * k
        scale = 1.0 / jnp.sqrt(fan_in)
        w = jax.random.uniform(kw_, (cout, cin, k, k), jnp.float32, -scale, scale)
        b = jax.random.uniform(kb_, (cout,), jnp.float32, -scale, scale)
        return w, b

    k1, k2, k3 = jax.random.split(key, 3)
    return (conv_init(k1, 64, 1, 3),
            conv_init(k2, 64, 64, 3),
            conv_init(k3, 128, 64, 1))


if __name__ == "__main__":
    key = jax.random.PRNGKey(0)
    kx, kp = jax.random.split(key)

    # Small NCHW input consistent with conv1 (in_channels=1).
    x = jax.random.normal(kx, (2, 1, 16, 16), jnp.float32)
    params = _init_params(kp)

    fwd = jax.jit(model_forward)
    out = jax.block_until_ready(fwd(x, params))
    assert out.shape == (2, 128, 18, 18), out.shape

    ref = jax.block_until_ready(_reference_forward(x, params))
    max_err = float(jnp.max(jnp.abs(out - ref)))
    assert jnp.allclose(out, ref, rtol=1e-4, atol=1e-4), max_err

    print("KERNEL_OK")
</pallas_src>

<mosaic_0001>
module attributes {stable_mosaic.version = 11 : i64} {
  func.func @_fused_conv_kernel(%arg0: i32, %arg1: memref<1x384x10xf32, #tpu.memory_space<vmem>>, %arg2: memref<10x64xf32, #tpu.memory_space<vmem>>, %arg3: memref<576x64xf32, #tpu.memory_space<vmem>>, %arg4: memref<1x64xf32, #tpu.memory_space<vmem>>, %arg5: memref<64x128xf32, #tpu.memory_space<vmem>>, %arg6: memref<1x128xf32, #tpu.memory_space<vmem>>, %arg7: memref<1x384x128xf32, #tpu.memory_space<vmem>>, %arg8: memref<432x576xf32, #tpu.memory_space<vmem>>) attributes {dimension_semantics = [#tpu.dimension_semantics<parallel>], iteration_bounds = array<i64: 2>, scalar_prefetch = 0 : i64, scratch_operands = 1 : i64, tpu.core_type = #tpu.core_type<tc>, window_params = [{transform_indices = @transform_0, window_bounds = array<i64: 1, 384, 10>}, {pipeline_mode = #tpu.pipeline_mode<synchronous>, transform_indices = @transform_1, window_bounds = array<i64: 10, 64>}, {pipeline_mode = #tpu.pipeline_mode<synchronous>, transform_indices = @transform_2, window_bounds = array<i64: 576, 64>}, {pipeline_mode = #tpu.pipeline_mode<synchronous>, transform_indices = @transform_3, window_bounds = array<i64: 1, 64>}, {pipeline_mode = #tpu.pipeline_mode<synchronous>, transform_indices = @transform_4, window_bounds = array<i64: 64, 128>}, {pipeline_mode = #tpu.pipeline_mode<synchronous>, transform_indices = @transform_5, window_bounds = array<i64: 1, 128>}, {transform_indices = @transform_6, window_bounds = array<i64: 1, 384, 128>}]} {
    %cst = arith.constant 0.000000e+00 : f32
    %0 = vector.broadcast %cst : f32 to vector<48x576xf32>
    %c0 = arith.constant 0 : index
    %c0_0 = arith.constant 0 : index
    %1 = vector.load %arg8[%c0, %c0_0] : memref<432x576xf32, #tpu.memory_space<vmem>>, vector<48x576xf32>
    tpu.vector_store %arg8[%c0, %c0_0], %0 {strides = array<i32>} : memref<432x576xf32, #tpu.memory_space<vmem>>, vector<48x576xf32>,
    %c384 = arith.constant 384 : index
    %c0_1 = arith.constant 0 : index
    %2 = vector.load %arg8[%c384, %c0_1] : memref<432x576xf32, #tpu.memory_space<vmem>>, vector<48x576xf32>
    tpu.vector_store %arg8[%c384, %c0_1], %0 {strides = array<i32>} : memref<432x576xf32, #tpu.memory_space<vmem>>, vector<48x576xf32>,
    %c0_2 = arith.constant 0 : index
    %c0_3 = arith.constant 0 : index
    %3 = vector.load %arg2[%c0_2, %c0_3] : memref<10x64xf32, #tpu.memory_space<vmem>>, vector<10x64xf32>
    %c0_4 = arith.constant 0 : index
    %c0_5 = arith.constant 0 : index
    %c0_6 = arith.constant 0 : index
    %4 = vector.load %arg1[%c0_4, %c0_5, %c0_6] : memref<1x384x10xf32, #tpu.memory_space<vmem>>, vector<1x128x10xf32>
    %5 = vector.shape_cast %4 : vector<1x128x10xf32> to vector<128x10xf32>
    %cst_7 = arith.constant dense<0.000000e+00> : vector<128x64xf32>
    %6 = tpu.matmul %5, %3, %cst_7 {dimension_numbers = #tpu.dot_dimension_numbers<[1], [0], [0], [1], [0, 0, 1, 1], [], []>} : vector<128x10xf32>, vector<10x64xf32>, vector<128x64xf32> -> vector<128x64xf32>
    %cst_8 = arith.constant 0.000000e+00 : f32
    %7 = vector.broadcast %cst_8 : f32 to vector<128x64xf32>
    %8 = arith.maximumf %6, %7 : vector<128x64xf32>
    %c43 = arith.constant 43 : index
    %c0_9 = arith.constant 0 : index
    %9 = vector.load %arg8[%c43, %c0_9] : memref<432x576xf32, #tpu.memory_space<vmem>>, vector<128x64xf32>
    tpu.vector_store %arg8[%c43, %c0_9], %8 {strides = array<i32>} : memref<432x576xf32, #tpu.memory_space<vmem>>, vector<128x64xf32>,
    %c42 = arith.constant 42 : index
    %c64 = arith.constant 64 : index
    %10 = vector.load %arg8[%c42, %c64] : memref<432x576xf32, #tpu.memory_space<vmem>>, vector<128x64xf32>
    tpu.vector_store %arg8[%c42, %c64], %8 {strides = array<i32>} : memref<432x576xf32, #tpu.memory_space<vmem>>, vector<128x64xf32>,
    %c41 = arith.constant 41 : index
    %c128 = arith.constant 128 : index
    %11 = vector.load %arg8[%c41, %c128] : memref<432x576xf32, #tpu.memory_space<vmem>>, vector<128x64xf32>
    tpu.vector_store %arg8[%c41, %c128], %8 {strides = array<i32>} : memref<432x576xf32, #tpu.memory_space<vmem>>, vector<128x64xf32>,
    %c25 = arith.constant 25 : index
    %c192 = arith.constant 192 : index
    %12 = vector.load %arg8[%c25, %c192] : memref<432x576xf32, #tpu.memory_space<vmem>>, vector<128x64xf32>
    tpu.vector_store %arg8[%c25, %c192], %8 {strides = array<i32>} : memref<432x576xf32, #tpu.memory_space<vmem>>, vector<128x64xf32>,
    %c24 = arith.constant 24 : index
    %c256 = arith.constant 256 : index
    %13 = vector.load %arg8[%c24, %c256] : memref<432x576xf32, #tpu.memory_space<vmem>>, vector<128x64xf32>
    tpu.vector_store %arg8[%c24, %c256], %8 {strides = array<i32>} : memref<432x576xf32, #tpu.memory_space<vmem>>, vector<128x64xf32>,
    %c23 = arith.constant 23 : index
    %c320 = arith.constant 320 : index
    %14 = vector.load %arg8[%c23, %c320] : memref<432x576xf32, #tpu.memory_space<vmem>>, vector<128x64xf32>
    tpu.vector_store %arg8[%c23, %c320], %8 {strides = array<i32>} : memref<432x576xf32, #tpu.memory_space<vmem>>, vector<128x64xf32>,
    %c7 = arith.constant 7 : index
    %c384_10 = arith.constant 384 : index
    %15 = vector.load %arg8[%c7, %c384_10] : memref<432x576xf32, #tpu.memory_space<vmem>>, vector<128x64xf32>
    tpu.vector_store %arg8[%c7, %c384_10], %8 {strides = array<i32>} : memref<432x576xf32, #tpu.memory_space<vmem>>, vector<128x64xf32>,
    %c6 = arith.constant 6 : index
    %c448 = arith.constant 448 : index
    %16 = vector.load %arg8[%c6, %c448] : memref<432x576xf32, #tpu.memory_space<vmem>>, vector<128x64xf32>
    tpu.vector_store %arg8[%c6, %c448], %8 {strides = array<i32>} : memref<432x576xf32, #tpu.memory_space<vmem>>, vector<128x64xf32>,
    %c5 = arith.constant 5 : index
    %c512 = arith.constant 512 : index
    %17 = vector.load %arg8[%c5, %c512] : memref<432x576xf32, #tpu.memory_space<vmem>>, vector<128x64xf32>
    tpu.vector_store %arg8[%c5, %c512], %8 {strides = array<i32>} : memref<432x576xf32, #tpu.memory_space<vmem>>, vector<128x64xf32>,
    %c0_11 = arith.constant 0 : index
    %c128_12 = arith.constant 128 : index
    %c0_13 = arith.constant 0 : index
    %18 = vector.load %arg1[%c0_11, %c128_12, %c0_13] : memref<1x384x10xf32, #tpu.memory_space<vmem>>, vector<1x128x10xf32>
    %19 = vector.shape_cast %18 : vector<1x128x10xf32> to vector<128x10xf32>
    %cst_14 = arith.constant dense<0.000000e+00> : vector<128x64xf32>
    %20 = tpu.matmul %19, %3, %cst_14 {dimension_numbers = #tpu.dot_dimension_numbers<[1], [0], [0], [1], [0, 0, 1, 1], [], []>} : vector<128x10xf32>, vector<10x64xf32>, vector<128x64xf32> -> vector<128x64xf32>
    %cst_15 = arith.constant 0.000000e+00 : f32
    %21 = vector.broadcast %cst_15 : f32 to vector<128x64xf32>
    %22 = arith.maximumf %20, %21 : vector<128x64xf32>
    %c171 = arith.constant 171 : index
    %c0_16 = arith.constant 0 : index
    %23 = vector.load %arg8[%c171, %c0_16] : memref<432x576xf32, #tpu.memory_space<vmem>>, vector<128x64xf32>
    tpu.vector_store %arg8[%c171, %c0_16], %22 {strides = array<i32>} : memref<432x576xf32, #tpu.memory_space<vmem>>, vector<128x64xf32>,
    %c170 = arith.constant 170 : index
    %c64_17 = arith.constant 64 : index
    %24 = vector.load %arg8[%c170, %c64_17] : memref<432x576xf32, #tpu.memory_space<vmem>>, vector<128x64xf32>
    tpu.vector_store %arg8[%c170, %c64_17], %22 {strides = array<i32>} : memref<432x576xf32, #tpu.memory_space<vmem>>, vector<128x64xf32>,
    %c169 = arith.constant 169 : index
    %c128_18 = arith.constant 128 : index
    %25 = vector.load %arg8[%c169, %c128_18] : memref<432x576xf32, #tpu.memory_space<vmem>>, vector<128x64xf32>
    tpu.vector_store %arg8[%c169, %c128_18], %22 {strides = array<i32>} : memref<432x576xf32, #tpu.memory_space<vmem>>, vector<128x64xf32>,
    %c153 = arith.constant 153 : index
    %c192_19 = arith.constant 192 : index
    %26 = vector.load %arg8[%c153, %c192_19] : memref<432x576xf32, #tpu.memory_space<vmem>>, vector<128x64xf32>
    tpu.vector_store %arg8[%c153, %c192_19], %22 {strides = array<i32>} : memref<432x576xf32, #tpu.memory_space<vmem>>, vector<128x64xf32>,
    %c152 = arith.constant 152 : index
    %c256_20 = arith.constant 256 : index
    %27 = vector.load %arg8[%c152, %c256_20] : memref<432x576xf32, #tpu.memory_space<vmem>>, vector<128x64xf32>
    tpu.vector_store %arg8[%c152, %c256_20], %22 {strides = array<i32>} : memref<432x576xf32, #tpu.memory_space<vmem>>, vector<128x64xf32>,
    %c151 = arith.constant 151 : index
    %c320_21 = arith.constant 320 : index
    %28 = vector.load %arg8[%c151, %c320_21] : memref<432x576xf32, #tpu.memory_space<vmem>>, vector<128x64xf32>
    tpu.vector_store %arg8[%c151, %c320_21], %22 {strides = array<i32>} : memref<432x576xf32, #tpu.memory_space<vmem>>, vector<128x64xf32>,
    %c135 = arith.constant 135 : index
    %c384_22 = arith.constant 384 : index
    %29 = vector.load %arg8[%c135, %c384_22] : memref<432x576xf32, #tpu.memory_space<vmem>>, vector<128x64xf32>
    tpu.vector_store %arg8[%c135, %c384_22], %22 {strides = array<i32>} : memref<432x576xf32, #tpu.memory_space<vmem>>, vector<128x64xf32>,
    %c134 = arith.constant 134 : index
    %c448_23 = arith.constant 448 : index
    %30 = vector.load %arg8[%c134, %c448_23] : memref<432x576xf32, #tpu.memory_space<vmem>>, vector<128x64xf32>
    tpu.vector_store %arg8[%c134, %c448_23], %22 {strides = array<i32>} : memref<432x576xf32, #tpu.memory_space<vmem>>, vector<128x64xf32>,
    %c133 = arith.constant 133 : index
    %c512_24 = arith.constant 512 : index
    %31 = vector.load %arg8[%c133, %c512_24] : memref<432x576xf32, #tpu.memory_space<vmem>>, vector<128x64xf32>
    tpu.vector_store %arg8[%c133, %c512_24], %22 {strides = array<i32>} : memref<432x576xf32, #tpu.memory_space<vmem>>, vector<128x64xf32>,
    %c0_25 = arith.constant 0 : index
    %c256_26 = arith.constant 256 : index
    %c0_27 = arith.constant 0 : index
    %32 = vector.load %arg1[%c0_25, %c256_26, %c0_27] : memref<1x384x10xf32, #tpu.memory_space<vmem>>, vector<1x128x10xf32>
    %33 = vector.shape_cast %32 : vector<1x128x10xf32> to vector<128x10xf32>
    %cst_28 = arith.constant dense<0.000000e+00> : vector<128x64xf32>
    %34 = tpu.matmul %33, %3, %cst_28 {dimension_numbers = #tpu.dot_dimension_numbers<[1], [0], [0], [1], [0, 0, 1, 1], [], []>} : vector<128x10xf32>, vector<10x64xf32>, vector<128x64xf32> -> vector<128x64xf32>
    %cst_29 = arith.constant 0.000000e+00 : f32
    %35 = vector.broadcast %cst_29 : f32 to vector<128x64xf32>
    %36 = arith.maximumf %34, %35 : vector<128x64xf32>
    %c299 = arith.constant 299 : index
    %c0_30 = arith.constant 0 : index
    %37 = vector.load %arg8[%c299, %c0_30] : memref<432x576xf32, #tpu.memory_space<vmem>>, vector<128x64xf32>
    tpu.vector_store %arg8[%c299, %c0_30], %36 {strides = array<i32>} : memref<432x576xf32, #tpu.memory_space<vmem>>, vector<128x64xf32>,
    %c298 = arith.constant 298 : index
    %c64_31 = arith.constant 64 : index
    %38 = vector.load %arg8[%c298, %c64_31] : memref<432x576xf32, #tpu.memory_space<vmem>>, vector<128x64xf32>
    tpu.vector_store %arg8[%c298, %c64_31], %36 {strides = array<i32>} : memref<432x576xf32, #tpu.memory_space<vmem>>, vector<128x64xf32>,
    %c297 = arith.constant 297 : index
    %c128_32 = arith.constant 128 : index
    %39 = vector.load %arg8[%c297, %c128_32] : memref<432x576xf32, #tpu.memory_space<vmem>>, vector<128x64xf32>
    tpu.vector_store %arg8[%c297, %c128_32], %36 {strides = array<i32>} : memref<432x576xf32, #tpu.memory_space<vmem>>, vector<128x64xf32>,
    %c281 = arith.constant 281 : index
    %c192_33 = arith.constant 192 : index
    %40 = vector.load %arg8[%c281, %c192_33] : memref<432x576xf32, #tpu.memory_space<vmem>>, vector<128x64xf32>
    tpu.vector_store %arg8[%c281, %c192_33], %36 {strides = array<i32>} : memref<432x576xf32, #tpu.memory_space<vmem>>, vector<128x64xf32>,
    %c280 = arith.constant 280 : index
    %c256_34 = arith.constant 256 : index
    %41 = vector.load %arg8[%c280, %c256_34] : memref<432x576xf32, #tpu.memory_space<vmem>>, vector<128x64xf32>
    tpu.vector_store %arg8[%c280, %c256_34], %36 {strides = array<i32>} : memref<432x576xf32, #tpu.memory_space<vmem>>, vector<128x64xf32>,
    %c279 = arith.constant 279 : index
    %c320_35 = arith.constant 320 : index
    %42 = vector.load %arg8[%c279, %c320_35] : memref<432x576xf32, #tpu.memory_space<vmem>>, vector<128x64xf32>
    tpu.vector_store %arg8[%c279, %c320_35], %36 {strides = array<i32>} : memref<432x576xf32, #tpu.memory_space<vmem>>, vector<128x64xf32>,
    %c263 = arith.constant 263 : index
    %c384_36 = arith.constant 384 : index
    %43 = vector.load %arg8[%c263, %c384_36] : memref<432x576xf32, #tpu.memory_space<vmem>>, vector<128x64xf32>
    tpu.vector_store %arg8[%c263, %c384_36], %36 {strides = array<i32>} : memref<432x576xf32, #tpu.memory_space<vmem>>, vector<128x64xf32>,
    %c262 = arith.constant 262 : index
    %c448_37 = arith.constant 448 : index
    %44 = vector.load %arg8[%c262, %c448_37] : memref<432x576xf32, #tpu.memory_space<vmem>>, vector<128x64xf32>
    tpu.vector_store %arg8[%c262, %c448_37], %36 {strides = array<i32>} : memref<432x576xf32, #tpu.memory_space<vmem>>, vector<128x64xf32>,
    %c261 = arith.constant 261 : index
    %c512_38 = arith.constant 512 : index
    %45 = vector.load %arg8[%c261, %c512_38] : memref<432x576xf32, #tpu.memory_space<vmem>>, vector<128x64xf32>
    tpu.vector_store %arg8[%c261, %c512_38], %36 {strides = array<i32>} : memref<432x576xf32, #tpu.memory_space<vmem>>, vector<128x64xf32>,
    %c0_39 = arith.constant 0 : index
    %c0_40 = arith.constant 0 : index
    %46 = vector.load %arg4[%c0_39, %c0_40] : memref<1x64xf32, #tpu.memory_space<vmem>>, vector<1x64xf32>
    %c0_41 = arith.constant 0 : index
    %c0_42 = arith.constant 0 : index
    %47 = vector.load %arg5[%c0_41, %c0_42] : memref<64x128xf32, #tpu.memory_space<vmem>>, vector<64x128xf32>
    %c0_43 = arith.constant 0 : index
    %c0_44 = arith.constant 0 : index
    %48 = vector.load %arg6[%c0_43, %c0_44] : memref<1x128xf32, #tpu.memory_space<vmem>>, vector<1x128xf32>
    %c24_45 = arith.constant 24 : index
    %c0_46 = arith.constant 0 : index
    %49 = vector.load %arg8[%c24_45, %c0_46] : memref<432x576xf32, #tpu.memory_space<vmem>>, vector<128x576xf32>
    %c0_47 = arith.constant 0 : index
    %c0_48 = arith.constant 0 : index
    %50 = vector.load %arg3[%c0_47, %c0_48] : memref<576x64xf32, #tpu.memory_space<vmem>>, vector<576x64xf32>
    %cst_49 = arith.constant dense<0.000000e+00> : vector<128x64xf32>
    %51 = tpu.matmul %49, %50, %cst_49 {dimension_numbers = #tpu.dot_dimension_numbers<[1], [0], [0], [1], [0, 0, 1, 1], [], []>} : vector<128x576xf32>, vector<576x64xf32>, vector<128x64xf32> -> vector<128x64xf32>
    %c0_50 = arith.constant 0 : index
    %c0_51 = arith.constant 0 : index
    %c9 = arith.constant 9 : index
    %52 = vector.load %arg1[%c0_50, %c0_51, %c9] : memref<1x384x10xf32, #tpu.memory_space<vmem>>, vector<1x128x1xf32>
    %53 = vector.shape_cast %52 : vector<1x128x1xf32> to vector<128x1xf32>
    %54 = vector.broadcast %46 : vector<1x64xf32> to vector<128x64xf32>
    %55 = arith.addf %51, %54 : vector<128x64xf32>
    %cst_52 = arith.constant 0.000000e+00 : f32
    %56 = vector.broadcast %cst_52 : f32 to vector<128x64xf32>
    %57 = arith.maximumf %55, %56 : vector<128x64xf32>
    %58 = vector.broadcast %53 : vector<128x1xf32> to vector<128x64xf32>
    %59 = arith.mulf %57, %58 : vector<128x64xf32>
    %cst_53 = arith.constant dense<0.000000e+00> : vector<128x128xf32>
    %60 = tpu.matmul %59, %47, %cst_53 {dimension_numbers = #tpu.dot_dimension_numbers<[1], [0], [0], [1], [0, 0, 1, 1], [], []>} : vector<128x64xf32>, vector<64x128xf32>, vector<128x128xf32> -> vector<128x128xf32>
    %61 = vector.broadcast %48 : vector<1x128xf32> to vector<128x128xf32>
    %62 = arith.addf %60, %61 : vector<128x128xf32>
    %cst_54 = arith.constant 0.000000e+00 : f32
    %63 = vector.broadcast %cst_54 : f32 to vector<128x128xf32>
    %64 = arith.maximumf %62, %63 : vector<128x128xf32>
    %c0_55 = arith.constant 0 : index
    %c0_56 = arith.constant 0 : index
    %c0_57 = arith.constant 0 : index
    %65 = vector.load %arg7[%c0_55, %c0_56, %c0_57] : memref<1x384x128xf32, #tpu.memory_space<vmem>>, vector<1x128x128xf32>
    %66 = vector.shape_cast %65 : vector<1x128x128xf32> to vector<128x128xf32>
    %67 = vector.shape_cast %64 : vector<128x128xf32> to vector<1x128x128xf32>
    tpu.vector_store %arg7[%c0_55, %c0_56, %c0_57], %67 {strides = array<i32>} : memref<1x384x128xf32, #tpu.memory_space<vmem>>, vector<1x128x128xf32>,
    %c152_58 = arith.constant 152 : index
    %c0_59 = arith.constant 0 : index
    %68 = vector.load %arg8[%c152_58, %c0_59] : memref<432x576xf32, #tpu.memory_space<vmem>>, vector<128x576xf32>
    %c0_60 = arith.constant 0 : index
    %c0_61 = arith.constant 0 : index
    %69 = vector.load %arg3[%c0_60, %c0_61] : memref<576x64xf32, #tpu.memory_space<vmem>>, vector<576x64xf32>
    %cst_62 = arith.constant dense<0.000000e+00> : vector<128x64xf32>
    %70 = tpu.matmul %68, %69, %cst_62 {dimension_numbers = #tpu.dot_dimension_numbers<[1], [0], [0], [1], [0, 0, 1, 1], [], []>} : vector<128x576xf32>, vector<576x64xf32>, vector<128x64xf32> -> vector<128x64xf32>
    %c0_63 = arith.constant 0 : index
    %c128_64 = arith.constant 128 : index
    %c9_65 = arith.constant 9 : index
    %71 = vector.load %arg1[%c0_63, %c128_64, %c9_65] : memref<1x384x10xf32, #tpu.memory_space<vmem>>, vector<1x128x1xf32>
    %72 = vector.shape_cast %71 : vector<1x128x1xf32> to vector<128x1xf32>
    %73 = vector.broadcast %46 : vector<1x64xf32> to vector<128x64xf32>
    %74 = arith.addf %70, %73 : vector<128x64xf32>
    %cst_66 = arith.constant 0.000000e+00 : f32
    %75 = vector.broadcast %cst_66 : f32 to vector<128x64xf32>
    %76 = arith.maximumf %74, %75 : vector<128x64xf32>
    %77 = vector.broadcast %72 : vector<128x1xf32> to vector<128x64xf32>
    %78 = arith.mulf %76, %77 : vector<128x64xf32>
    %cst_67 = arith.constant dense<0.000000e+00> : vector<128x128xf32>
    %79 = tpu.matmul %78, %47, %cst_67 {dimension_numbers = #tpu.dot_dimension_numbers<[1], [0], [0], [1], [0, 0, 1, 1], [], []>} : vector<128x64xf32>, vector<64x128xf32>, vector<128x128xf32> -> vector<128x128xf32>
    %80 = vector.broadcast %48 : vector<1x128xf32> to vector<128x128xf32>
    %81 = arith.addf %79, %80 : vector<128x128xf32>
    %cst_68 = arith.constant 0.000000e+00 : f32
    %82 = vector.broadcast %cst_68 : f32 to vector<128x128xf32>
    %83 = arith.maximumf %81, %82 : vector<128x128xf32>
    %c0_69 = arith.constant 0 : index
    %c128_70 = arith.constant 128 : index
    %c0_71 = arith.constant 0 : index
    %84 = vector.load %arg7[%c0_69, %c128_70, %c0_71] : memref<1x384x128xf32, #tpu.memory_space<vmem>>, vector<1x128x128xf32>
    %85 = vector.shape_cast %84 : vector<1x128x128xf32> to vector<128x128xf32>
    %86 = vector.shape_cast %83 : vector<128x128xf32> to vector<1x128x128xf32>
    tpu.vector_store %arg7[%c0_69, %c128_70, %c0_71], %86 {strides = array<i32>} : memref<1x384x128xf32, #tpu.memory_space<vmem>>, vector<1x128x128xf32>,
    %c280_72 = arith.constant 280 : index
    %c0_73 = arith.constant 0 : index
    %87 = vector.load %arg8[%c280_72, %c0_73] : memref<432x576xf32, #tpu.memory_space<vmem>>, vector<128x576xf32>
    %c0_74 = arith.constant 0 : index
    %c0_75 = arith.constant 0 : index
    %88 = vector.load %arg3[%c0_74, %c0_75] : memref<576x64xf32, #tpu.memory_space<vmem>>, vector<576x64xf32>
    %cst_76 = arith.constant dense<0.000000e+00> : vector<128x64xf32>
    %89 = tpu.matmul %87, %88, %cst_76 {dimension_numbers = #tpu.dot_dimension_numbers<[1], [0], [0], [1], [0, 0, 1, 1], [], []>} : vector<128x576xf32>, vector<576x64xf32>, vector<128x64xf32> -> vector<128x64xf32>
    %c0_77 = arith.constant 0 : index
    %c256_78 = arith.constant 256 : index
    %c9_79 = arith.constant 9 : index
    %90 = vector.load %arg1[%c0_77, %c256_78, %c9_79] : memref<1x384x10xf32, #tpu.memory_space<vmem>>, vector<1x128x1xf32>
    %91 = vector.shape_cast %90 : vector<1x128x1xf32> to vector<128x1xf32>
    %92 = vector.broadcast %46 : vector<1x64xf32> to vector<128x64xf32>
    %93 = arith.addf %89, %92 : vector<128x64xf32>
    %cst_80 = arith.constant 0.000000e+00 : f32
    %94 = vector.broadcast %cst_80 : f32 to vector<128x64xf32>
    %95 = arith.maximumf %93, %94 : vector<128x64xf32>
    %96 = vector.broadcast %91 : vector<128x1xf32> to vector<128x64xf32>
    %97 = arith.mulf %95, %96 : vector<128x64xf32>
    %cst_81 = arith.constant dense<0.000000e+00> : vector<128x128xf32>
    %98 = tpu.matmul %97, %47, %cst_81 {dimension_numbers = #tpu.dot_dimension_numbers<[1], [0], [0], [1], [0, 0, 1, 1], [], []>} : vector<128x64xf32>, vector<64x128xf32>, vector<128x128xf32> -> vector<128x128xf32>
    %99 = vector.broadcast %48 : vector<1x128xf32> to vector<128x128xf32>
    %100 = arith.addf %98, %99 : vector<128x128xf32>
    %cst_82 = arith.constant 0.000000e+00 : f32
    %101 = vector.broadcast %cst_82 : f32 to vector<128x128xf32>
    %102 = arith.maximumf %100, %101 : vector<128x128xf32>
    %c0_83 = arith.constant 0 : index
    %c256_84 = arith.constant 256 : index
    %c0_85 = arith.constant 0 : index
    %103 = vector.load %arg7[%c0_83, %c256_84, %c0_85] : memref<1x384x128xf32, #tpu.memory_space<vmem>>, vector<1x128x128xf32>
    %104 = vector.shape_cast %103 : vector<1x128x128xf32> to vector<128x128xf32>
    %105 = vector.shape_cast %102 : vector<128x128xf32> to vector<1x128x128xf32>
    tpu.vector_store %arg7[%c0_83, %c256_84, %c0_85], %105 {strides = array<i32>} : memref<1x384x128xf32, #tpu.memory_space<vmem>>, vector<1x128x128xf32>,
    return
  }
  func.func @transform_0(%arg0: i32) -> (i32, i32, i32) {
    %c0_i32 = arith.constant 0 : i32
    %c0_i32_0 = arith.constant 0 : i32
    %c0_i32_1 = arith.constant 0 : i32
    return %arg0, %c0_i32, %c0_i32_0 : i32, i32, i32
  }
  func.func @transform_1(%arg0: i32) -> (i32, i32) {
    %c0_i32 = arith.constant 0 : i32
    %c0_i32_0 = arith.constant 0 : i32
    %c0_i32_1 = arith.constant 0 : i32
    return %c0_i32, %c0_i32_0 : i32, i32
  }
  func.func @transform_2(%arg0: i32) -> (i32, i32) {
    %c0_i32 = arith.constant 0 : i32
    %c0_i32_0 = arith.constant 0 : i32
    %c0_i32_1 = arith.constant 0 : i32
    return %c0_i32, %c0_i32_0 : i32, i32
  }
  func.func @transform_3(%arg0: i32) -> (i32, i32) {
    %c0_i32 = arith.constant 0 : i32
    %c0_i32_0 = arith.constant 0 : i32
    %c0_i32_1 = arith.constant 0 : i32
    return %c0_i32, %c0_i32_0 : i32, i32
  }
  func.func @transform_4(%arg0: i32) -> (i32, i32) {
    %c0_i32 = arith.constant 0 : i32
    %c0_i32_0 = arith.constant 0 : i32
    %c0_i32_1 = arith.constant 0 : i32
    return %c0_i32, %c0_i32_0 : i32, i32
  }
  func.func @transform_5(%arg0: i32) -> (i32, i32) {
    %c0_i32 = arith.constant 0 : i32
    %c0_i32_0 = arith.constant 0 : i32
    %c0_i32_1 = arith.constant 0 : i32
    return %c0_i32, %c0_i32_0 : i32, i32
  }
  func.func @transform_6(%arg0: i32) -> (i32, i32, i32) {
    %c0_i32 = arith.constant 0 : i32
    %c0_i32_0 = arith.constant 0 : i32
    %c0_i32_1 = arith.constant 0 : i32
    return %arg0, %c0_i32, %c0_i32_0 : i32, i32, i32
  }
}

</mosaic_0001>

<llo_original>
// kernel: model_forward.1
$region0: #{model_forward.1}
  #allocation0 [shape = 'u32[]', space=smem, size = 0x4, offset = 0x4, fixed_abs, tag = 'smem constant byte address 0x4 - core index']
  #allocation1 [shape = 'u32[144,128]{1,0:T(1,128)}', space=vmem, size = 0x12000, scoped, tag = 'internal scratch']
  #allocation2 [shape = 'f32[432,576]{1,0:T(8,128)}', space=vmem, size = 0x10e000, scoped, tag = 'scratch operand']
  %s0 = inlined_call_operand.vmem [shape: f32[2,384,10], index: 0, kind: input, shape index: {}]
  %s1 = inlined_call_operand.vmem [shape: f32[10,64], index: 1, kind: input, shape index: {}]
  %s2 = inlined_call_operand.vmem [shape: f32[576,64], index: 2, kind: input, shape index: {}]
  %s3 = inlined_call_operand.vmem [shape: f32[1,64], index: 3, kind: input, shape index: {}]
  %s4 = inlined_call_operand.vmem [shape: f32[64,128], index: 4, kind: input, shape index: {}]
  %s5 = inlined_call_operand.vmem [shape: f32[1,128], index: 5, kind: input, shape index: {}]
  %s6 = inlined_call_operand.vmem [shape: f32[2,384,128], index: 6, kind: output, shape index: {}]
  %s7 = sld [smem:[#allocation0]]
  $region57: #{model_forward.1} parent=0
    _
  %s9 = ssub.s32 1, %s7
  %s10 = scalar_select 0, %s9, %s7
  loop: start=0, step=1, limit=4
  $region2: #{model_forward.1} parent=0 // loop_pre_header
    _
  $region3: #{model_forward.1} parent=0 // loop_header
    %s12 = sphi 0, %s16
    %p13 = scmp.ge.s32.totalorder %s12, 4
    %s22 = sphi 0, %s24
    %s25 = sphi 0, %s22
    %s26 = sphi 0, %s25
    %s42 = sphi 0, %s26
    %s46 = sphi 0, %s46
    %s48 = sphi 0, %s46
    %s49 = sphi 0, %s48
    %s63 = sphi 0, %s49
    %s67 = sphi 0, %s67
    %s69 = sphi 0, %s67
    %s70 = sphi 0, %s69
    %s84 = sphi 0, %s70
    %s88 = sphi 0, %s88
    %s90 = sphi 0, %s88
    %s91 = sphi 0, %s90
    %s105 = sphi 0, %s91
    %s109 = sphi 0, %s109
    %s111 = sphi 0, %s109
    %s112 = sphi 0, %s111
    %s126 = sphi 0, %s112
    %s130 = sphi 0, %s130
    %s132 = sphi 0, %s130
    %s133 = sphi 0, %s132
    %s147 = sphi 0, %s133
    %s153 = sphi 0, %s155
    %s156 = sphi 0, %s153
    %s157 = sphi 0, %s156
    %s173 = sphi 0, %s157
  $region4: #{model_forward.1} parent=0 // loop_header_branch
    %15 = sbr.rel (%p13) target = $region8
  $region5: #{model_forward.1} parent=0 // loop_body
    %s17 = ssub.s32 %s12, 1
    %s18 = ssub.s32 %s12, 2
    %s19 = sadd.s32 %s12, 1
    %s20 = ssub.s32 %s12, %s19
    %p21 = scmp.eq.s32.totalorder %s20, 0
    %s23 = sadd.s32 %s22, 1
    %s24 = scalar_select %p21, %s22, %s23
    %p27 = pneg %p21
    %p28 = scmp.eq.s32.totalorder %s12, 1
    %p29 = por %p27, %p28
    %p30 = scmp.ne.s32.totalorder %s22, %s25
    %p31 = scmp.eq.s32.totalorder %s12, 0
    %p32 = por %p30, %p31
    %p33 = scmp.ne.s32.totalorder %s22, %s25
    %p34 = scmp.eq.s32.totalorder %s17, 1
    %p35 = por %p33, %p34
    %p36 = scmp.ne.s32.totalorder %s25, %s26
    %p37 = scmp.eq.s32.totalorder %s17, 0
    %p38 = por %p36, %p37
    %p39 = scmp.ne.s32.totalorder %s25, %s26
    %p40 = scmp.eq.s32.totalorder %s18, 1
    %p41 = por %p39, %p40
    %p43 = scmp.ne.s32.totalorder %s26, %s42
    %p44 = scmp.eq.s32.totalorder %s18, 0
    %p45 = por %p43, %p44
    %s47 = sadd.s32 %s46, 1
    %p50 = scmp.eq.s32.totalorder %s12, 1
    %p51 = scmp.ne.s32.totalorder %s46, %s48
    %p52 = scmp.eq.s32.totalorder %s12, 0
    %p53 = por %p51, %p52
    %p54 = scmp.ne.s32.totalorder %s46, %s48
    %p55 = scmp.eq.s32.totalorder %s17, 1
    %p56 = por %p54, %p55
    %p57 = scmp.ne.s32.totalorder %s48, %s49
    %p58 = scmp.eq.s32.totalorder %s17, 0
    %p59 = por %p57, %p58
    %p60 = scmp.ne.s32.totalorder %s48, %s49
    %p61 = scmp.eq.s32.totalorder %s18, 1
    %p62 = por %p60, %p61
    %p64 = scmp.ne.s32.totalorder %s49, %s63
    %p65 = scmp.eq.s32.totalorder %s18, 0
    %p66 = por %p64, %p65
    %s68 = sadd.s32 %s67, 1
    %p71 = scmp.eq.s32.totalorder %s12, 1
    %p72 = scmp.ne.s32.totalorder %s67, %s69
    %p73 = scmp.eq.s32.totalorder %s12, 0
    %p74 = por %p72, %p73
    %p75 = scmp.ne.s32.totalorder %s67, %s69
    %p76 = scmp.eq.s32.totalorder %s17, 1
    %p77 = por %p75, %p76
    %p78 = scmp.ne.s32.totalorder %s69, %s70
    %p79 = scmp.eq.s32.totalorder %s17, 0
    %p80 = por %p78, %p79
    %p81 = scmp.ne.s32.totalorder %s69, %s70
    %p82 = scmp.eq.s32.totalorder %s18, 1
    %p83 = por %p81, %p82
    %p85 = scmp.ne.s32.totalorder %s70, %s84
    %p86 = scmp.eq.s32.totalorder %s18, 0
    %p87 = por %p85, %p86
    %s89 = sadd.s32 %s88, 1
    %p92 = scmp.eq.s32.totalorder %s12, 1
    %p93 = scmp.ne.s32.totalorder %s88, %s90
    %p94 = scmp.eq.s32.totalorder %s12, 0
    %p95 = por %p93, %p94
    %p96 = scmp.ne.s32.totalorder %s88, %s90
    %p97 = scmp.eq.s32.totalorder %s17, 1
    %p98 = por %p96, %p97
    %p99 = scmp.ne.s32.totalorder %s90, %s91
    %p100 = scmp.eq.s32.totalorder %s17, 0
    %p101 = por %p99, %p100
    %p102 = scmp.ne.s32.totalorder %s90, %s91
    %p103 = scmp.eq.s32.totalorder %s18, 1
    %p104 = por %p102, %p103
    %p106 = scmp.ne.s32.totalorder %s91, %s105
    %p107 = scmp.eq.s32.totalorder %s18, 0
    %p108 = por %p106, %p107
    %s110 = sadd.s32 %s109, 1
    %p113 = scmp.eq.s32.totalorder %s12, 1
    %p114 = scmp.ne.s32.totalorder %s109, %s111
    %p115 = scmp.eq.s32.totalorder %s12, 0
    %p116 = por %p114, %p115
    %p117 = scmp.ne.s32.totalorder %s109, %s111
    %p118 = scmp.eq.s32.totalorder %s17, 1
    %p119 = por %p117, %p118
    %p120 = scmp.ne.s32.totalorder %s111, %s112
    %p121 = scmp.eq.s32.totalorder %s17, 0
    %p122 = por %p120, %p121
    %p123 = scmp.ne.s32.totalorder %s111, %s112
    %p124 = scmp.eq.s32.totalorder %s18, 1
    %p125 = por %p123, %p124
    %p127 = scmp.ne.s32.totalorder %s112, %s126
    %p128 = scmp.eq.s32.totalorder %s18, 0
    %p129 = por %p127, %p128
    %s131 = sadd.s32 %s130, 1
    %p134 = scmp.eq.s32.totalorder %s12, 1
    %p135 = scmp.ne.s32.totalorder %s130, %s132
    %p136 = scmp.eq.s32.totalorder %s12, 0
    %p137 = por %p135, %p136
    %p138 = scmp.ne.s32.totalorder %s130, %s132
    %p139 = scmp.eq.s32.totalorder %s17, 1
    %p140 = por %p138, %p139
    %p141 = scmp.ne.s32.totalorder %s132, %s133
    %p142 = scmp.eq.s32.totalorder %s17, 0
    %p143 = por %p141, %p142
    %p144 = scmp.ne.s32.totalorder %s132, %s133
    %p145 = scmp.eq.s32.totalorder %s18, 1
    %p146 = por %p144, %p145
    %p148 = scmp.ne.s32.totalorder %s133, %s147
    %p149 = scmp.eq.s32.totalorder %s18, 0
    %p150 = por %p148, %p149
    %s151 = ssub.s32 %s12, %s19
    %p152 = scmp.eq.s32.totalorder %s151, 0
    %s154 = sadd.s32 %s153, 1
    %s155 = scalar_select %p152, %s153, %s154
    %p158 = pneg %p152
    %p159 = scmp.eq.s32.totalorder %s12, 1
    %p160 = por %p158, %p159
    %p161 = scmp.ne.s32.totalorder %s153, %s156
    %p162 = scmp.eq.s32.totalorder %s12, 0
    %p163 = por %p161, %p162
    %p164 = scmp.ne.s32.totalorder %s153, %s156
    %p165 = scmp.eq.s32.totalorder %s17, 1
    %p166 = por %p164, %p165
    %p167 = scmp.ne.s32.totalorder %s156, %s157
    %p168 = scmp.eq.s32.totalorder %s17, 0
    %p169 = por %p167, %p168
    %p170 = scmp.ne.s32.totalorder %s156, %s157
    %p171 = scmp.eq.s32.totalorder %s18, 1
    %p172 = por %p170, %p171
    %p174 = scmp.ne.s32.totalorder %s157, %s173
    %p175 = scmp.eq.s32.totalorder %s18, 0
    %p176 = por %p174, %p175
    %p177 = scmp.le.s32.totalorder 1, %s12
    %p178 = scmp.lt.s32.totalorder %s12, 3
    %p179 = pnand %p177, %p178
    %p180 = pneg %p179
    // Predicated region
    $region9: #{model_forward.1} parent=5 // pred_check
      _
    $region10: #{model_forward.1} parent=5 // pred_check_branch
      %182 = sbr.rel (%p179) target = $region12
    $region11: #{model_forward.1} parent=5 // pred_region
      %s183 = ssub.s32 %s12, 1
      // Predicated region
      $region13: #{model_forward.1} parent=11 // pred_check
        %p184 = pneg %p59
      $region14: #{model_forward.1} parent=11 // pred_check_branch
        %186 = sbr.rel (%p184) target = $region16
      $region15: #{model_forward.1} parent=11 // pred_region
        _
      $region16: #{model_forward.1} parent=11 // pred_fallthru
        _
      // Predicated region
      $region17: #{model_forward.1} parent=11 // pred_check
        %p187 = pneg %p80
      $region18: #{model_forward.1} parent=11 // pred_check_branch
        %189 = sbr.rel (%p187) target = $region20
      $region19: #{model_forward.1} parent=11 // pred_region
        _
      $region20: #{model_forward.1} parent=11 // pred_fallthru
        _
      // Predicated region
      $region21: #{model_forward.1} parent=11 // pred_check
        %p190 = pneg %p101
      $region22: #{model_forward.1} parent=11 // pred_check_branch
        %192 = sbr.rel (%p190) target = $region24
      $region23: #{model_forward.1} parent=11 // pred_region
        _
      $region24: #{model_forward.1} parent=11 // pred_fallthru
        _
      // Predicated region
      $region25: #{model_forward.1} parent=11 // pred_check
        %p193 = pneg %p122
      $region26: #{model_forward.1} parent=11 // pred_check_branch
        %195 = sbr.rel (%p193) target = $region28
      $region27: #{model_forward.1} parent=11 // pred_region
        _
      $region28: #{model_forward.1} parent=11 // pred_fallthru
        _
      // Predicated region
      $region29: #{model_forward.1} parent=11 // pred_check
        %p196 = pneg %p143
      $region30: #{model_forward.1} parent=11 // pred_check_branch
        %198 = sbr.rel (%p196) target = $region32
      $region31: #{model_forward.1} parent=11 // pred_region
        _
      $region32: #{model_forward.1} parent=11 // pred_fallthru
        _
    $region12: #{model_forward.1} parent=5 // pred_fallthru
      _
    %p199 = scmp.lt.s32.totalorder %s12, 2
    // Predicated region
    $region33: #{model_forward.1} parent=5 // pred_check
      %p200 = pneg %p199
    $region34: #{model_forward.1} parent=5 // pred_check_branch
      %202 = sbr.rel (%p200) target = $region36
    $region35: #{model_forward.1} parent=5 // pred_region
      // Predicated region
      $region37: #{model_forward.1} parent=35 // pred_check
        %p203 = pneg %p32
      $region38: #{model_forward.1} parent=35 // pred_check_branch
        %205 = sbr.rel (%p203) target = $region40
      $region39: #{model_forward.1} parent=35 // pred_region
        %p206 = scmp.lt.s32.totalorder %s12, 1
        %s207 = scalar_select %p206, %s12, 1
        %s208 = smul.addr %s207, 48
        %s209 = smul.addr %s208, 8
        %s210 = scalar_lea.vmem %s0, %s209
      $region40: #{model_forward.1} parent=35 // pred_fallthru
        _
    $region36: #{model_forward.1} parent=5 // pred_fallthru
      _
    %p211 = scmp.le.s32.totalorder 1, %s12
    %p212 = scmp.lt.s32.totalorder %s12, 3
    %p213 = pnand %p211, %p212
    %p214 = pneg %p213
    // Predicated region
    $region41: #{model_forward.1} parent=5 // pred_check
      _
    $region42: #{model_forward.1} parent=5 // pred_check_branch
      %216 = sbr.rel (%p213) target = $region44
    $region43: #{model_forward.1} parent=5 // pred_region
      %s217 = ssub.s32 %s12, 1
      %p218 = scmp.lt.s32.totalorder %s17, 1
      %s219 = scalar_select %p218, %s17, 1
      %s220 = smul.addr %s219, 48
      %s221 = smul.addr %s220, 8
      %s222 = scalar_lea.vmem %s0, %s221
      %p223 = pneg %p38
      %p224 = pneg %p35
      %p225 = pneg %p59
      %p226 = pneg %p56
      %p227 = pneg %p80
      %p228 = pneg %p77
      %p229 = pneg %p101
      %p230 = pneg %p98
      %p231 = pneg %p122
      %p232 = pneg %p119
      %p233 = pneg %p143
      %p234 = pneg %p140
      %p235 = pneg %p169
      %p236 = pneg %p166
      %p237 = scmp.lt.s32.totalorder %s17, 1
      %s238 = scalar_select %p237, %s17, 1
      %s239 = smul.addr %s238, 48
      %s240 = smul.addr %s239, 8
      %s241 = scalar_lea.vmem %s6, %s240
      %p242 = scmp.lt.s32.totalorder %s17, 1
      %s243 = scalar_select %p242, %s17, 1
      %s244 = smul.addr %s243, 48
      %s245 = smul.addr %s244, 8
      %s246 = scalar_lea.vmem %s0, %s245
      %p247 = scmp.lt.s32.totalorder %s17, 1
      %s248 = scalar_select %p247, %s17, 1
      %s249 = smul.addr %s248, 48
      %s250 = smul.addr %s249, 8
      %s251 = scalar_lea.vmem %s6, %s250
      %252 = vst [vmem:[#allocation2] sm:$0xff] 0.0
      %253 = vst [vmem:[#allocation2 + $0x8] sm:$0xff] 0.0
      %254 = vst [vmem:[#allocation2 + $0x10] sm:$0xff] 0.0
      %255 = vst [vmem:[#allocation2 + $0x18] sm:$0xff] 0.0
      %vm256 = vcmask 523264
      %257 = vst.msk [vmem:[#allocation2 + $0x20] sm:$0xff] %vm256, 0.0
      %258 = vst [vmem:[#allocation2 + $0x28] sm:$0xff] 0.0
      %259 = vst [vmem:[#allocation2 + $0x30] sm:$0xff] 0.0
      %260 = vst [vmem:[#allocation2 + $0x38] sm:$0xff] 0.0
      %261 = vst [vmem:[#allocation2 + $0x40] sm:$0xff] 0.0
      %262 = vst.msk [vmem:[#allocation2 + $0x48] sm:$0xff] %vm256, 0.0
      %263 = vst [vmem:[#allocation2 + $0x50] sm:$0xff] 0.0
      %264 = vst [vmem:[#allocation2 + $0x58] sm:$0xff] 0.0
      %265 = vst [vmem:[#allocation2 + $0x60] sm:$0xff] 0.0
      %266 = vst [vmem:[#allocation2 + $0x68] sm:$0xff] 0.0
      %267 = vst.msk [vmem:[#allocation2 + $0x70] sm:$0xff] %vm256, 0.0
      %268 = vst [vmem:[#allocation2 + $0x78] sm:$0xff] 0.0
      %269 = vst [vmem:[#allocation2 + $0x80] sm:$0xff] 0.0
      %270 = vst [vmem:[#allocation2 + $0x88] sm:$0xff] 0.0
      %271 = vst [vmem:[#allocation2 + $0x90] sm:$0xff] 0.0
      %272 = vst.msk [vmem:[#allocation2 + $0x98] sm:$0xff] %vm256, 0.0
      %273 = vst [vmem:[#allocation2 + $0xa0] sm:$0xff] 0.0
      %274 = vst [vmem:[#allocation2 + $0xa8] sm:$0xff] 0.0
      %275 = vst [vmem:[#allocation2 + $0xb0] sm:$0xff] 0.0
      %276 = vst [vmem:[#allocation2 + $0xb8] sm:$0xff] 0.0
      %277 = vst.msk [vmem:[#allocation2 + $0xc0] sm:$0xff] %vm256, 0.0
      %278 = vst [vmem:[#allocation2 + $0xc8] sm:$0xff] 0.0
      %279 = vst [vmem:[#allocation2 + $0xd0] sm:$0xff] 0.0
      %280 = vst [vmem:[#allocation2 + $0xd8] sm:$0xff] 0.0
      %281 = vst [vmem:[#allocation2 + $0xe0] sm:$0xff] 0.0
      %282 = vst.msk [vmem:[#allocation2 + $0xe8] sm:$0xff] %vm256, 0.0
      %283 = vst [vmem:[#allocation2 + $0x780] sm:$0xff] 0.0
      %284 = vst [vmem:[#allocation2 + $0x788] sm:$0xff] 0.0
      %285 = vst [vmem:[#allocation2 + $0x790] sm:$0xff] 0.0
      %286 = vst [vmem:[#allocation2 + $0x798] sm:$0xff] 0.0
      %287 = vst.msk [vmem:[#allocation2 + $0x7a0] sm:$0xff] %vm256, 0.0
      %288 = vst [vmem:[#allocation2 + $0x7a8] sm:$0xff] 0.0
      %289 = vst [vmem:[#allocation2 + $0x7b0] sm:$0xff] 0.0
      %290 = vst [vmem:[#allocation2 + $0x7b8] sm:$0xff] 0.0
      %291 = vst [vmem:[#allocation2 + $0x7c0] sm:$0xff] 0.0
      %292 = vst.msk [vmem:[#allocation2 + $0x7c8] sm:$0xff] %vm256, 0.0
      %293 = vst [vmem:[#allocation2 + $0x7d0] sm:$0xff] 0.0
      %294 = vst [vmem:[#allocation2 + $0x7d8] sm:$0xff] 0.0
      %295 = vst [vmem:[#allocation2 + $0x7e0] sm:$0xff] 0.0
      %296 = vst [vmem:[#allocation2 + $0x7e8] sm:$0xff] 0.0
      %297 = vst.msk [vmem:[#allocation2 + $0x7f0] sm:$0xff] %vm256, 0.0
      %298 = vst [vmem:[#allocation2 + $0x7f8] sm:$0xff] 0.0
      %299 = vst [vmem:[#allocation2 + $0x800] sm:$0xff] 0.0
      %300 = vst [vmem:[#allocation2 + $0x808] sm:$0xff] 0.0
      %301 = vst [vmem:[#allocation2 + $0x810] sm:$0xff] 0.0
      %302 = vst.msk [vmem:[#allocation2 + $0x818] sm:$0xff] %vm256, 0.0
      %303 = vst [vmem:[#allocation2 + $0x820] sm:$0xff] 0.0
      %304 = vst [vmem:[#allocation2 + $0x828] sm:$0xff] 0.0
      %305 = vst [vmem:[#allocation2 + $0x830] sm:$0xff] 0.0
      %306 = vst [vmem:[#allocation2 + $0x838] sm:$0xff] 0.0
      %307 = vst.msk [vmem:[#allocation2 + $0x840] sm:$0xff] %vm256, 0.0
      %308 = vst [vmem:[#allocation2 + $0x848] sm:$0xff] 0.0
      %309 = vst [vmem:[#allocation2 + $0x850] sm:$0xff] 0.0
      %310 = vst [vmem:[#allocation2 + $0x858] sm:$0xff] 0.0
      %311 = vst [vmem:[#allocation2 + $0x860] sm:$0xff] 0.0
      %312 = vst.msk [vmem:[#allocation2 + $0x868] sm:$0xff] %vm256, 0.0
      %v313 = vld [vmem:[%s1] sm:$0xff]
      %v314 = vld [vmem:[%s1 + $0x8] sm:$0x3]
      %v315 = vld [vmem:[%s246] sm:$0xff]
      %v316 = vld [vmem:[%s246 + $0x8] sm:$0xff]
      %v317 = vld [vmem:[%s246 + $0x10] sm:$0xff]
      %v318 = vld [vmem:[%s246 + $0x18] sm:$0xff]
      %v319 = vld [vmem:[%s246 + $0x20] sm:$0xff]
      %v320 = vld [vmem:[%s246 + $0x28] sm:$0xff]
      %v321 = vld [vmem:[%s246 + $0x30] sm:$0xff]
      %v322 = vld [vmem:[%s246 + $0x38] sm:$0xff]
      %v323 = vld [vmem:[%s246 + $0x40] sm:$0xff]
      %v324 = vld [vmem:[%s246 + $0x48] sm:$0xff]
      %v325 = vld [vmem:[%s246 + $0x50] sm:$0xff]
      %v326 = vld [vmem:[%s246 + $0x58] sm:$0xff]
      %v327 = vld [vmem:[%s246 + $0x60] sm:$0xff]
      %v328 = vld [vmem:[%s246 + $0x68] sm:$0xff]
      %v329 = vld [vmem:[%s246 + $0x70] sm:$0xff]
      %v330 = vld [vmem:[%s246 + $0x78] sm:$0xff]
      %vm331 = vcmask 80896
      %v333 = vsel %vm331, %v315, 0
      %v336 = vsel %vm331, %v316, 0
      %v339 = vsel %vm331, %v317, 0
      %v342 = vsel %vm331, %v318, 0
      %v345 = vsel %vm331, %v319, 0
      %v348 = vsel %vm331, %v320, 0
      %v351 = vsel %vm331, %v321, 0
      %v354 = vsel %vm331, %v322, 0
      %v357 = vsel %vm331, %v323, 0
      %v360 = vsel %vm331, %v324, 0
      %v363 = vsel %vm331, %v325, 0
      %v366 = vsel %vm331, %v326, 0
      %v369 = vsel %vm331, %v327, 0
      %v372 = vsel %vm331, %v328, 0
      %v375 = vsel %vm331, %v329, 0
      %v378 = vsel %vm331, %v330, 0
      %vm380 = vcmask 1041408
      %v382 = vsel %vm380, %v314, 0
      %384 = vmatprep.subr.mxu0 0.0
      %385 = vmatpush1.msra.mxu0 0.0
      %386 = vmatprep.subr.mxu0 0.0
      %387 = vmatpush1.msra.mxu0 0.0
      %388 = vmatprep.subr.mxu0 0.0
      %389 = vmatpush1.msra.mxu0 0.0
      %390 = vmatprep.subr.mxu0 0.0
      %391 = vmatpush1.msra.mxu0 0.0
      %392 = vmatprep.subr.mxu0 0.0
      %393 = vmatpush1.msra.mxu0 0.0
      %394 = vmatprep.subr.mxu0 0.0
      %395 = vmatpush1.msra.mxu0 0.0
      %396 = vmatprep.subr.mxu0 0.0
      %397 = vmatpush1.msra.mxu0 0.0
      %398 = vmatprep.subr.mxu0 0.0
      %399 = vmatpush1.msra.mxu0 0.0
      %400 = vmatprep.subr.mxu0 0.0
      %401 = vmatpush1.msra.mxu0 0.0
      %402 = vmatprep.subr.mxu0 0.0
      %403 = vmatpush1.msra.mxu0 0.0
      %404 = vmatprep.subr.mxu0 0.0
      %405 = vmatpush1.msra.mxu0 0.0
      %406 = vmatprep.subr.mxu0 0.0
      %407 = vmatpush1.msra.mxu0 0.0
      %408 = vmatprep.subr.mxu0 0.0
      %409 = vmatpush1.msra.mxu0 0.0
      %410 = vmatprep.subr.mxu0 0.0
      %411 = vmatpush1.msra.mxu0 0.0
      %412 = vmatprep.subr.mxu0 0.0
      %413 = vmatpush1.msra.mxu0 %v382
      %414 = vmatprep.subr.mxu0 0.0
      %415 = vmatpush1.msra.mxu0 %v313
      %416 = vmatprep.subr.mxu0 0.0
      %417 = vmatpush2.msra.mxu0 0.0
      %418 = vmatprep.subr.mxu0 0.0
      %419 = vmatpush2.msra.mxu0 0.0
      %420 = vmatprep.subr.mxu0 0.0
      %421 = vmatpush2.msra.mxu0 0.0
      %422 = vmatprep.subr.mxu0 0.0
      %423 = vmatpush2.msra.mxu0 0.0
      %424 = vmatprep.subr.mxu0 0.0
      %425 = vmatpush2.msra.mxu0 0.0
      %426 = vmatprep.subr.mxu0 0.0
      %427 = vmatpush2.msra.mxu0 0.0
      %428 = vmatprep.subr.mxu0 0.0
      %429 = vmatpush2.msra.mxu0 0.0
      %430 = vmatprep.subr.mxu0 0.0
      %431 = vmatpush2.msra.mxu0 0.0
      %432 = vmatprep.subr.mxu0 0.0
      %433 = vmatpush2.msra.mxu0 0.0
      %434 = vmatprep.subr.mxu0 0.0
      %435 = vmatpush2.msra.mxu0 0.0
      %436 = vmatprep.subr.mxu0 0.0
      %437 = vmatpush2.msra.mxu0 0.0
      %438 = vmatprep.subr.mxu0 0.0
      %439 = vmatpush2.msra.mxu0 0.0
      %440 = vmatprep.subr.mxu0 0.0
      %441 = vmatpush2.msra.mxu0 0.0
      %442 = vmatprep.subr.mxu0 0.0
      %443 = vmatpush2.msra.mxu0 0.0
      %444 = vmatprep.subr.mxu0 0.0
      %445 = vmatpush2.msra.mxu0 0.0
      %446 = vmatprep.subr.mxu0 0.0
      %447 = vmatpush2.msra.mxu0 0.0
      %448 = vmatprep.mubr.f32.mxu0 0.0
      %449 = vmatmul.mubr.f32.gmra.mxu0 %v333
      %v450 = vpop.f32.mrf.mxu0
      %v451 = vadd.f32 0.0, %v450
      %v452 = vpop.f32.mrf.mxu0
      %453 = vmatprep.mubr.f32.mxu0 0.0
      %454 = vmatmul.mubr.f32.gmra.mxu0 %v336
      %v455 = vpop.f32.mrf.mxu0
      %v456 = vadd.f32 0.0, %v455
      %v457 = vpop.f32.mrf.mxu0
      %458 = vmatprep.mubr.f32.mxu0 0.0
      %459 = vmatmul.mubr.f32.gmra.mxu0 %v339
      %v460 = vpop.f32.mrf.mxu0
      %v461 = vadd.f32 0.0, %v460
      %v462 = vpop.f32.mrf.mxu0
      %463 = vmatprep.mubr.f32.mxu0 0.0
      %464 = vmatmul.mubr.f32.gmra.mxu0 %v342
      %v465 = vpop.f32.mrf.mxu0
      %v466 = vadd.f32 0.0, %v465
      %v467 = vpop.f32.mrf.mxu0
      %468 = vmatprep.mubr.f32.mxu0 0.0
      %469 = vmatmul.mubr.f32.gmra.mxu0 %v345
      %v470 = vpop.f32.mrf.mxu0
      %v471 = vadd.f32 0.0, %v470
      %v472 = vpop.f32.mrf.mxu0
      %473 = vmatprep.mubr.f32.mxu0 0.0
      %474 = vmatmul.mubr.f32.gmra.mxu0 %v348
      %v475 = vpop.f32.mrf.mxu0
      %v476 = vadd.f32 0.0, %v475
      %v477 = vpop.f32.mrf.mxu0
      %478 = vmatprep.mubr.f32.mxu0 0.0
      %479 = vmatmul.mubr.f32.gmra.mxu0 %v351
      %v480 = vpop.f32.mrf.mxu0
      %v481 = vadd.f32 0.0, %v480
      %v482 = vpop.f32.mrf.mxu0
      %483 = vmatprep.mubr.f32.mxu0 0.0
      %484 = vmatmul.mubr.f32.gmra.mxu0 %v354
      %v485 = vpop.f32.mrf.mxu0
      %v486 = vadd.f32 0.0, %v485
      %v487 = vpop.f32.mrf.mxu0
      %488 = vmatprep.mubr.f32.mxu0 0.0
      %489 = vmatmul.mubr.f32.gmra.mxu0 %v357
      %v490 = vpop.f32.mrf.mxu0
      %v491 = vadd.f32 0.0, %v490
      %v492 = vpop.f32.mrf.mxu0
      %493 = vmatprep.mubr.f32.mxu0 0.0
      %494 = vmatmul.mubr.f32.gmra.mxu0 %v360
      %v495 = vpop.f32.mrf.mxu0
      %v496 = vadd.f32 0.0, %v495
      %v497 = vpop.f32.mrf.mxu0
      %498 = vmatprep.mubr.f32.mxu0 0.0
      %499 = vmatmul.mubr.f32.gmra.mxu0 %v363
      %v500 = vpop.f32.mrf.mxu0
      %v501 = vadd.f32 0.0, %v500
      %v502 = vpop.f32.mrf.mxu0
      %503 = vmatprep.mubr.f32.mxu0 0.0
      %504 = vmatmul.mubr.f32.gmra.mxu0 %v366
      %v505 = vpop.f32.mrf.mxu0
      %v506 = vadd.f32 0.0, %v505
      %v507 = vpop.f32.mrf.mxu0
      %508 = vmatprep.mubr.f32.mxu0 0.0
      %509 = vmatmul.mubr.f32.gmra.mxu0 %v369
      %v510 = vpop.f32.mrf.mxu0
      %v511 = vadd.f32 0.0, %v510
      %v512 = vpop.f32.mrf.mxu0
      %513 = vmatprep.mubr.f32.mxu0 0.0
      %514 = vmatmul.mubr.f32.gmra.mxu0 %v372
      %v515 = vpop.f32.mrf.mxu0
      %v516 = vadd.f32 0.0, %v515
      %v517 = vpop.f32.mrf.mxu0
      %518 = vmatprep.mubr.f32.mxu0 0.0
      %519 = vmatmul.mubr.f32.gmra.mxu0 %v375
      %v520 = vpop.f32.mrf.mxu0
      %v521 = vadd.f32 0.0, %v520
      %v522 = vpop.f32.mrf.mxu0
      %523 = vmatprep.mubr.f32.mxu0 0.0
      %524 = vmatmul.mubr.f32.gmra.mxu0 %v378
      %v525 = vpop.f32.mrf.mxu0
      %v526 = vadd.f32 0.0, %v525
      %v527 = vpop.f32.mrf.mxu0
      %528 = vdwg.mxu0
      %v529 = vmax.f32 %v451, 0.0
      %v530 = vmax.f32 %v456, 0.0
      %v531 = vmax.f32 %v461, 0.0
      %v532 = vmax.f32 %v466, 0.0
      %v533 = vmax.f32 %v471, 0.0
      %v534 = vmax.f32 %v476, 0.0
      %v535 = vmax.f32 %v481, 0.0
      %v536 = vmax.f32 %v486, 0.0
      %v537 = vmax.f32 %v491, 0.0
      %v538 = vmax.f32 %v496, 0.0
      %v539 = vmax.f32 %v501, 0.0
      %v540 = vmax.f32 %v506, 0.0
      %v541 = vmax.f32 %v511, 0.0
      %v542 = vmax.f32 %v516, 0.0
      %v543 = vmax.f32 %v521, 0.0
      %v544 = vmax.f32 %v526, 0.0
      %vm561 = vcmask 1042432
      %v562 = vrot.slane %v529, 5
      %v563 = vrot.slane %v530, 5
      %v564 = vsel %vm561, %v562, %v563
      %v565 = vrot.slane %v531, 5
      %v566 = vsel %vm561, %v563, %v565
      %v567 = vrot.slane %v532, 5
      %v568 = vsel %vm561, %v565, %v567
      %v569 = vrot.slane %v533, 5
      %v570 = vsel %vm561, %v567, %v569
      %v571 = vrot.slane %v534, 5
      %v572 = vsel %vm561, %v569, %v571
      %v573 = vrot.slane %v535, 5
      %v574 = vsel %vm561, %v571, %v573
      %v575 = vrot.slane %v536, 5
      %v576 = vsel %vm561, %v573, %v575
      %v577 = vrot.slane %v537, 5
      %v578 = vsel %vm561, %v575, %v577
      %v579 = vrot.slane %v538, 5
      %v580 = vsel %vm561, %v577, %v579
      %v581 = vrot.slane %v539, 5
      %v582 = vsel %vm561, %v579, %v581
      %v583 = vrot.slane %v540, 5
      %v584 = vsel %vm561, %v581, %v583
      %v585 = vrot.slane %v541, 5
      %v586 = vsel %vm561, %v583, %v585
      %v587 = vrot.slane %v542, 5
      %v588 = vsel %vm561, %v585, %v587
      %v589 = vrot.slane %v543, 5
      %v590 = vsel %vm561, %v587, %v589
      %v591 = vrot.slane %v544, 5
      %v592 = vsel %vm561, %v589, %v591
      %vm610 = vcmask 523267
      %611 = vst.msk [vmem:[#allocation2 + $0xc8] sm:$0xf8] %vm610, %v562
      %612 = vst.msk [vmem:[#allocation2 + $0xf0] sm:$0xff] %vm256, %v564
      %613 = vst.msk [vmem:[#allocation2 + $0x118] sm:$0xff] %vm256, %v566
      %614 = vst.msk [vmem:[#allocation2 + $0x140] sm:$0xff] %vm256, %v568
      %615 = vst.msk [vmem:[#allocation2 + $0x168] sm:$0xff] %vm256, %v570
      %616 = vst.msk [vmem:[#allocation2 + $0x190] sm:$0xff] %vm256, %v572
      %617 = vst.msk [vmem:[#allocation2 + $0x1b8] sm:$0xff] %vm256, %v574
      %618 = vst.msk [vmem:[#allocation2 + $0x1e0] sm:$0xff] %vm256, %v576
      %619 = vst.msk [vmem:[#allocation2 + $0x208] sm:$0xff] %vm256, %v578
      %620 = vst.msk [vmem:[#allocation2 + $0x230] sm:$0xff] %vm256, %v580
      %621 = vst.msk [vmem:[#allocation2 + $0x258] sm:$0xff] %vm256, %v582
      %622 = vst.msk [vmem:[#allocation2 + $0x280] sm:$0xff] %vm256, %v584
      %623 = vst.msk [vmem:[#allocation2 + $0x2a8] sm:$0xff] %vm256, %v586
      %624 = vst.msk [vmem:[#allocation2 + $0x2d0] sm:$0xff] %vm256, %v588
      %625 = vst.msk [vmem:[#allocation2 + $0x2f8] sm:$0xff] %vm256, %v590
      %626 = vst.msk [vmem:[#allocation2 + $0x320] sm:$0xff] %vm256, %v592
      %vm627 = vcmask 518144
      %628 = vst.msk [vmem:[#allocation2 + $0x348] sm:$0x7] %vm627, %v591
      %v629 = vrot.slane %v529, 6
      %v630 = vrot.slane %v530, 6
      %v631 = vsel %vm380, %v629, %v630
      %v632 = vrot.slane %v531, 6
      %v633 = vsel %vm380, %v630, %v632
      %v634 = vrot.slane %v532, 6
      %v635 = vsel %vm380, %v632, %v634
      %v636 = vrot.slane %v533, 6
      %v637 = vsel %vm380, %v634, %v636
      %v638 = vrot.slane %v534, 6
      %v639 = vsel %vm380, %v636, %v638
      %v640 = vrot.slane %v535, 6
      %v641 = vsel %vm380, %v638, %v640
      %v642 = vrot.slane %v536, 6
      %v643 = vsel %vm380, %v640, %v642
      %v644 = vrot.slane %v537, 6
      %v645 = vsel %vm380, %v642, %v644
      %v646 = vrot.slane %v538, 6
      %v647 = vsel %vm380, %v644, %v646
      %v648 = vrot.slane %v539, 6
      %v649 = vsel %vm380, %v646, %v648
      %v650 = vrot.slane %v540, 6
      %v651 = vsel %vm380, %v648, %v650
      %v652 = vrot.slane %v541, 6
      %v653 = vsel %vm380, %v650, %v652
      %v654 = vrot.slane %v542, 6
      %v655 = vsel %vm380, %v652, %v654
      %v656 = vrot.slane %v543, 6
      %v657 = vsel %vm380, %v654, %v656
      %v658 = vrot.slane %v544, 6
      %v659 = vsel %vm380, %v656, %v658
      %660 = vrot.lane.b32.xlu0 %v629, 64
      %v661 = vpop.permute.xlu0 %660
      %662 = vrot.lane.b32.xlu0 %v631, 64
      %v663 = vpop.permute.xlu0 %662
      %664 = vrot.lane.b32.xlu0 %v633, 64
      %v665 = vpop.permute.xlu0 %664
      %666 = vrot.lane.b32.xlu0 %v635, 64
      %v667 = vpop.permute.xlu0 %666
      %668 = vrot.lane.b32.xlu0 %v637, 64
      %v669 = vpop.permute.xlu0 %668
      %670 = vrot.lane.b32.xlu0 %v639, 64
      %v671 = vpop.permute.xlu0 %670
      %672 = vrot.lane.b32.xlu0 %v641, 64
      %v673 = vpop.permute.xlu0 %672
      %674 = vrot.lane.b32.xlu0 %v643, 64
      %v675 = vpop.permute.xlu0 %674
      %676 = vrot.lane.b32.xlu0 %v645, 64
      %v677 = vpop.permute.xlu0 %676
      %678 = vrot.lane.b32.xlu0 %v647, 64
      %v679 = vpop.permute.xlu0 %678
      %680 = vrot.lane.b32.xlu0 %v649, 64
      %v681 = vpop.permute.xlu0 %680
      %682 = vrot.lane.b32.xlu0 %v651, 64
      %v683 = vpop.permute.xlu0 %682
      %684 = vrot.lane.b32.xlu0 %v653, 64
      %v685 = vpop.permute.xlu0 %684
      %686 = vrot.lane.b32.xlu0 %v655, 64
      %v687 = vpop.permute.xlu0 %686
      %688 = vrot.lane.b32.xlu0 %v657, 64
      %v689 = vpop.permute.xlu0 %688
      %690 = vrot.lane.b32.xlu0 %v659, 64
      %v691 = vpop.permute.xlu0 %690
      %692 = vrot.lane.b32.xlu0 %v658, 64
      %v693 = vpop.permute.xlu0 %692
      %vm711 = vcmask 1048066
      %712 = vst.msk [vmem:[#allocation2 + $0xc8] sm:$0xfc] %vm711, %v661
      %vm713 = vcmask 1048064
      %714 = vst.msk [vmem:[#allocation2 + $0xf0] sm:$0xff] %vm713, %v663
      %715 = vst.msk [vmem:[#allocation2 + $0x118] sm:$0xff] %vm713, %v665
      %716 = vst.msk [vmem:[#allocation2 + $0x140] sm:$0xff] %vm713, %v667
      %717 = vst.msk [vmem:[#allocation2 + $0x168] sm:$0xff] %vm713, %v669
      %718 = vst.msk [vmem:[#allocation2 + $0x190] sm:$0xff] %vm713, %v671
      %719 = vst.msk [vmem:[#allocation2 + $0x1b8] sm:$0xff] %vm713, %v673
      %720 = vst.msk [vmem:[#allocation2 + $0x1e0] sm:$0xff] %vm713, %v675
      %721 = vst.msk [vmem:[#allocation2 + $0x208] sm:$0xff] %vm713, %v677
      %722 = vst.msk [vmem:[#allocation2 + $0x230] sm:$0xff] %vm713, %v679
      %723 = vst.msk [vmem:[#allocation2 + $0x258] sm:$0xff] %vm713, %v681
      %724 = vst.msk [vmem:[#allocation2 + $0x280] sm:$0xff] %vm713, %v683
      %725 = vst.msk [vmem:[#allocation2 + $0x2a8] sm:$0xff] %vm713, %v685
      %726 = vst.msk [vmem:[#allocation2 + $0x2d0] sm:$0xff] %vm713, %v687
      %727 = vst.msk [vmem:[#allocation2 + $0x2f8] sm:$0xff] %vm713, %v689
      %728 = vst.msk [vmem:[#allocation2 + $0x320] sm:$0xff] %vm713, %v691
      %vm729 = vcmask 1041920
      %730 = vst.msk [vmem:[#allocation2 + $0x348] sm:$0x3] %vm729, %v693
      %vm731 = vcmask 1040384
      %v732 = vrot.slane %v529, 7
      %v733 = vrot.slane %v530, 7
      %v734 = vsel %vm731, %v732, %v733
      %v735 = vrot.slane %v531, 7
      %v736 = vsel %vm731, %v733, %v735
      %v737 = vrot.slane %v532, 7
      %v738 = vsel %vm731, %v735, %v737
      %v739 = vrot.slane %v533, 7
      %v740 = vsel %vm731, %v737, %v739
      %v741 = vrot.slane %v534, 7
      %v742 = vsel %vm731, %v739, %v741
      %v743 = vrot.slane %v535, 7
      %v744 = vsel %vm731, %v741, %v743
      %v745 = vrot.slane %v536, 7
      %v746 = vsel %vm731, %v743, %v745
      %v747 = vrot.slane %v537, 7
      %v748 = vsel %vm731, %v745, %v747
      %v749 = vrot.slane %v538, 7
      %v750 = vsel %vm731, %v747, %v749
      %v751 = vrot.slane %v539, 7
      %v752 = vsel %vm731, %v749, %v751
      %v753 = vrot.slane %v540, 7
      %v754 = vsel %vm731, %v751, %v753
      %v755 = vrot.slane %v541, 7
      %v756 = vsel %vm731, %v753, %v755
      %v757 = vrot.slane %v542, 7
      %v758 = vsel %vm731, %v755, %v757
      %v759 = vrot.slane %v543, 7
      %v760 = vsel %vm731, %v757, %v759
      %v761 = vrot.slane %v544, 7
      %v762 = vsel %vm731, %v759, %v761
      %vm780 = vcmask 523265
      %781 = vst.msk [vmem:[#allocation2 + $0xd0] sm:$0xfe] %vm780, %v732
      %782 = vst.msk [vmem:[#allocation2 + $0xf8] sm:$0xff] %vm256, %v734
      %783 = vst.msk [vmem:[#allocation2 + $0x120] sm:$0xff] %vm256, %v736
      %784 = vst.msk [vmem:[#allocation2 + $0x148] sm:$0xff] %vm256, %v738
      %785 = vst.msk [vmem:[#allocation2 + $0x170] sm:$0xff] %vm256, %v740
      %786 = vst.msk [vmem:[#allocation2 + $0x198] sm:$0xff] %vm256, %v742
      %787 = vst.msk [vmem:[#allocation2 + $0x1c0] sm:$0xff] %vm256, %v744
      %788 = vst.msk [vmem:[#allocation2 + $0x1e8] sm:$0xff] %vm256, %v746
      %789 = vst.msk [vmem:[#allocation2 + $0x210] sm:$0xff] %vm256, %v748
      %790 = vst.msk [vmem:[#allocation2 + $0x238] sm:$0xff] %vm256, %v750
      %791 = vst.msk [vmem:[#allocation2 + $0x260] sm:$0xff] %vm256, %v752
      %792 = vst.msk [vmem:[#allocation2 + $0x288] sm:$0xff] %vm256, %v754
      %793 = vst.msk [vmem:[#allocation2 + $0x2b0] sm:$0xff] %vm256, %v756
      %794 = vst.msk [vmem:[#allocation2 + $0x2d8] sm:$0xff] %vm256, %v758
      %795 = vst.msk [vmem:[#allocation2 + $0x300] sm:$0xff] %vm256, %v760
      %796 = vst.msk [vmem:[#allocation2 + $0x328] sm:$0xff] %vm256, %v762
      %vm797 = vcmask 516096
      %798 = vst.msk [vmem:[#allocation2 + $0x350] sm:$0x1] %vm797, %v761
      %799 = vrot.lane.b32.xlu0 %v732, 64
      %v800 = vpop.permute.xlu0 %799
      %801 = vrot.lane.b32.xlu0 %v734, 64
      %v802 = vpop.permute.xlu0 %801
      %803 = vrot.lane.b32.xlu0 %v736, 64
      %v804 = vpop.permute.xlu0 %803
      %805 = vrot.lane.b32.xlu0 %v738, 64
      %v806 = vpop.permute.xlu0 %805
      %807 = vrot.lane.b32.xlu0 %v740, 64
      %v808 = vpop.permute.xlu0 %807
      %809 = vrot.lane.b32.xlu0 %v742, 64
      %v810 = vpop.permute.xlu0 %809
      %811 = vrot.lane.b32.xlu0 %v744, 64
      %v812 = vpop.permute.xlu0 %811
      %813 = vrot.lane.b32.xlu0 %v746, 64
      %v814 = vpop.permute.xlu0 %813
      %815 = vrot.lane.b32.xlu0 %v748, 64
      %v816 = vpop.permute.xlu0 %815
      %817 = vrot.lane.b32.xlu0 %v750, 64
      %v818 = vpop.permute.xlu0 %817
      %819 = vrot.lane.b32.xlu0 %v752, 64
      %v820 = vpop.permute.xlu0 %819
      %821 = vrot.lane.b32.xlu0 %v754, 64
      %v822 = vpop.permute.xlu0 %821
      %823 = vrot.lane.b32.xlu0 %v756, 64
      %v824 = vpop.permute.xlu0 %823
      %825 = vrot.lane.b32.xlu0 %v758, 64
      %v826 = vpop.permute.xlu0 %825
      %827 = vrot.lane.b32.xlu0 %v760, 64
      %v828 = vpop.permute.xlu0 %827
      %829 = vrot.lane.b32.xlu0 %v762, 64
      %v830 = vpop.permute.xlu0 %829
      %831 = vrot.lane.b32.xlu0 %v761, 64
      %v832 = vpop.permute.xlu0 %831
      %vm850 = vcmask 1048065
      %851 = vst.msk [vmem:[#allocation2 + $0x80] sm:$0xfe] %vm850, %v800
      %852 = vst.msk [vmem:[#allocation2 + $0xa8] sm:$0xff] %vm713, %v802
      %853 = vst.msk [vmem:[#allocation2 + $0xd0] sm:$0xff] %vm713, %v804
      %854 = vst.msk [vmem:[#allocation2 + $0xf8] sm:$0xff] %vm713, %v806
      %855 = vst.msk [vmem:[#allocation2 + $0x120] sm:$0xff] %vm713, %v808
      %856 = vst.msk [vmem:[#allocation2 + $0x148] sm:$0xff] %vm713, %v810
      %857 = vst.msk [vmem:[#allocation2 + $0x170] sm:$0xff] %vm713, %v812
      %858 = vst.msk [vmem:[#allocation2 + $0x198] sm:$0xff] %vm713, %v814
      %859 = vst.msk [vmem:[#allocation2 + $0x1c0] sm:$0xff] %vm713, %v816
      %860 = vst.msk [vmem:[#allocation2 + $0x1e8] sm:$0xff] %vm713, %v818
      %861 = vst.msk [vmem:[#allocation2 + $0x210] sm:$0xff] %vm713, %v820
      %862 = vst.msk [vmem:[#allocation2 + $0x238] sm:$0xff] %vm713, %v822
      %863 = vst.msk [vmem:[#allocation2 + $0x260] sm:$0xff] %vm713, %v824
      %864 = vst.msk [vmem:[#allocation2 + $0x288] sm:$0xff] %vm713, %v826
      %865 = vst.msk [vmem:[#allocation2 + $0x2b0] sm:$0xff] %vm713, %v828
      %866 = vst.msk [vmem:[#allocation2 + $0x2d8] sm:$0xff] %vm713, %v830
      %vm867 = vcmask 1040896
      %868 = vst.msk [vmem:[#allocation2 + $0x300] sm:$0x1] %vm867, %v832
      %869 = vst.msk [vmem:[#allocation2 + $0x88] sm:$0xff] %vm256, %v529
      %870 = vst.msk [vmem:[#allocation2 + $0xb0] sm:$0xff] %vm256, %v530
      %871 = vst.msk [vmem:[#allocation2 + $0xd8] sm:$0xff] %vm256, %v531
      %872 = vst.msk [vmem:[#allocation2 + $0x100] sm:$0xff] %vm256, %v532
      %873 = vst.msk [vmem:[#allocation2 + $0x128] sm:$0xff] %vm256, %v533
      %874 = vst.msk [vmem:[#allocation2 + $0x150] sm:$0xff] %vm256, %v534
      %875 = vst.msk [vmem:[#allocation2 + $0x178] sm:$0xff] %vm256, %v535
      %876 = vst.msk [vmem:[#allocation2 + $0x1a0] sm:$0xff] %vm256, %v536
      %877 = vst.msk [vmem:[#allocation2 + $0x1c8] sm:$0xff] %vm256, %v537
      %878 = vst.msk [vmem:[#allocation2 + $0x1f0] sm:$0xff] %vm256, %v538
      %879 = vst.msk [vmem:[#allocation2 + $0x218] sm:$0xff] %vm256, %v539
      %880 = vst.msk [vmem:[#allocation2 + $0x240] sm:$0xff] %vm256, %v540
      %881 = vst.msk [vmem:[#allocation2 + $0x268] sm:$0xff] %vm256, %v541
      %882 = vst.msk [vmem:[#allocation2 + $0x290] sm:$0xff] %vm256, %v542
      %883 = vst.msk [vmem:[#allocation2 + $0x2b8] sm:$0xff] %vm256, %v543
      %884 = vst.msk [vmem:[#allocation2 + $0x2e0] sm:$0xff] %vm256, %v544
      %vm885 = vcmask 1046528
      %v886 = vrot.slane %v529, 1
      %v887 = vrot.slane %v530, 1
      %v888 = vsel %vm885, %v886, %v887
      %v889 = vrot.slane %v531, 1
      %v890 = vsel %vm885, %v887, %v889
      %v891 = vrot.slane %v532, 1
      %v892 = vsel %vm885, %v889, %v891
      %v893 = vrot.slane %v533, 1
      %v894 = vsel %vm885, %v891, %v893
      %v895 = vrot.slane %v534, 1
      %v896 = vsel %vm885, %v893, %v895
      %v897 = vrot.slane %v535, 1
      %v898 = vsel %vm885, %v895, %v897
      %v899 = vrot.slane %v536, 1
      %v900 = vsel %vm885, %v897, %v899
      %v901 = vrot.slane %v537, 1
      %v902 = vsel %vm885, %v899, %v901
      %v903 = vrot.slane %v538, 1
      %v904 = vsel %vm885, %v901, %v903
      %v905 = vrot.slane %v539, 1
      %v906 = vsel %vm885, %v903, %v905
      %v907 = vrot.slane %v540, 1
      %v908 = vsel %vm885, %v905, %v907
      %v909 = vrot.slane %v541, 1
      %v910 = vsel %vm885, %v907, %v909
      %v911 = vrot.slane %v542, 1
      %v912 = vsel %vm885, %v909, %v911
      %v913 = vrot.slane %v543, 1
      %v914 = vsel %vm885, %v911, %v913
      %v915 = vrot.slane %v544, 1
      %v916 = vsel %vm885, %v913, %v915
      %917 = vrot.lane.b32.xlu0 %v886, 64
      %v918 = vpop.permute.xlu0 %917
      %919 = vrot.lane.b32.xlu0 %v888, 64
      %v920 = vpop.permute.xlu0 %919
      %921 = vrot.lane.b32.xlu0 %v890, 64
      %v922 = vpop.permute.xlu0 %921
      %923 = vrot.lane.b32.xlu0 %v892, 64
      %v924 = vpop.permute.xlu0 %923
      %925 = vrot.lane.b32.xlu0 %v894, 64
      %v926 = vpop.permute.xlu0 %925
      %927 = vrot.lane.b32.xlu0 %v896, 64
      %v928 = vpop.permute.xlu0 %927
      %929 = vrot.lane.b32.xlu0 %v898, 64
      %v930 = vpop.permute.xlu0 %929
      %931 = vrot.lane.b32.xlu0 %v900, 64
      %v932 = vpop.permute.xlu0 %931
      %933 = vrot.lane.b32.xlu0 %v902, 64
      %v934 = vpop.permute.xlu0 %933
      %935 = vrot.lane.b32.xlu0 %v904, 64
      %v936 = vpop.permute.xlu0 %935
      %937 = vrot.lane.b32.xlu0 %v906, 64
      %v938 = vpop.permute.xlu0 %937
      %939 = vrot.lane.b32.xlu0 %v908, 64
      %v940 = vpop.permute.xlu0 %939
      %941 = vrot.lane.b32.xlu0 %v910, 64
      %v942 = vpop.permute.xlu0 %941
      %943 = vrot.lane.b32.xlu0 %v912, 64
      %v944 = vpop.permute.xlu0 %943
      %945 = vrot.lane.b32.xlu0 %v914, 64
      %v946 = vpop.permute.xlu0 %945
      %947 = vrot.lane.b32.xlu0 %v916, 64
      %v948 = vpop.permute.xlu0 %947
      %949 = vrot.lane.b32.xlu0 %v915, 64
      %v950 = vpop.permute.xlu0 %949
      %vm968 = vcmask 1048071
      %969 = vst.msk [vmem:[#allocation2 + $0x60] sm:$0x80] %vm968, %v918
      %970 = vst.msk [vmem:[#allocation2 + $0x88] sm:$0xff] %vm713, %v920
      %971 = vst.msk [vmem:[#allocation2 + $0xb0] sm:$0xff] %vm713, %v922
      %972 = vst.msk [vmem:[#allocation2 + $0xd8] sm:$0xff] %vm713, %v924
      %973 = vst.msk [vmem:[#allocation2 + $0x100] sm:$0xff] %vm713, %v926
      %974 = vst.msk [vmem:[#allocation2 + $0x128] sm:$0xff] %vm713, %v928
      %975 = vst.msk [vmem:[#allocation2 + $0x150] sm:$0xff] %vm713, %v930
      %976 = vst.msk [vmem:[#allocation2 + $0x178] sm:$0xff] %vm713, %v932
      %977 = vst.msk [vmem:[#allocation2 + $0x1a0] sm:$0xff] %vm713, %v934
      %978 = vst.msk [vmem:[#allocation2 + $0x1c8] sm:$0xff] %vm713, %v936
      %979 = vst.msk [vmem:[#allocation2 + $0x1f0] sm:$0xff] %vm713, %v938
      %980 = vst.msk [vmem:[#allocation2 + $0x218] sm:$0xff] %vm713, %v940
      %981 = vst.msk [vmem:[#allocation2 + $0x240] sm:$0xff] %vm713, %v942
      %982 = vst.msk [vmem:[#allocation2 + $0x268] sm:$0xff] %vm713, %v944
      %983 = vst.msk [vmem:[#allocation2 + $0x290] sm:$0xff] %vm713, %v946
      %984 = vst.msk [vmem:[#allocation2 + $0x2b8] sm:$0xff] %vm713, %v948
      %vm985 = vcmask 1047040
      %986 = vst.msk [vmem:[#allocation2 + $0x2e0] sm:$0x7f] %vm985, %v950
      %vm1004 = vcmask 523271
      %1005 = vst.msk [vmem:[#allocation2 + $0x18] sm:$0x80] %vm1004, %v886
      %1006 = vst.msk [vmem:[#allocation2 + $0x40] sm:$0xff] %vm256, %v888
      %1007 = vst.msk [vmem:[#allocation2 + $0x68] sm:$0xff] %vm256, %v890
      %1008 = vst.msk [vmem:[#allocation2 + $0x90] sm:$0xff] %vm256, %v892
      %1009 = vst.msk [vmem:[#allocation2 + $0xb8] sm:$0xff] %vm256, %v894
      %1010 = vst.msk [vmem:[#allocation2 + $0xe0] sm:$0xff] %vm256, %v896
      %1011 = vst.msk [vmem:[#allocation2 + $0x108] sm:$0xff] %vm256, %v898
      %1012 = vst.msk [vmem:[#allocation2 + $0x130] sm:$0xff] %vm256, %v900
      %1013 = vst.msk [vmem:[#allocation2 + $0x158] sm:$0xff] %vm256, %v902
      %1014 = vst.msk [vmem:[#allocation2 + $0x180] sm:$0xff] %vm256, %v904
      %1015 = vst.msk [vmem:[#allocation2 + $0x1a8] sm:$0xff] %vm256, %v906
      %1016 = vst.msk [vmem:[#allocation2 + $0x1d0] sm:$0xff] %vm256, %v908
      %1017 = vst.msk [vmem:[#allocation2 + $0x1f8] sm:$0xff] %vm256, %v910
      %1018 = vst.msk [vmem:[#allocation2 + $0x220] sm:$0xff] %vm256, %v912
      %1019 = vst.msk [vmem:[#allocation2 + $0x248] sm:$0xff] %vm256, %v914
      %1020 = vst.msk [vmem:[#allocation2 + $0x270] sm:$0xff] %vm256, %v916
      %vm1021 = vcmask 522240
      %1022 = vst.msk [vmem:[#allocation2 + $0x298] sm:$0x7f] %vm1021, %v915
      %vm1023 = vcmask 1045504
      %v1024 = vrot.slane %v529, 2
      %v1025 = vrot.slane %v530, 2
      %v1026 = vsel %vm1023, %v1024, %v1025
      %v1027 = vrot.slane %v531, 2
      %v1028 = vsel %vm1023, %v1025, %v1027
      %v1029 = vrot.slane %v532, 2
      %v1030 = vsel %vm1023, %v1027, %v1029
      %v1031 = vrot.slane %v533, 2
      %v1032 = vsel %vm1023, %v1029, %v1031
      %v1033 = vrot.slane %v534, 2
      %v1034 = vsel %vm1023, %v1031, %v1033
      %v1035 = vrot.slane %v535, 2
      %v1036 = vsel %vm1023, %v1033, %v1035
      %v1037 = vrot.slane %v536, 2
      %v1038 = vsel %vm1023, %v1035, %v1037
      %v1039 = vrot.slane %v537, 2
      %v1040 = vsel %vm1023, %v1037, %v1039
      %v1041 = vrot.slane %v538, 2
      %v1042 = vsel %vm1023, %v1039, %v1041
      %v1043 = vrot.slane %v539, 2
      %v1044 = vsel %vm1023, %v1041, %v1043
      %v1045 = vrot.slane %v540, 2
      %v1046 = vsel %vm1023, %v1043, %v1045
      %v1047 = vrot.slane %v541, 2
      %v1048 = vsel %vm1023, %v1045, %v1047
      %v1049 = vrot.slane %v542, 2
      %v1050 = vsel %vm1023, %v1047, %v1049
      %v1051 = vrot.slane %v543, 2
      %v1052 = vsel %vm1023, %v1049, %v1051
      %v1053 = vrot.slane %v544, 2
      %v1054 = vsel %vm1023, %v1051, %v1053
      %1055 = vrot.lane.b32.xlu0 %v1024, 64
      %v1056 = vpop.permute.xlu0 %1055
      %1057 = vrot.lane.b32.xlu0 %v1026, 64
      %v1058 = vpop.permute.xlu0 %1057
      %1059 = vrot.lane.b32.xlu0 %v1028, 64
      %v1060 = vpop.permute.xlu0 %1059
      %1061 = vrot.lane.b32.xlu0 %v1030, 64
      %v1062 = vpop.permute.xlu0 %1061
      %1063 = vrot.lane.b32.xlu0 %v1032, 64
      %v1064 = vpop.permute.xlu0 %1063
      %1065 = vrot.lane.b32.xlu0 %v1034, 64
      %v1066 = vpop.permute.xlu0 %1065
      %1067 = vrot.lane.b32.xlu0 %v1036, 64
      %v1068 = vpop.permute.xlu0 %1067
      %1069 = vrot.lane.b32.xlu0 %v1038, 64
      %v1070 = vpop.permute.xlu0 %1069
      %1071 = vrot.lane.b32.xlu0 %v1040, 64
      %v1072 = vpop.permute.xlu0 %1071
      %1073 = vrot.lane.b32.xlu0 %v1042, 64
      %v1074 = vpop.permute.xlu0 %1073
      %1075 = vrot.lane.b32.xlu0 %v1044, 64
      %v1076 = vpop.permute.xlu0 %1075
      %1077 = vrot.lane.b32.xlu0 %v1046, 64
      %v1078 = vpop.permute.xlu0 %1077
      %1079 = vrot.lane.b32.xlu0 %v1048, 64
      %v1080 = vpop.permute.xlu0 %1079
      %1081 = vrot.lane.b32.xlu0 %v1050, 64
      %v1082 = vpop.permute.xlu0 %1081
      %1083 = vrot.lane.b32.xlu0 %v1052, 64
      %v1084 = vpop.permute.xlu0 %1083
      %1085 = vrot.lane.b32.xlu0 %v1054, 64
      %v1086 = vpop.permute.xlu0 %1085
      %1087 = vrot.lane.b32.xlu0 %v1053, 64
      %v1088 = vpop.permute.xlu0 %1087
      %vm1106 = vcmask 1048070
      %1107 = vst.msk [vmem:[#allocation2 + $0x18] sm:$0xc0] %vm1106, %v1056
      %1108 = vst.msk [vmem:[#allocation2 + $0x40] sm:$0xff] %vm713, %v1058
      %1109 = vst.msk [vmem:[#allocation2 + $0x68] sm:$0xff] %vm713, %v1060
      %1110 = vst.msk [vmem:[#allocation2 + $0x90] sm:$0xff] %vm713, %v1062
      %1111 = vst.msk [vmem:[#allocation2 + $0xb8] sm:$0xff] %vm713, %v1064
      %1112 = vst.msk [vmem:[#allocation2 + $0xe0] sm:$0xff] %vm713, %v1066
      %1113 = vst.msk [vmem:[#allocation2 + $0x108] sm:$0xff] %vm713, %v1068
      %1114 = vst.msk [vmem:[#allocation2 + $0x130] sm:$0xff] %vm713, %v1070
      %1115 = vst.msk [vmem:[#allocation2 + $0x158] sm:$0xff] %vm713, %v1072
      %1116 = vst.msk [vmem:[#allocation2 + $0x180] sm:$0xff] %vm713, %v1074
      %1117 = vst.msk [vmem:[#allocation2 + $0x1a8] sm:$0xff] %vm713, %v1076
      %1118 = vst.msk [vmem:[#allocation2 + $0x1d0] sm:$0xff] %vm713, %v1078
      %1119 = vst.msk [vmem:[#allocation2 + $0x1f8] sm:$0xff] %vm713, %v1080
      %1120 = vst.msk [vmem:[#allocation2 + $0x220] sm:$0xff] %vm713, %v1082
      %1121 = vst.msk [vmem:[#allocation2 + $0x248] sm:$0xff] %vm713, %v1084
      %1122 = vst.msk [vmem:[#allocation2 + $0x270] sm:$0xff] %vm713, %v1086
      %vm1123 = vcmask 1046016
      %1124 = vst.msk [vmem:[#allocation2 + $0x298] sm:$0x3f] %vm1123, %v1088
      %vm1125 = vcmask 1044480
      %v1126 = vrot.slane %v529, 3
      %v1127 = vrot.slane %v530, 3
      %v1128 = vsel %vm1125, %v1126, %v1127
      %v1129 = vrot.slane %v531, 3
      %v1130 = vsel %vm1125, %v1127, %v1129
      %v1131 = vrot.slane %v532, 3
      %v1132 = vsel %vm1125, %v1129, %v1131
      %v1133 = vrot.slane %v533, 3
      %v1134 = vsel %vm1125, %v1131, %v1133
      %v1135 = vrot.slane %v534, 3
      %v1136 = vsel %vm1125, %v1133, %v1135
      %v1137 = vrot.slane %v535, 3
      %v1138 = vsel %vm1125, %v1135, %v1137
      %v1139 = vrot.slane %v536, 3
      %v1140 = vsel %vm1125, %v1137, %v1139
      %v1141 = vrot.slane %v537, 3
      %v1142 = vsel %vm1125, %v1139, %v1141
      %v1143 = vrot.slane %v538, 3
      %v1144 = vsel %vm1125, %v1141, %v1143
      %v1145 = vrot.slane %v539, 3
      %v1146 = vsel %vm1125, %v1143, %v1145
      %v1147 = vrot.slane %v540, 3
      %v1148 = vsel %vm1125, %v1145, %v1147
      %v1149 = vrot.slane %v541, 3
      %v1150 = vsel %vm1125, %v1147, %v1149
      %v1151 = vrot.slane %v542, 3
      %v1152 = vsel %vm1125, %v1149, %v1151
      %v1153 = vrot.slane %v543, 3
      %v1154 = vsel %vm1125, %v1151, %v1153
      %v1155 = vrot.slane %v544, 3
      %v1156 = vsel %vm1125, %v1153, %v1155
      %vm1174 = vcmask 523269
      %1175 = vst.msk [vmem:[#allocation2 + $0x20] sm:$0xe0] %vm1174, %v1126
      %1176 = vst.msk [vmem:[#allocation2 + $0x48] sm:$0xff] %vm256, %v1128
      %1177 = vst.msk [vmem:[#allocation2 + $0x70] sm:$0xff] %vm256, %v1130
      %1178 = vst.msk [vmem:[#allocation2 + $0x98] sm:$0xff] %vm256, %v1132
      %1179 = vst.msk [vmem:[#allocation2 + $0xc0] sm:$0xff] %vm256, %v1134
      %1180 = vst.msk [vmem:[#allocation2 + $0xe8] sm:$0xff] %vm256, %v1136
      %1181 = vst.msk [vmem:[#allocation2 + $0x110] sm:$0xff] %vm256, %v1138
      %1182 = vst.msk [vmem:[#allocation2 + $0x138] sm:$0xff] %vm256, %v1140
      %1183 = vst.msk [vmem:[#allocation2 + $0x160] sm:$0xff] %vm256, %v1142
      %1184 = vst.msk [vmem:[#allocation2 + $0x188] sm:$0xff] %vm256, %v1144
      %1185 = vst.msk [vmem:[#allocation2 + $0x1b0] sm:$0xff] %vm256, %v1146
      %1186 = vst.msk [vmem:[#allocation2 + $0x1d8] sm:$0xff] %vm256, %v1148
      %1187 = vst.msk [vmem:[#allocation2 + $0x200] sm:$0xff] %vm256, %v1150
      %1188 = vst.msk [vmem:[#allocation2 + $0x228] sm:$0xff] %vm256, %v1152
      %1189 = vst.msk [vmem:[#allocation2 + $0x250] sm:$0xff] %vm256, %v1154
      %1190 = vst.msk [vmem:[#allocation2 + $0x278] sm:$0xff] %vm256, %v1156
      %vm1191 = vcmask 520192
      %1192 = vst.msk [vmem:[#allocation2 + $0x2a0] sm:$0x1f] %vm1191, %v1155
      %v1193 = vld [vmem:[%s246 + $0x80] sm:$0xff]
      %v1194 = vld [vmem:[%s246 + $0x88] sm:$0xff]
      %v1195 = vld [vmem:[%s246 + $0x90] sm:$0xff]
      %v1196 = vld [vmem:[%s246 + $0x98] sm:$0xff]
      %v1197 = vld [vmem:[%s246 + $0xa0] sm:$0xff]
      %v1198 = vld [vmem:[%s246 + $0xa8] sm:$0xff]
      %v1199 = vld [vmem:[%s246 + $0xb0] sm:$0xff]
      %v1200 = vld [vmem:[%s246 + $0xb8] sm:$0xff]
      %v1201 = vld [vmem:[%s246 + $0xc0] sm:$0xff]
      %v1202 = vld [vmem:[%s246 + $0xc8] sm:$0xff]
      %v1203 = vld [vmem:[%s246 + $0xd0] sm:$0xff]
      %v1204 = vld [vmem:[%s246 + $0xd8] sm:$0xff]
      %v1205 = vld [vmem:[%s246 + $0xe0] sm:$0xff]
      %v1206 = vld [vmem:[%s246 + $0xe8] sm:$0xff]
      %v1207 = vld [vmem:[%s246 + $0xf0] sm:$0xff]
      %v1208 = vld [vmem:[%s246 + $0xf8] sm:$0xff]
      %v1210 = vsel %vm331, %v1193, 0
      %v1213 = vsel %vm331, %v1194, 0
      %v1216 = vsel %vm331, %v1195, 0
      %v1219 = vsel %vm331, %v1196, 0
      %v1222 = vsel %vm331, %v1197, 0
      %v1225 = vsel %vm331, %v1198, 0
      %v1228 = vsel %vm331, %v1199, 0
      %v1231 = vsel %vm331, %v1200, 0
      %v1234 = vsel %vm331, %v1201, 0
      %v1237 = vsel %vm331, %v1202, 0
      %v1240 = vsel %vm331, %v1203, 0
      %v1243 = vsel %vm331, %v1204, 0
      %v1246 = vsel %vm331, %v1205, 0
      %v1249 = vsel %vm331, %v1206, 0
      %v1252 = vsel %vm331, %v1207, 0
      %v1255 = vsel %vm331, %v1208, 0
      %1257 = vmatprep.subr.mxu0 0.0
      %1258 = vmatpush1.msra.mxu0 0.0
      %1259 = vmatprep.subr.mxu0 0.0
      %1260 = vmatpush1.msra.mxu0 0.0
      %1261 = vmatprep.subr.mxu0 0.0
      %1262 = vmatpush1.msra.mxu0 0.0
      %1263 = vmatprep.subr.mxu0 0.0
      %1264 = vmatpush1.msra.mxu0 0.0
      %1265 = vmatprep.subr.mxu0 0.0
      %1266 = vmatpush1.msra.mxu0 0.0
      %1267 = vmatprep.subr.mxu0 0.0
      %1268 = vmatpush1.msra.mxu0 0.0
      %1269 = vmatprep.subr.mxu0 0.0
      %1270 = vmatpush1.msra.mxu0 0.0
      %1271 = vmatprep.subr.mxu0 0.0
      %1272 = vmatpush1.msra.mxu0 0.0
      %1273 = vmatprep.subr.mxu0 0.0
      %1274 = vmatpush1.msra.mxu0 0.0
      %1275 = vmatprep.subr.mxu0 0.0
      %1276 = vmatpush1.msra.mxu0 0.0
      %1277 = vmatprep.subr.mxu0 0.0
      %1278 = vmatpush1.msra.mxu0 0.0
      %1279 = vmatprep.subr.mxu0 0.0
      %1280 = vmatpush1.msra.mxu0 0.0
      %1281 = vmatprep.subr.mxu0 0.0
      %1282 = vmatpush1.msra.mxu0 0.0
      %1283 = vmatprep.subr.mxu0 0.0
      %1284 = vmatpush1.msra.mxu0 0.0
      %1285 = vmatprep.subr.mxu0 0.0
      %1286 = vmatpush1.msra.mxu0 %v382
      %1287 = vmatprep.subr.mxu0 0.0
      %1288 = vmatpush1.msra.mxu0 %v313
      %1289 = vmatprep.subr.mxu0 0.0
      %1290 = vmatpush2.msra.mxu0 0.0
      %1291 = vmatprep.subr.mxu0 0.0
      %1292 = vmatpush2.msra.mxu0 0.0
      %1293 = vmatprep.subr.mxu0 0.0
      %1294 = vmatpush2.msra.mxu0 0.0
      %1295 = vmatprep.subr.mxu0 0.0
      %1296 = vmatpush2.msra.mxu0 0.0
      %1297 = vmatprep.subr.mxu0 0.0
      %1298 = vmatpush2.msra.mxu0 0.0
      %1299 = vmatprep.subr.mxu0 0.0
      %1300 = vmatpush2.msra.mxu0 0.0
      %1301 = vmatprep.subr.mxu0 0.0
      %1302 = vmatpush2.msra.mxu0 0.0
      %1303 = vmatprep.subr.mxu0 0.0
      %1304 = vmatpush2.msra.mxu0 0.0
      %1305 = vmatprep.subr.mxu0 0.0
      %1306 = vmatpush2.msra.mxu0 0.0
      %1307 = vmatprep.subr.mxu0 0.0
      %1308 = vmatpush2.msra.mxu0 0.0
      %1309 = vmatprep.subr.mxu0 0.0
      %1310 = vmatpush2.msra.mxu0 0.0
      %1311 = vmatprep.subr.mxu0 0.0
      %1312 = vmatpush2.msra.mxu0 0.0
      %1313 = vmatprep.subr.mxu0 0.0
      %1314 = vmatpush2.msra.mxu0 0.0
      %1315 = vmatprep.subr.mxu0 0.0
      %1316 = vmatpush2.msra.mxu0 0.0
      %1317 = vmatprep.subr.mxu0 0.0
      %1318 = vmatpush2.msra.mxu0 0.0
      %1319 = vmatprep.subr.mxu0 0.0
      %1320 = vmatpush2.msra.mxu0 0.0
      %1321 = vmatprep.mubr.f32.mxu0 0.0
      %1322 = vmatmul.mubr.f32.gmra.mxu0 %v1210
      %v1323 = vpop.f32.mrf.mxu0
      %v1324 = vadd.f32 0.0, %v1323
      %v1325 = vpop.f32.mrf.mxu0
      %1326 = vmatprep.mubr.f32.mxu0 0.0
      %1327 = vmatmul.mubr.f32.gmra.mxu0 %v1213
      %v1328 = vpop.f32.mrf.mxu0
      %v1329 = vadd.f32 0.0, %v1328
      %v1330 = vpop.f32.mrf.mxu0
      %1331 = vmatprep.mubr.f32.mxu0 0.0
      %1332 = vmatmul.mubr.f32.gmra.mxu0 %v1216
      %v1333 = vpop.f32.mrf.mxu0
      %v1334 = vadd.f32 0.0, %v1333
      %v1335 = vpop.f32.mrf.mxu0
      %1336 = vmatprep.mubr.f32.mxu0 0.0
      %1337 = vmatmul.mubr.f32.gmra.mxu0 %v1219
      %v1338 = vpop.f32.mrf.mxu0
      %v1339 = vadd.f32 0.0, %v1338
      %v1340 = vpop.f32.mrf.mxu0
      %1341 = vmatprep.mubr.f32.mxu0 0.0
      %1342 = vmatmul.mubr.f32.gmra.mxu0 %v1222
      %v1343 = vpop.f32.mrf.mxu0
      %v1344 = vadd.f32 0.0, %v1343
      %v1345 = vpop.f32.mrf.mxu0
      %1346 = vmatprep.mubr.f32.mxu0 0.0
      %1347 = vmatmul.mubr.f32.gmra.mxu0 %v1225
      %v1348 = vpop.f32.mrf.mxu0
      %v1349 = vadd.f32 0.0, %v1348
      %v1350 = vpop.f32.mrf.mxu0
      %1351 = vmatprep.mubr.f32.mxu0 0.0
      %1352 = vmatmul.mubr.f32.gmra.mxu0 %v1228
      %v1353 = vpop.f32.mrf.mxu0
      %v1354 = vadd.f32 0.0, %v1353
      %v1355 = vpop.f32.mrf.mxu0
      %1356 = vmatprep.mubr.f32.mxu0 0.0
      %1357 = vmatmul.mubr.f32.gmra.mxu0 %v1231
      %v1358 = vpop.f32.mrf.mxu0
      %v1359 = vadd.f32 0.0, %v1358
      %v1360 = vpop.f32.mrf.mxu0
      %1361 = vmatprep.mubr.f32.mxu0 0.0
      %1362 = vmatmul.mubr.f32.gmra.mxu0 %v1234
      %v1363 = vpop.f32.mrf.mxu0
      %v1364 = vadd.f32 0.0, %v1363
      %v1365 = vpop.f32.mrf.mxu0
      %1366 = vmatprep.mubr.f32.mxu0 0.0
      %1367 = vmatmul.mubr.f32.gmra.mxu0 %v1237
      %v1368 = vpop.f32.mrf.mxu0
      %v1369 = vadd.f32 0.0, %v1368
      %v1370 = vpop.f32.mrf.mxu0
      %1371 = vmatprep.mubr.f32.mxu0 0.0
      %1372 = vmatmul.mubr.f32.gmra.mxu0 %v1240
      %v1373 = vpop.f32.mrf.mxu0
      %v1374 = vadd.f32 0.0, %v1373
      %v1375 = vpop.f32.mrf.mxu0
      %1376 = vmatprep.mubr.f32.mxu0 0.0
      %1377 = vmatmul.mubr.f32.gmra.mxu0 %v1243
      %v1378 = vpop.f32.mrf.mxu0
      %v1379 = vadd.f32 0.0, %v1378
      %v1380 = vpop.f32.mrf.mxu0
      %1381 = vmatprep.mubr.f32.mxu0 0.0
      %1382 = vmatmul.mubr.f32.gmra.mxu0 %v1246
      %v1383 = vpop.f32.mrf.mxu0
      %v1384 = vadd.f32 0.0, %v1383
      %v1385 = vpop.f32.mrf.mxu0
      %1386 = vmatprep.mubr.f32.mxu0 0.0
      %1387 = vmatmul.mubr.f32.gmra.mxu0 %v1249
      %v1388 = vpop.f32.mrf.mxu0
      %v1389 = vadd.f32 0.0, %v1388
      %v1390 = vpop.f32.mrf.mxu0
      %1391 = vmatprep.mubr.f32.mxu0 0.0
      %1392 = vmatmul.mubr.f32.gmra.mxu0 %v1252
      %v1393 = vpop.f32.mrf.mxu0
      %v1394 = vadd.f32 0.0, %v1393
      %v1395 = vpop.f32.mrf.mxu0
      %1396 = vmatprep.mubr.f32.mxu0 0.0
      %1397 = vmatmul.mubr.f32.gmra.mxu0 %v1255
      %v1398 = vpop.f32.mrf.mxu0
      %v1399 = vadd.f32 0.0, %v1398
      %v1400 = vpop.f32.mrf.mxu0
      %1401 = vdwg.mxu0
      %v1402 = vmax.f32 %v1324, 0.0
      %v1403 = vmax.f32 %v1329, 0.0
      %v1404 = vmax.f32 %v1334, 0.0
      %v1405 = vmax.f32 %v1339, 0.0
      %v1406 = vmax.f32 %v1344, 0.0
      %v1407 = vmax.f32 %v1349, 0.0
      %v1408 = vmax.f32 %v1354, 0.0
      %v1409 = vmax.f32 %v1359, 0.0
      %v1410 = vmax.f32 %v1364, 0.0
      %v1411 = vmax.f32 %v1369, 0.0
      %v1412 = vmax.f32 %v1374, 0.0
      %v1413 = vmax.f32 %v1379, 0.0
      %v1414 = vmax.f32 %v1384, 0.0
      %v1415 = vmax.f32 %v1389, 0.0
      %v1416 = vmax.f32 %v1394, 0.0
      %v1417 = vmax.f32 %v1399, 0.0
      %v1434 = vrot.slane %v1402, 5
      %v1435 = vrot.slane %v1403, 5
      %v1436 = vsel %vm561, %v1434, %v1435
      %v1437 = vrot.slane %v1404, 5
      %v1438 = vsel %vm561, %v1435, %v1437
      %v1439 = vrot.slane %v1405, 5
      %v1440 = vsel %vm561, %v1437, %v1439
      %v1441 = vrot.slane %v1406, 5
      %v1442 = vsel %vm561, %v1439, %v1441
      %v1443 = vrot.slane %v1407, 5
      %v1444 = vsel %vm561, %v1441, %v1443
      %v1445 = vrot.slane %v1408, 5
      %v1446 = vsel %vm561, %v1443, %v1445
      %v1447 = vrot.slane %v1409, 5
      %v1448 = vsel %vm561, %v1445, %v1447
      %v1449 = vrot.slane %v1410, 5
      %v1450 = vsel %vm561, %v1447, %v1449
      %v1451 = vrot.slane %v1411, 5
      %v1452 = vsel %vm561, %v1449, %v1451
      %v1453 = vrot.slane %v1412, 5
      %v1454 = vsel %vm561, %v1451, %v1453
      %v1455 = vrot.slane %v1413, 5
      %v1456 = vsel %vm561, %v1453, %v1455
      %v1457 = vrot.slane %v1414, 5
      %v1458 = vsel %vm561, %v1455, %v1457
      %v1459 = vrot.slane %v1415, 5
      %v1460 = vsel %vm561, %v1457, %v1459
      %v1461 = vrot.slane %v1416, 5
      %v1462 = vsel %vm561, %v1459, %v1461
      %v1463 = vrot.slane %v1417, 5
      %v1464 = vsel %vm561, %v1461, %v1463
      %1482 = vst.msk [vmem:[#allocation2 + $0x348] sm:$0xf8] %vm610, %v1434
      %1483 = vst.msk [vmem:[#allocation2 + $0x370] sm:$0xff] %vm256, %v1436
      %1484 = vst.msk [vmem:[#allocation2 + $0x398] sm:$0xff] %vm256, %v1438
      %1485 = vst.msk [vmem:[#allocation2 + $0x3c0] sm:$0xff] %vm256, %v1440
      %1486 = vst.msk [vmem:[#allocation2 + $0x3e8] sm:$0xff] %vm256, %v1442
      %1487 = vst.msk [vmem:[#allocation2 + $0x410] sm:$0xff] %vm256, %v1444
      %1488 = vst.msk [vmem:[#allocation2 + $0x438] sm:$0xff] %vm256, %v1446
      %1489 = vst.msk [vmem:[#allocation2 + $0x460] sm:$0xff] %vm256, %v1448
      %1490 = vst.msk [vmem:[#allocation2 + $0x488] sm:$0xff] %vm256, %v1450
      %1491 = vst.msk [vmem:[#allocation2 + $0x4b0] sm:$0xff] %vm256, %v1452
      %1492 = vst.msk [vmem:[#allocation2 + $0x4d8] sm:$0xff] %vm256, %v1454
      %1493 = vst.msk [vmem:[#allocation2 + $0x500] sm:$0xff] %vm256, %v1456
      %1494 = vst.msk [vmem:[#allocation2 + $0x528] sm:$0xff] %vm256, %v1458
      %1495 = vst.msk [vmem:[#allocation2 + $0x550] sm:$0xff] %vm256, %v1460
      %1496 = vst.msk [vmem:[#allocation2 + $0x578] sm:$0xff] %vm256, %v1462
      %1497 = vst.msk [vmem:[#allocation2 + $0x5a0] sm:$0xff] %vm256, %v1464
      %1498 = vst.msk [vmem:[#allocation2 + $0x5c8] sm:$0x7] %vm627, %v1463
      %v1499 = vrot.slane %v1402, 6
      %v1500 = vrot.slane %v1403, 6
      %v1501 = vsel %vm380, %v1499, %v1500
      %v1502 = vrot.slane %v1404, 6
      %v1503 = vsel %vm380, %v1500, %v1502
      %v1504 = vrot.slane %v1405, 6
      %v1505 = vsel %vm380, %v1502, %v1504
      %v1506 = vrot.slane %v1406, 6
      %v1507 = vsel %vm380, %v1504, %v1506
      %v1508 = vrot.slane %v1407, 6
      %v1509 = vsel %vm380, %v1506, %v1508
      %v1510 = vrot.slane %v1408, 6
      %v1511 = vsel %vm380, %v1508, %v1510
      %v1512 = vrot.slane %v1409, 6
      %v1513 = vsel %vm380, %v1510, %v1512
      %v1514 = vrot.slane %v1410, 6
      %v1515 = vsel %vm380, %v1512, %v1514
      %v1516 = vrot.slane %v1411, 6
      %v1517 = vsel %vm380, %v1514, %v1516
      %v1518 = vrot.slane %v1412, 6
      %v1519 = vsel %vm380, %v1516, %v1518
      %v1520 = vrot.slane %v1413, 6
      %v1521 = vsel %vm380, %v1518, %v1520
      %v1522 = vrot.slane %v1414, 6
      %v1523 = vsel %vm380, %v1520, %v1522
      %v1524 = vrot.slane %v1415, 6
      %v1525 = vsel %vm380, %v1522, %v1524
      %v1526 = vrot.slane %v1416, 6
      %v1527 = vsel %vm380, %v1524, %v1526
      %v1528 = vrot.slane %v1417, 6
      %v1529 = vsel %vm380, %v1526, %v1528
      %1530 = vrot.lane.b32.xlu0 %v1499, 64
      %v1531 = vpop.permute.xlu0 %1530
      %1532 = vrot.lane.b32.xlu0 %v1501, 64
      %v1533 = vpop.permute.xlu0 %1532
      %1534 = vrot.lane.b32.xlu0 %v1503, 64
      %v1535 = vpop.permute.xlu0 %1534
      %1536 = vrot.lane.b32.xlu0 %v1505, 64
      %v1537 = vpop.permute.xlu0 %1536
      %1538 = vrot.lane.b32.xlu0 %v1507, 64
      %v1539 = vpop.permute.xlu0 %1538
      %1540 = vrot.lane.b32.xlu0 %v1509, 64
      %v1541 = vpop.permute.xlu0 %1540
      %1542 = vrot.lane.b32.xlu0 %v1511, 64
      %v1543 = vpop.permute.xlu0 %1542
      %1544 = vrot.lane.b32.xlu0 %v1513, 64
      %v1545 = vpop.permute.xlu0 %1544
      %1546 = vrot.lane.b32.xlu0 %v1515, 64
      %v1547 = vpop.permute.xlu0 %1546
      %1548 = vrot.lane.b32.xlu0 %v1517, 64
      %v1549 = vpop.permute.xlu0 %1548
      %1550 = vrot.lane.b32.xlu0 %v1519, 64
      %v1551 = vpop.permute.xlu0 %1550
      %1552 = vrot.lane.b32.xlu0 %v1521, 64
      %v1553 = vpop.permute.xlu0 %1552
      %1554 = vrot.lane.b32.xlu0 %v1523, 64
      %v1555 = vpop.permute.xlu0 %1554
      %1556 = vrot.lane.b32.xlu0 %v1525, 64
      %v1557 = vpop.permute.xlu0 %1556
      %1558 = vrot.lane.b32.xlu0 %v1527, 64
      %v1559 = vpop.permute.xlu0 %1558
      %1560 = vrot.lane.b32.xlu0 %v1529, 64
      %v1561 = vpop.permute.xlu0 %1560
      %1562 = vrot.lane.b32.xlu0 %v1528, 64
      %v1563 = vpop.permute.xlu0 %1562
      %1581 = vst.msk [vmem:[#allocation2 + $0x348] sm:$0xfc] %vm711, %v1531
      %1582 = vst.msk [vmem:[#allocation2 + $0x370] sm:$0xff] %vm713, %v1533
      %1583 = vst.msk [vmem:[#allocation2 + $0x398] sm:$0xff] %vm713, %v1535
      %1584 = vst.msk [vmem:[#allocation2 + $0x3c0] sm:$0xff] %vm713, %v1537
      %1585 = vst.msk [vmem:[#allocation2 + $0x3e8] sm:$0xff] %vm713, %v1539
      %1586 = vst.msk [vmem:[#allocation2 + $0x410] sm:$0xff] %vm713, %v1541
      %1587 = vst.msk [vmem:[#allocation2 + $0x438] sm:$0xff] %vm713, %v1543
      %1588 = vst.msk [vmem:[#allocation2 + $0x460] sm:$0xff] %vm713, %v1545
      %1589 = vst.msk [vmem:[#allocation2 + $0x488] sm:$0xff] %vm713, %v1547
      %1590 = vst.msk [vmem:[#allocation2 + $0x4b0] sm:$0xff] %vm713, %v1549
      %1591 = vst.msk [vmem:[#allocation2 + $0x4d8] sm:$0xff] %vm713, %v1551
      %1592 = vst.msk [vmem:[#allocation2 + $0x500] sm:$0xff] %vm713, %v1553
      %1593 = vst.msk [vmem:[#allocation2 + $0x528] sm:$0xff] %vm713, %v1555
      %1594 = vst.msk [vmem:[#allocation2 + $0x550] sm:$0xff] %vm713, %v1557
      %1595 = vst.msk [vmem:[#allocation2 + $0x578] sm:$0xff] %vm713, %v1559
      %1596 = vst.msk [vmem:[#allocation2 + $0x5a0] sm:$0xff] %vm713, %v1561
      %1597 = vst.msk [vmem:[#allocation2 + $0x5c8] sm:$0x3] %vm729, %v1563
      %v1598 = vrot.slane %v1402, 7
      %v1599 = vrot.slane %v1403, 7
      %v1600 = vsel %vm731, %v1598, %v1599
      %v1601 = vrot.slane %v1404, 7
      %v1602 = vsel %vm731, %v1599, %v1601
      %v1603 = vrot.slane %v1405, 7
      %v1604 = vsel %vm731, %v1601, %v1603
      %v1605 = vrot.slane %v1406, 7
      %v1606 = vsel %vm731, %v1603, %v1605
      %v1607 = vrot.slane %v1407, 7
      %v1608 = vsel %vm731, %v1605, %v1607
      %v1609 = vrot.slane %v1408, 7
      %v1610 = vsel %vm731, %v1607, %v1609
      %v1611 = vrot.slane %v1409, 7
      %v1612 = vsel %vm731, %v1609, %v1611
      %v1613 = vrot.slane %v1410, 7
      %v1614 = vsel %vm731, %v1611, %v1613
      %v1615 = vrot.slane %v1411, 7
      %v1616 = vsel %vm731, %v1613, %v1615
      %v1617 = vrot.slane %v1412, 7
      %v1618 = vsel %vm731, %v1615, %v1617
      %v1619 = vrot.slane %v1413, 7
      %v1620 = vsel %vm731, %v1617, %v1619
      %v1621 = vrot.slane %v1414, 7
      %v1622 = vsel %vm731, %v1619, %v1621
      %v1623 = vrot.slane %v1415, 7
      %v1624 = vsel %vm731, %v1621, %v1623
      %v1625 = vrot.slane %v1416, 7
      %v1626 = vsel %vm731, %v1623, %v1625
      %v1627 = vrot.slane %v1417, 7
      %v1628 = vsel %vm731, %v1625, %v1627
      %1646 = vst.msk [vmem:[#allocation2 + $0x350] sm:$0xfe] %vm780, %v1598
      %1647 = vst.msk [vmem:[#allocation2 + $0x378] sm:$0xff] %vm256, %v1600
      %1648 = vst.msk [vmem:[#allocation2 + $0x3a0] sm:$0xff] %vm256, %v1602
      %1649 = vst.msk [vmem:[#allocation2 + $0x3c8] sm:$0xff] %vm256, %v1604
      %1650 = vst.msk [vmem:[#allocation2 + $0x3f0] sm:$0xff] %vm256, %v1606
      %1651 = vst.msk [vmem:[#allocation2 + $0x418] sm:$0xff] %vm256, %v1608
      %1652 = vst.msk [vmem:[#allocation2 + $0x440] sm:$0xff] %vm256, %v1610
      %1653 = vst.msk [vmem:[#allocation2 + $0x468] sm:$0xff] %vm256, %v1612
      %1654 = vst.msk [vmem:[#allocation2 + $0x490] sm:$0xff] %vm256, %v1614
      %1655 = vst.msk [vmem:[#allocation2 + $0x4b8] sm:$0xff] %vm256, %v1616
      %1656 = vst.msk [vmem:[#allocation2 + $0x4e0] sm:$0xff] %vm256, %v1618
      %1657 = vst.msk [vmem:[#allocation2 + $0x508] sm:$0xff] %vm256, %v1620
      %1658 = vst.msk [vmem:[#allocation2 + $0x530] sm:$0xff] %vm256, %v1622
      %1659 = vst.msk [vmem:[#allocation2 + $0x558] sm:$0xff] %vm256, %v1624
      %1660 = vst.msk [vmem:[#allocation2 + $0x580] sm:$0xff] %vm256, %v1626
      %1661 = vst.msk [vmem:[#allocation2 + $0x5a8] sm:$0xff] %vm256, %v1628
      %1662 = vst.msk [vmem:[#allocation2 + $0x5d0] sm:$0x1] %vm797, %v1627
      %1663 = vrot.lane.b32.xlu0 %v1598, 64
      %v1664 = vpop.permute.xlu0 %1663
      %1665 = vrot.lane.b32.xlu0 %v1600, 64
      %v1666 = vpop.permute.xlu0 %1665
      %1667 = vrot.lane.b32.xlu0 %v1602, 64
      %v1668 = vpop.permute.xlu0 %1667
      %1669 = vrot.lane.b32.xlu0 %v1604, 64
      %v1670 = vpop.permute.xlu0 %1669
      %1671 = vrot.lane.b32.xlu0 %v1606, 64
      %v1672 = vpop.permute.xlu0 %1671
      %1673 = vrot.lane.b32.xlu0 %v1608, 64
      %v1674 = vpop.permute.xlu0 %1673
      %1675 = vrot.lane.b32.xlu0 %v1610, 64
      %v1676 = vpop.permute.xlu0 %1675
      %1677 = vrot.lane.b32.xlu0 %v1612, 64
      %v1678 = vpop.permute.xlu0 %1677
      %1679 = vrot.lane.b32.xlu0 %v1614, 64
      %v1680 = vpop.permute.xlu0 %1679
      %1681 = vrot.lane.b32.xlu0 %v1616, 64
      %v1682 = vpop.permute.xlu0 %1681
      %1683 = vrot.lane.b32.xlu0 %v1618, 64
      %v1684 = vpop.permute.xlu0 %1683
      %1685 = vrot.lane.b32.xlu0 %v1620, 64
      %v1686 = vpop.permute.xlu0 %1685
      %1687 = vrot.lane.b32.xlu0 %v1622, 64
      %v1688 = vpop.permute.xlu0 %1687
      %1689 = vrot.lane.b32.xlu0 %v1624, 64
      %v1690 = vpop.permute.xlu0 %1689
      %1691 = vrot.lane.b32.xlu0 %v1626, 64
      %v1692 = vpop.permute.xlu0 %1691
      %1693 = vrot.lane.b32.xlu0 %v1628, 64
      %v1694 = vpop.permute.xlu0 %1693
      %1695 = vrot.lane.b32.xlu0 %v1627, 64
      %v1696 = vpop.permute.xlu0 %1695
      %1714 = vst.msk [vmem:[#allocation2 + $0x300] sm:$0xfe] %vm850, %v1664
      %1715 = vst.msk [vmem:[#allocation2 + $0x328] sm:$0xff] %vm713, %v1666
      %1716 = vst.msk [vmem:[#allocation2 + $0x350] sm:$0xff] %vm713, %v1668
      %1717 = vst.msk [vmem:[#allocation2 + $0x378] sm:$0xff] %vm713, %v1670
      %1718 = vst.msk [vmem:[#allocation2 + $0x3a0] sm:$0xff] %vm713, %v1672
      %1719 = vst.msk [vmem:[#allocation2 + $0x3c8] sm:$0xff] %vm713, %v1674
      %1720 = vst.msk [vmem:[#allocation2 + $0x3f0] sm:$0xff] %vm713, %v1676
      %1721 = vst.msk [vmem:[#allocation2 + $0x418] sm:$0xff] %vm713, %v1678
      %1722 = vst.msk [vmem:[#allocation2 + $0x440] sm:$0xff] %vm713, %v1680
      %1723 = vst.msk [vmem:[#allocation2 + $0x468] sm:$0xff] %vm713, %v1682
      %1724 = vst.msk [vmem:[#allocation2 + $0x490] sm:$0xff] %vm713, %v1684
      %1725 = vst.msk [vmem:[#allocation2 + $0x4b8] sm:$0xff] %vm713, %v1686
      %1726 = vst.msk [vmem:[#allocation2 + $0x4e0] sm:$0xff] %vm713, %v1688
      %1727 = vst.msk [vmem:[#allocation2 + $0x508] sm:$0xff] %vm713, %v1690
      %1728 = vst.msk [vmem:[#allocation2 + $0x530] sm:$0xff] %vm713, %v1692
      %1729 = vst.msk [vmem:[#allocation2 + $0x558] sm:$0xff] %vm713, %v1694
      %1730 = vst.msk [vmem:[#allocation2 + $0x580] sm:$0x1] %vm867, %v1696
      %1731 = vst.msk [vmem:[#allocation2 + $0x308] sm:$0xff] %vm256, %v1402
      %1732 = vst.msk [vmem:[#allocation2 + $0x330] sm:$0xff] %vm256, %v1403
      %1733 = vst.msk [vmem:[#allocation2 + $0x358] sm:$0xff] %vm256, %v1404
      %1734 = vst.msk [vmem:[#allocation2 + $0x380] sm:$0xff] %vm256, %v1405
      %1735 = vst.msk [vmem:[#allocation2 + $0x3a8] sm:$0xff] %vm256, %v1406
      %1736 = vst.msk [vmem:[#allocation2 + $0x3d0] sm:$0xff] %vm256, %v1407
      %1737 = vst.msk [vmem:[#allocation2 + $0x3f8] sm:$0xff] %vm256, %v1408
      %1738 = vst.msk [vmem:[#allocation2 + $0x420] sm:$0xff] %vm256, %v1409
      %1739 = vst.msk [vmem:[#allocation2 + $0x448] sm:$0xff] %vm256, %v1410
      %1740 = vst.msk [vmem:[#allocation2 + $0x470] sm:$0xff] %vm256, %v1411
      %1741 = vst.msk [vmem:[#allocation2 + $0x498] sm:$0xff] %vm256, %v1412
      %1742 = vst.msk [vmem:[#allocation2 + $0x4c0] sm:$0xff] %vm256, %v1413
      %1743 = vst.msk [vmem:[#allocation2 + $0x4e8] sm:$0xff] %vm256, %v1414
      %1744 = vst.msk [vmem:[#allocation2 + $0x510] sm:$0xff] %vm256, %v1415
      %1745 = vst.msk [vmem:[#allocation2 + $0x538] sm:$0xff] %vm256, %v1416
      %1746 = vst.msk [vmem:[#allocation2 + $0x560] sm:$0xff] %vm256, %v1417
      %v1747 = vrot.slane %v1402, 1
      %v1748 = vrot.slane %v1403, 1
      %v1749 = vsel %vm885, %v1747, %v1748
      %v1750 = vrot.slane %v1404, 1
      %v1751 = vsel %vm885, %v1748, %v1750
      %v1752 = vrot.slane %v1405, 1
      %v1753 = vsel %vm885, %v1750, %v1752
      %v1754 = vrot.slane %v1406, 1
      %v1755 = vsel %vm885, %v1752, %v1754
      %v1756 = vrot.slane %v1407, 1
      %v1757 = vsel %vm885, %v1754, %v1756
      %v1758 = vrot.slane %v1408, 1
      %v1759 = vsel %vm885, %v1756, %v1758
      %v1760 = vrot.slane %v1409, 1
      %v1761 = vsel %vm885, %v1758, %v1760
      %v1762 = vrot.slane %v1410, 1
      %v1763 = vsel %vm885, %v1760, %v1762
      %v1764 = vrot.slane %v1411, 1
      %v1765 = vsel %vm885, %v1762, %v1764
      %v1766 = vrot.slane %v1412, 1
      %v1767 = vsel %vm885, %v1764, %v1766
      %v1768 = vrot.slane %v1413, 1
      %v1769 = vsel %vm885, %v1766, %v1768
      %v1770 = vrot.slane %v1414, 1
      %v1771 = vsel %vm885, %v1768, %v1770
      %v1772 = vrot.slane %v1415, 1
      %v1773 = vsel %vm885, %v1770, %v1772
      %v1774 = vrot.slane %v1416, 1
      %v1775 = vsel %vm885, %v1772, %v1774
      %v1776 = vrot.slane %v1417, 1
      %v1777 = vsel %vm885, %v1774, %v1776
      %1778 = vrot.lane.b32.xlu0 %v1747, 64
      %v1779 = vpop.permute.xlu0 %1778
      %1780 = vrot.lane.b32.xlu0 %v1749, 64
      %v1781 = vpop.permute.xlu0 %1780
      %1782 = vrot.lane.b32.xlu0 %v1751, 64
      %v1783 = vpop.permute.xlu0 %1782
      %1784 = vrot.lane.b32.xlu0 %v1753, 64
      %v1785 = vpop.permute.xlu0 %1784
      %1786 = vrot.lane.b32.xlu0 %v1755, 64
      %v1787 = vpop.permute.xlu0 %1786
      %1788 = vrot.lane.b32.xlu0 %v1757, 64
      %v1789 = vpop.permute.xlu0 %1788
      %1790 = vrot.lane.b32.xlu0 %v1759, 64
      %v1791 = vpop.permute.xlu0 %1790
      %1792 = vrot.lane.b32.xlu0 %v1761, 64
      %v1793 = vpop.permute.xlu0 %1792
      %1794 = vrot.lane.b32.xlu0 %v1763, 64
      %v1795 = vpop.permute.xlu0 %1794
      %1796 = vrot.lane.b32.xlu0 %v1765, 64
      %v1797 = vpop.permute.xlu0 %1796
      %1798 = vrot.lane.b32.xlu0 %v1767, 64
      %v1799 = vpop.permute.xlu0 %1798
      %1800 = vrot.lane.b32.xlu0 %v1769, 64
      %v1801 = vpop.permute.xlu0 %1800
      %1802 = vrot.lane.b32.xlu0 %v1771, 64
      %v1803 = vpop.permute.xlu0 %1802
      %1804 = vrot.lane.b32.xlu0 %v1773, 64
      %v1805 = vpop.permute.xlu0 %1804
      %1806 = vrot.lane.b32.xlu0 %v1775, 64
      %v1807 = vpop.permute.xlu0 %1806
      %1808 = vrot.lane.b32.xlu0 %v1777, 64
      %v1809 = vpop.permute.xlu0 %1808
      %1810 = vrot.lane.b32.xlu0 %v1776, 64
      %v1811 = vpop.permute.xlu0 %1810
      %1829 = vst.msk [vmem:[#allocation2 + $0x2e0] sm:$0x80] %vm968, %v1779
      %1830 = vst.msk [vmem:[#allocation2 + $0x308] sm:$0xff] %vm713, %v1781
      %1831 = vst.msk [vmem:[#allocation2 + $0x330] sm:$0xff] %vm713, %v1783
      %1832 = vst.msk [vmem:[#allocation2 + $0x358] sm:$0xff] %vm713, %v1785
      %1833 = vst.msk [vmem:[#allocation2 + $0x380] sm:$0xff] %vm713, %v1787
      %1834 = vst.msk [vmem:[#allocation2 + $0x3a8] sm:$0xff] %vm713, %v1789
      %1835 = vst.msk [vmem:[#allocation2 + $0x3d0] sm:$0xff] %vm713, %v1791
      %1836 = vst.msk [vmem:[#allocation2 + $0x3f8] sm:$0xff] %vm713, %v1793
      %1837 = vst.msk [vmem:[#allocation2 + $0x420] sm:$0xff] %vm713, %v1795
      %1838 = vst.msk [vmem:[#allocation2 + $0x448] sm:$0xff] %vm713, %v1797
      %1839 = vst.msk [vmem:[#allocation2 + $0x470] sm:$0xff] %vm713, %v1799
      %1840 = vst.msk [vmem:[#allocation2 + $0x498] sm:$0xff] %vm713, %v1801
      %1841 = vst.msk [vmem:[#allocation2 + $0x4c0] sm:$0xff] %vm713, %v1803
      %1842 = vst.msk [vmem:[#allocation2 + $0x4e8] sm:$0xff] %vm713, %v1805
      %1843 = vst.msk [vmem:[#allocation2 + $0x510] sm:$0xff] %vm713, %v1807
      %1844 = vst.msk [vmem:[#allocation2 + $0x538] sm:$0xff] %vm713, %v1809
      %1845 = vst.msk [vmem:[#allocation2 + $0x560] sm:$0x7f] %vm985, %v1811
      %1863 = vst.msk [vmem:[#allocation2 + $0x298] sm:$0x80] %vm1004, %v1747
      %1864 = vst.msk [vmem:[#allocation2 + $0x2c0] sm:$0xff] %vm256, %v1749
      %1865 = vst.msk [vmem:[#allocation2 + $0x2e8] sm:$0xff] %vm256, %v1751
      %1866 = vst.msk [vmem:[#allocation2 + $0x310] sm:$0xff] %vm256, %v1753
      %1867 = vst.msk [vmem:[#allocation2 + $0x338] sm:$0xff] %vm256, %v1755
      %1868 = vst.msk [vmem:[#allocation2 + $0x360] sm:$0xff] %vm256, %v1757
      %1869 = vst.msk [vmem:[#allocation2 + $0x388] sm:$0xff] %vm256, %v1759
      %1870 = vst.msk [vmem:[#allocation2 + $0x3b0] sm:$0xff] %vm256, %v1761
      %1871 = vst.msk [vmem:[#allocation2 + $0x3d8] sm:$0xff] %vm256, %v1763
      %1872 = vst.msk [vmem:[#allocation2 + $0x400] sm:$0xff] %vm256, %v1765
      %1873 = vst.msk [vmem:[#allocation2 + $0x428] sm:$0xff] %vm256, %v1767
      %1874 = vst.msk [vmem:[#allocation2 + $0x450] sm:$0xff] %vm256, %v1769
      %1875 = vst.msk [vmem:[#allocation2 + $0x478] sm:$0xff] %vm256, %v1771
      %1876 = vst.msk [vmem:[#allocation2 + $0x4a0] sm:$0xff] %vm256, %v1773
      %1877 = vst.msk [vmem:[#allocation2 + $0x4c8] sm:$0xff] %vm256, %v1775
      %1878 = vst.msk [vmem:[#allocation2 + $0x4f0] sm:$0xff] %vm256, %v1777
      %1879 = vst.msk [vmem:[#allocation2 + $0x518] sm:$0x7f] %vm1021, %v1776
      %v1880 = vrot.slane %v1402, 2
      %v1881 = vrot.slane %v1403, 2
      %v1882 = vsel %vm1023, %v1880, %v1881
      %v1883 = vrot.slane %v1404, 2
      %v1884 = vsel %vm1023, %v1881, %v1883
      %v1885 = vrot.slane %v1405, 2
      %v1886 = vsel %vm1023, %v1883, %v1885
      %v1887 = vrot.slane %v1406, 2
      %v1888 = vsel %vm1023, %v1885, %v1887
      %v1889 = vrot.slane %v1407, 2
      %v1890 = vsel %vm1023, %v1887, %v1889
      %v1891 = vrot.slane %v1408, 2
      %v1892 = vsel %vm1023, %v1889, %v1891
      %v1893 = vrot.slane %v1409, 2
      %v1894 = vsel %vm1023, %v1891, %v1893
      %v1895 = vrot.slane %v1410, 2
      %v1896 = vsel %vm1023, %v1893, %v1895
      %v1897 = vrot.slane %v1411, 2
      %v1898 = vsel %vm1023, %v1895, %v1897
      %v1899 = vrot.slane %v1412, 2
      %v1900 = vsel %vm1023, %v1897, %v1899
      %v1901 = vrot.slane %v1413, 2
      %v1902 = vsel %vm1023, %v1899, %v1901
      %v1903 = vrot.slane %v1414, 2
      %v1904 = vsel %vm1023, %v1901, %v1903
      %v1905 = vrot.slane %v1415, 2
      %v1906 = vsel %vm1023, %v1903, %v1905
      %v1907 = vrot.slane %v1416, 2
      %v1908 = vsel %vm1023, %v1905, %v1907
      %v1909 = vrot.slane %v1417, 2
      %v1910 = vsel %vm1023, %v1907, %v1909
      %1911 = vrot.lane.b32.xlu0 %v1880, 64
      %v1912 = vpop.permute.xlu0 %1911
      %1913 = vrot.lane.b32.xlu0 %v1882, 64
      %v1914 = vpop.permute.xlu0 %1913
      %1915 = vrot.lane.b32.xlu0 %v1884, 64
      %v1916 = vpop.permute.xlu0 %1915
      %1917 = vrot.lane.b32.xlu0 %v1886, 64
      %v1918 = vpop.permute.xlu0 %1917
      %1919 = vrot.lane.b32.xlu0 %v1888, 64
      %v1920 = vpop.permute.xlu0 %1919
      %1921 = vrot.lane.b32.xlu0 %v1890, 64
      %v1922 = vpop.permute.xlu0 %1921
      %1923 = vrot.lane.b32.xlu0 %v1892, 64
      %v1924 = vpop.permute.xlu0 %1923
      %1925 = vrot.lane.b32.xlu0 %v1894, 64
      %v1926 = vpop.permute.xlu0 %1925
      %1927 = vrot.lane.b32.xlu0 %v1896, 64
      %v1928 = vpop.permute.xlu0 %1927
      %1929 = vrot.lane.b32.xlu0 %v1898, 64
      %v1930 = vpop.permute.xlu0 %1929
      %1931 = vrot.lane.b32.xlu0 %v1900, 64
      %v1932 = vpop.permute.xlu0 %1931
      %1933 = vrot.lane.b32.xlu0 %v1902, 64
      %v1934 = vpop.permute.xlu0 %1933
      %1935 = vrot.lane.b32.xlu0 %v1904, 64
      %v1936 = vpop.permute.xlu0 %1935
      %1937 = vrot.lane.b32.xlu0 %v1906, 64
      %v1938 = vpop.permute.xlu0 %1937
      %1939 = vrot.lane.b32.xlu0 %v1908, 64
      %v1940 = vpop.permute.xlu0 %1939
      %1941 = vrot.lane.b32.xlu0 %v1910, 64
      %v1942 = vpop.permute.xlu0 %1941
      %1943 = vrot.lane.b32.xlu0 %v1909, 64
      %v1944 = vpop.permute.xlu0 %1943
      %1962 = vst.msk [vmem:[#allocation2 + $0x298] sm:$0xc0] %vm1106, %v1912
      %1963 = vst.msk [vmem:[#allocation2 + $0x2c0] sm:$0xff] %vm713, %v1914
      %1964 = vst.msk [vmem:[#allocation2 + $0x2e8] sm:$0xff] %vm713, %v1916
      %1965 = vst.msk [vmem:[#allocation2 + $0x310] sm:$0xff] %vm713, %v1918
      %1966 = vst.msk [vmem:[#allocation2 + $0x338] sm:$0xff] %vm713, %v1920
      %1967 = vst.msk [vmem:[#allocation2 + $0x360] sm:$0xff] %vm713, %v1922
      %1968 = vst.msk [vmem:[#allocation2 + $0x388] sm:$0xff] %vm713, %v1924
      %1969 = vst.msk [vmem:[#allocation2 + $0x3b0] sm:$0xff] %vm713, %v1926
      %1970 = vst.msk [vmem:[#allocation2 + $0x3d8] sm:$0xff] %vm713, %v1928
      %1971 = vst.msk [vmem:[#allocation2 + $0x400] sm:$0xff] %vm713, %v1930
      %1972 = vst.msk [vmem:[#allocation2 + $0x428] sm:$0xff] %vm713, %v1932
      %1973 = vst.msk [vmem:[#allocation2 + $0x450] sm:$0xff] %vm713, %v1934
      %1974 = vst.msk [vmem:[#allocation2 + $0x478] sm:$0xff] %vm713, %v1936
      %1975 = vst.msk [vmem:[#allocation2 + $0x4a0] sm:$0xff] %vm713, %v1938
      %1976 = vst.msk [vmem:[#allocation2 + $0x4c8] sm:$0xff] %vm713, %v1940
      %1977 = vst.msk [vmem:[#allocation2 + $0x4f0] sm:$0xff] %vm713, %v1942
      %1978 = vst.msk [vmem:[#allocation2 + $0x518] sm:$0x3f] %vm1123, %v1944
      %v1979 = vrot.slane %v1402, 3
      %v1980 = vrot.slane %v1403, 3
      %v1981 = vsel %vm1125, %v1979, %v1980
      %v1982 = vrot.slane %v1404, 3
      %v1983 = vsel %vm1125, %v1980, %v1982
      %v1984 = vrot.slane %v1405, 3
      %v1985 = vsel %vm1125, %v1982, %v1984
      %v1986 = vrot.slane %v1406, 3
      %v1987 = vsel %vm1125, %v1984, %v1986
      %v1988 = vrot.slane %v1407, 3
      %v1989 = vsel %vm1125, %v1986, %v1988
      %v1990 = vrot.slane %v1408, 3
      %v1991 = vsel %vm1125, %v1988, %v1990
      %v1992 = vrot.slane %v1409, 3
      %v1993 = vsel %vm1125, %v1990, %v1992
      %v1994 = vrot.slane %v1410, 3
      %v1995 = vsel %vm1125, %v1992, %v1994
      %v1996 = vrot.slane %v1411, 3
      %v1997 = vsel %vm1125, %v1994, %v1996
      %v1998 = vrot.slane %v1412, 3
      %v1999 = vsel %vm1125, %v1996, %v1998
      %v2000 = vrot.slane %v1413, 3
      %v2001 = vsel %vm1125, %v1998, %v2000
      %v2002 = vrot.slane %v1414, 3
      %v2003 = vsel %vm1125, %v2000, %v2002
      %v2004 = vrot.slane %v1415, 3
      %v2005 = vsel %vm1125, %v2002, %v2004
      %v2006 = vrot.slane %v1416, 3
      %v2007 = vsel %vm1125, %v2004, %v2006
      %v2008 = vrot.slane %v1417, 3
      %v2009 = vsel %vm1125, %v2006, %v2008
      %2027 = vst.msk [vmem:[#allocation2 + $0x2a0] sm:$0xe0] %vm1174, %v1979
      %2028 = vst.msk [vmem:[#allocation2 + $0x2c8] sm:$0xff] %vm256, %v1981
      %2029 = vst.msk [vmem:[#allocation2 + $0x2f0] sm:$0xff] %vm256, %v1983
      %2030 = vst.msk [vmem:[#allocation2 + $0x318] sm:$0xff] %vm256, %v1985
      %2031 = vst.msk [vmem:[#allocation2 + $0x340] sm:$0xff] %vm256, %v1987
      %2032 = vst.msk [vmem:[#allocation2 + $0x368] sm:$0xff] %vm256, %v1989
      %2033 = vst.msk [vmem:[#allocation2 + $0x390] sm:$0xff] %vm256, %v1991
      %2034 = vst.msk [vmem:[#allocation2 + $0x3b8] sm:$0xff] %vm256, %v1993
      %2035 = vst.msk [vmem:[#allocation2 + $0x3e0] sm:$0xff] %vm256, %v1995
      %2036 = vst.msk [vmem:[#allocation2 + $0x408] sm:$0xff] %vm256, %v1997
      %2037 = vst.msk [vmem:[#allocation2 + $0x430] sm:$0xff] %vm256, %v1999
      %2038 = vst.msk [vmem:[#allocation2 + $0x458] sm:$0xff] %vm256, %v2001
      %2039 = vst.msk [vmem:[#allocation2 + $0x480] sm:$0xff] %vm256, %v2003
      %2040 = vst.msk [vmem:[#allocation2 + $0x4a8] sm:$0xff] %vm256, %v2005
      %2041 = vst.msk [vmem:[#allocation2 + $0x4d0] sm:$0xff] %vm256, %v2007
      %2042 = vst.msk [vmem:[#allocation2 + $0x4f8] sm:$0xff] %vm256, %v2009
      %2043 = vst.msk [vmem:[#allocation2 + $0x520] sm:$0x1f] %vm1191, %v2008
      %v2044 = vld [vmem:[%s246 + $0x100] sm:$0xff]
      %v2045 = vld [vmem:[%s246 + $0x108] sm:$0xff]
      %v2046 = vld [vmem:[%s246 + $0x110] sm:$0xff]
      %v2047 = vld [vmem:[%s246 + $0x118] sm:$0xff]
      %v2048 = vld [vmem:[%s246 + $0x120] sm:$0xff]
      %v2049 = vld [vmem:[%s246 + $0x128] sm:$0xff]
      %v2050 = vld [vmem:[%s246 + $0x130] sm:$0xff]
      %v2051 = vld [vmem:[%s246 + $0x138] sm:$0xff]
      %v2052 = vld [vmem:[%s246 + $0x140] sm:$0xff]
      %v2053 = vld [vmem:[%s246 + $0x148] sm:$0xff]
      %v2054 = vld [vmem:[%s246 + $0x150] sm:$0xff]
      %v2055 = vld [vmem:[%s246 + $0x158] sm:$0xff]
      %v2056 = vld [vmem:[%s246 + $0x160] sm:$0xff]
      %v2057 = vld [vmem:[%s246 + $0x168] sm:$0xff]
      %v2058 = vld [vmem:[%s246 + $0x170] sm:$0xff]
      %v2059 = vld [vmem:[%s246 + $0x178] sm:$0xff]
      %v2061 = vsel %vm331, %v2044, 0
      %v2064 = vsel %vm331, %v2045, 0
      %v2067 = vsel %vm331, %v2046, 0
      %v2070 = vsel %vm331, %v2047, 0
      %v2073 = vsel %vm331, %v2048, 0
      %v2076 = vsel %vm331, %v2049, 0
      %v2079 = vsel %vm331, %v2050, 0
      %v2082 = vsel %vm331, %v2051, 0
      %v2085 = vsel %vm331, %v2052, 0
      %v2088 = vsel %vm331, %v2053, 0
      %v2091 = vsel %vm331, %v2054, 0
      %v2094 = vsel %vm331, %v2055, 0
      %v2097 = vsel %vm331, %v2056, 0
      %v2100 = vsel %vm331, %v2057, 0
      %v2103 = vsel %vm331, %v2058, 0
      %v2106 = vsel %vm331, %v2059, 0
      %2108 = vmatprep.subr.mxu0 0.0
      %2109 = vmatpush1.msra.mxu0 0.0
      %2110 = vmatprep.subr.mxu0 0.0
      %2111 = vmatpush1.msra.mxu0 0.0
      %2112 = vmatprep.subr.mxu0 0.0
      %2113 = vmatpush1.msra.mxu0 0.0
      %2114 = vmatprep.subr.mxu0 0.0
      %2115 = vmatpush1.msra.mxu0 0.0
      %2116 = vmatprep.subr.mxu0 0.0
      %2117 = vmatpush1.msra.mxu0 0.0
      %2118 = vmatprep.subr.mxu0 0.0
      %2119 = vmatpush1.msra.mxu0 0.0
      %2120 = vmatprep.subr.mxu0 0.0
      %2121 = vmatpush1.msra.mxu0 0.0
      %2122 = vmatprep.subr.mxu0 0.0
      %2123 = vmatpush1.msra.mxu0 0.0
      %2124 = vmatprep.subr.mxu0 0.0
      %2125 = vmatpush1.msra.mxu0 0.0
      %2126 = vmatprep.subr.mxu0 0.0
      %2127 = vmatpush1.msra.mxu0 0.0
      %2128 = vmatprep.subr.mxu0 0.0
      %2129 = vmatpush1.msra.mxu0 0.0
      %2130 = vmatprep.subr.mxu0 0.0
      %2131 = vmatpush1.msra.mxu0 0.0
      %2132 = vmatprep.subr.mxu0 0.0
      %2133 = vmatpush1.msra.mxu0 0.0
      %2134 = vmatprep.subr.mxu0 0.0
      %2135 = vmatpush1.msra.mxu0 0.0
      %2136 = vmatprep.subr.mxu0 0.0
      %2137 = vmatpush1.msra.mxu0 %v382
      %2138 = vmatprep.subr.mxu0 0.0
      %2139 = vmatpush1.msra.mxu0 %v313
      %2140 = vmatprep.subr.mxu0 0.0
      %2141 = vmatpush2.msra.mxu0 0.0
      %2142 = vmatprep.subr.mxu0 0.0
      %2143 = vmatpush2.msra.mxu0 0.0
      %2144 = vmatprep.subr.mxu0 0.0
      %2145 = vmatpush2.msra.mxu0 0.0
      %2146 = vmatprep.subr.mxu0 0.0
      %2147 = vmatpush2.msra.mxu0 0.0
      %2148 = vmatprep.subr.mxu0 0.0
      %2149 = vmatpush2.msra.mxu0 0.0
      %2150 = vmatprep.subr.mxu0 0.0
      %2151 = vmatpush2.msra.mxu0 0.0
      %2152 = vmatprep.subr.mxu0 0.0
      %2153 = vmatpush2.msra.mxu0 0.0
      %2154 = vmatprep.subr.mxu0 0.0
      %2155 = vmatpush2.msra.mxu0 0.0
      %2156 = vmatprep.subr.mxu0 0.0
      %2157 = vmatpush2.msra.mxu0 0.0
      %2158 = vmatprep.subr.mxu0 0.0
      %2159 = vmatpush2.msra.mxu0 0.0
      %2160 = vmatprep.subr.mxu0 0.0
      %2161 = vmatpush2.msra.mxu0 0.0
      %2162 = vmatprep.subr.mxu0 0.0
      %2163 = vmatpush2.msra.mxu0 0.0
      %2164 = vmatprep.subr.mxu0 0.0
      %2165 = vmatpush2.msra.mxu0 0.0
      %2166 = vmatprep.subr.mxu0 0.0
      %2167 = vmatpush2.msra.mxu0 0.0
      %2168 = vmatprep.subr.mxu0 0.0
      %2169 = vmatpush2.msra.mxu0 0.0
      %2170 = vmatprep.subr.mxu0 0.0
      %2171 = vmatpush2.msra.mxu0 0.0
      %2172 = vmatprep.mubr.f32.mxu0 0.0
      %2173 = vmatmul.mubr.f32.gmra.mxu0 %v2061
      %v2174 = vpop.f32.mrf.mxu0
      %v2175 = vadd.f32 0.0, %v2174
      %v2176 = vpop.f32.mrf.mxu0
      %2177 = vmatprep.mubr.f32.mxu0 0.0
      %2178 = vmatmul.mubr.f32.gmra.mxu0 %v2064
      %v2179 = vpop.f32.mrf.mxu0
      %v2180 = vadd.f32 0.0, %v2179
      %v2181 = vpop.f32.mrf.mxu0
      %2182 = vmatprep.mubr.f32.mxu0 0.0
      %2183 = vmatmul.mubr.f32.gmra.mxu0 %v2067
      %v2184 = vpop.f32.mrf.mxu0
      %v2185 = vadd.f32 0.0, %v2184
      %v2186 = vpop.f32.mrf.mxu0
      %2187 = vmatprep.mubr.f32.mxu0 0.0
      %2188 = vmatmul.mubr.f32.gmra.mxu0 %v2070
      %v2189 = vpop.f32.mrf.mxu0
      %v2190 = vadd.f32 0.0, %v2189
      %v2191 = vpop.f32.mrf.mxu0
      %2192 = vmatprep.mubr.f32.mxu0 0.0
      %2193 = vmatmul.mubr.f32.gmra.mxu0 %v2073
      %v2194 = vpop.f32.mrf.mxu0
      %v2195 = vadd.f32 0.0, %v2194
      %v2196 = vpop.f32.mrf.mxu0
      %2197 = vmatprep.mubr.f32.mxu0 0.0
      %2198 = vmatmul.mubr.f32.gmra.mxu0 %v2076
      %v2199 = vpop.f32.mrf.mxu0
      %v2200 = vadd.f32 0.0, %v2199
      %v2201 = vpop.f32.mrf.mxu0
      %2202 = vmatprep.mubr.f32.mxu0 0.0
      %2203 = vmatmul.mubr.f32.gmra.mxu0 %v2079
      %v2204 = vpop.f32.mrf.mxu0
      %v2205 = vadd.f32 0.0, %v2204
      %v2206 = vpop.f32.mrf.mxu0
      %2207 = vmatprep.mubr.f32.mxu0 0.0
      %2208 = vmatmul.mubr.f32.gmra.mxu0 %v2082
      %v2209 = vpop.f32.mrf.mxu0
      %v2210 = vadd.f32 0.0, %v2209
      %v2211 = vpop.f32.mrf.mxu0
      %2212 = vmatprep.mubr.f32.mxu0 0.0
      %2213 = vmatmul.mubr.f32.gmra.mxu0 %v2085
      %v2214 = vpop.f32.mrf.mxu0
      %v2215 = vadd.f32 0.0, %v2214
      %v2216 = vpop.f32.mrf.mxu0
      %2217 = vmatprep.mubr.f32.mxu0 0.0
      %2218 = vmatmul.mubr.f32.gmra.mxu0 %v2088
      %v2219 = vpop.f32.mrf.mxu0
      %v2220 = vadd.f32 0.0, %v2219
      %v2221 = vpop.f32.mrf.mxu0
      %2222 = vmatprep.mubr.f32.mxu0 0.0
      %2223 = vmatmul.mubr.f32.gmra.mxu0 %v2091
      %v2224 = vpop.f32.mrf.mxu0
      %v2225 = vadd.f32 0.0, %v2224
      %v2226 = vpop.f32.mrf.mxu0
      %2227 = vmatprep.mubr.f32.mxu0 0.0
      %2228 = vmatmul.mubr.f32.gmra.mxu0 %v2094
      %v2229 = vpop.f32.mrf.mxu0
      %v2230 = vadd.f32 0.0, %v2229
      %v2231 = vpop.f32.mrf.mxu0
      %2232 = vmatprep.mubr.f32.mxu0 0.0
      %2233 = vmatmul.mubr.f32.gmra.mxu0 %v2097
      %v2234 = vpop.f32.mrf.mxu0
      %v2235 = vadd.f32 0.0, %v2234
      %v2236 = vpop.f32.mrf.mxu0
      %2237 = vmatprep.mubr.f32.mxu0 0.0
      %2238 = vmatmul.mubr.f32.gmra.mxu0 %v2100
      %v2239 = vpop.f32.mrf.mxu0
      %v2240 = vadd.f32 0.0, %v2239
      %v2241 = vpop.f32.mrf.mxu0
      %2242 = vmatprep.mubr.f32.mxu0 0.0
      %2243 = vmatmul.mubr.f32.gmra.mxu0 %v2103
      %v2244 = vpop.f32.mrf.mxu0
      %v2245 = vadd.f32 0.0, %v2244
      %v2246 = vpop.f32.mrf.mxu0
      %2247 = vmatprep.mubr.f32.mxu0 0.0
      %2248 = vmatmul.mubr.f32.gmra.mxu0 %v2106
      %v2249 = vpop.f32.mrf.mxu0
      %v2250 = vadd.f32 0.0, %v2249
      %v2251 = vpop.f32.mrf.mxu0
      %2252 = vdwg.mxu0
      %v2253 = vmax.f32 %v2175, 0.0
      %v2254 = vmax.f32 %v2180, 0.0
      %v2255 = vmax.f32 %v2185, 0.0
      %v2256 = vmax.f32 %v2190, 0.0
      %v2257 = vmax.f32 %v2195, 0.0
      %v2258 = vmax.f32 %v2200, 0.0
      %v2259 = vmax.f32 %v2205, 0.0
      %v2260 = vmax.f32 %v2210, 0.0
      %v2261 = vmax.f32 %v2215, 0.0
      %v2262 = vmax.f32 %v2220, 0.0
      %v2263 = vmax.f32 %v2225, 0.0
      %v2264 = vmax.f32 %v2230, 0.0
      %v2265 = vmax.f32 %v2235, 0.0
      %v2266 = vmax.f32 %v2240, 0.0
      %v2267 = vmax.f32 %v2245, 0.0
      %v2268 = vmax.f32 %v2250, 0.0
      %v2285 = vrot.slane %v2253, 5
      %v2286 = vrot.slane %v2254, 5
      %v2287 = vsel %vm561, %v2285, %v2286
      %v2288 = vrot.slane %v2255, 5
      %v2289 = vsel %vm561, %v2286, %v2288
      %v2290 = vrot.slane %v2256, 5
      %v2291 = vsel %vm561, %v2288, %v2290
      %v2292 = vrot.slane %v2257, 5
      %v2293 = vsel %vm561, %v2290, %v2292
      %v2294 = vrot.slane %v2258, 5
      %v2295 = vsel %vm561, %v2292, %v2294
      %v2296 = vrot.slane %v2259, 5
      %v2297 = vsel %vm561, %v2294, %v2296
      %v2298 = vrot.slane %v2260, 5
      %v2299 = vsel %vm561, %v2296, %v2298
      %v2300 = vrot.slane %v2261, 5
      %v2301 = vsel %vm561, %v2298, %v2300
      %v2302 = vrot.slane %v2262, 5
      %v2303 = vsel %vm561, %v2300, %v2302
      %v2304 = vrot.slane %v2263, 5
      %v2305 = vsel %vm561, %v2302, %v2304
      %v2306 = vrot.slane %v2264, 5
      %v2307 = vsel %vm561, %v2304, %v2306
      %v2308 = vrot.slane %v2265, 5
      %v2309 = vsel %vm561, %v2306, %v2308
      %v2310 = vrot.slane %v2266, 5
      %v2311 = vsel %vm561, %v2308, %v2310
      %v2312 = vrot.slane %v2267, 5
      %v2313 = vsel %vm561, %v2310, %v2312
      %v2314 = vrot.slane %v2268, 5
      %v2315 = vsel %vm561, %v2312, %v2314
      %2333 = vst.msk [vmem:[#allocation2 + $0x5c8] sm:$0xf8] %vm610, %v2285
      %2334 = vst.msk [vmem:[#allocation2 + $0x5f0] sm:$0xff] %vm256, %v2287
      %2335 = vst.msk [vmem:[#allocation2 + $0x618] sm:$0xff] %vm256, %v2289
      %2336 = vst.msk [vmem:[#allocation2 + $0x640] sm:$0xff] %vm256, %v2291
      %2337 = vst.msk [vmem:[#allocation2 + $0x668] sm:$0xff] %vm256, %v2293
      %2338 = vst.msk [vmem:[#allocation2 + $0x690] sm:$0xff] %vm256, %v2295
      %2339 = vst.msk [vmem:[#allocation2 + $0x6b8] sm:$0xff] %vm256, %v2297
      %2340 = vst.msk [vmem:[#allocation2 + $0x6e0] sm:$0xff] %vm256, %v2299
      %2341 = vst.msk [vmem:[#allocation2 + $0x708] sm:$0xff] %vm256, %v2301
      %2342 = vst.msk [vmem:[#allocation2 + $0x730] sm:$0xff] %vm256, %v2303
      %2343 = vst.msk [vmem:[#allocation2 + $0x758] sm:$0xff] %vm256, %v2305
      %2344 = vst.msk [vmem:[#allocation2 + $0x780] sm:$0xff] %vm256, %v2307
      %2345 = vst.msk [vmem:[#allocation2 + $0x7a8] sm:$0xff] %vm256, %v2309
      %2346 = vst.msk [vmem:[#allocation2 + $0x7d0] sm:$0xff] %vm256, %v2311
      %2347 = vst.msk [vmem:[#allocation2 + $0x7f8] sm:$0xff] %vm256, %v2313
      %2348 = vst.msk [vmem:[#allocation2 + $0x820] sm:$0xff] %vm256, %v2315
      %2349 = vst.msk [vmem:[#allocation2 + $0x848] sm:$0x7] %vm627, %v2314
      %v2350 = vrot.slane %v2253, 6
      %v2351 = vrot.slane %v2254, 6
      %v2352 = vsel %vm380, %v2350, %v2351
      %v2353 = vrot.slane %v2255, 6
      %v2354 = vsel %vm380, %v2351, %v2353
      %v2355 = vrot.slane %v2256, 6
      %v2356 = vsel %vm380, %v2353, %v2355
      %v2357 = vrot.slane %v2257, 6
      %v2358 = vsel %vm380, %v2355, %v2357
      %v2359 = vrot.slane %v2258, 6
      %v2360 = vsel %vm380, %v2357, %v2359
      %v2361 = vrot.slane %v2259, 6
      %v2362 = vsel %vm380, %v2359, %v2361
      %v2363 = vrot.slane %v2260, 6
      %v2364 = vsel %vm380, %v2361, %v2363
      %v2365 = vrot.slane %v2261, 6
      %v2366 = vsel %vm380, %v2363, %v2365
      %v2367 = vrot.slane %v2262, 6
      %v2368 = vsel %vm380, %v2365, %v2367
      %v2369 = vrot.slane %v2263, 6
      %v2370 = vsel %vm380, %v2367, %v2369
      %v2371 = vrot.slane %v2264, 6
      %v2372 = vsel %vm380, %v2369, %v2371
      %v2373 = vrot.slane %v2265, 6
      %v2374 = vsel %vm380, %v2371, %v2373
      %v2375 = vrot.slane %v2266, 6
      %v2376 = vsel %vm380, %v2373, %v2375
      %v2377 = vrot.slane %v2267, 6
      %v2378 = vsel %vm380, %v2375, %v2377
      %v2379 = vrot.slane %v2268, 6
      %v2380 = vsel %vm380, %v2377, %v2379
      %2381 = vrot.lane.b32.xlu0 %v2350, 64
      %v2382 = vpop.permute.xlu0 %2381
      %2383 = vrot.lane.b32.xlu0 %v2352, 64
      %v2384 = vpop.permute.xlu0 %2383
      %2385 = vrot.lane.b32.xlu0 %v2354, 64
      %v2386 = vpop.permute.xlu0 %2385
      %2387 = vrot.lane.b32.xlu0 %v2356, 64
      %v2388 = vpop.permute.xlu0 %2387
      %2389 = vrot.lane.b32.xlu0 %v2358, 64
      %v2390 = vpop.permute.xlu0 %2389
      %2391 = vrot.lane.b32.xlu0 %v2360, 64
      %v2392 = vpop.permute.xlu0 %2391
      %2393 = vrot.lane.b32.xlu0 %v2362, 64
      %v2394 = vpop.permute.xlu0 %2393
      %2395 = vrot.lane.b32.xlu0 %v2364, 64
      %v2396 = vpop.permute.xlu0 %2395
      %2397 = vrot.lane.b32.xlu0 %v2366, 64
      %v2398 = vpop.permute.xlu0 %2397
      %2399 = vrot.lane.b32.xlu0 %v2368, 64
      %v2400 = vpop.permute.xlu0 %2399
      %2401 = vrot.lane.b32.xlu0 %v2370, 64
      %v2402 = vpop.permute.xlu0 %2401
      %2403 = vrot.lane.b32.xlu0 %v2372, 64
      %v2404 = vpop.permute.xlu0 %2403
      %2405 = vrot.lane.b32.xlu0 %v2374, 64
      %v2406 = vpop.permute.xlu0 %2405
      %2407 = vrot.lane.b32.xlu0 %v2376, 64
      %v2408 = vpop.permute.xlu0 %2407
      %2409 = vrot.lane.b32.xlu0 %v2378, 64
      %v2410 = vpop.permute.xlu0 %2409
      %2411 = vrot.lane.b32.xlu0 %v2380, 64
      %v2412 = vpop.permute.xlu0 %2411
      %2413 = vrot.lane.b32.xlu0 %v2379, 64
      %v2414 = vpop.permute.xlu0 %2413
      %2432 = vst.msk [vmem:[#allocation2 + $0x5c8] sm:$0xfc] %vm711, %v2382
      %2433 = vst.msk [vmem:[#allocation2 + $0x5f0] sm:$0xff] %vm713, %v2384
      %2434 = vst.msk [vmem:[#allocation2 + $0x618] sm:$0xff] %vm713, %v2386
      %2435 = vst.msk [vmem:[#allocation2 + $0x640] sm:$0xff] %vm713, %v2388
      %2436 = vst.msk [vmem:[#allocation2 + $0x668] sm:$0xff] %vm713, %v2390
      %2437 = vst.msk [vmem:[#allocation2 + $0x690] sm:$0xff] %vm713, %v2392
      %2438 = vst.msk [vmem:[#allocation2 + $0x6b8] sm:$0xff] %vm713, %v2394
      %2439 = vst.msk [vmem:[#allocation2 + $0x6e0] sm:$0xff] %vm713, %v2396
      %2440 = vst.msk [vmem:[#allocation2 + $0x708] sm:$0xff] %vm713, %v2398
      %2441 = vst.msk [vmem:[#allocation2 + $0x730] sm:$0xff] %vm713, %v2400
      %2442 = vst.msk [vmem:[#allocation2 + $0x758] sm:$0xff] %vm713, %v2402
      %2443 = vst.msk [vmem:[#allocation2 + $0x780] sm:$0xff] %vm713, %v2404
      %2444 = vst.msk [vmem:[#allocation2 + $0x7a8] sm:$0xff] %vm713, %v2406
      %2445 = vst.msk [vmem:[#allocation2 + $0x7d0] sm:$0xff] %vm713, %v2408
      %2446 = vst.msk [vmem:[#allocation2 + $0x7f8] sm:$0xff] %vm713, %v2410
      %2447 = vst.msk [vmem:[#allocation2 + $0x820] sm:$0xff] %vm713, %v2412
      %2448 = vst.msk [vmem:[#allocation2 + $0x848] sm:$0x3] %vm729, %v2414
      %v2449 = vrot.slane %v2253, 7
      %v2450 = vrot.slane %v2254, 7
      %v2451 = vsel %vm731, %v2449, %v2450
      %v2452 = vrot.slane %v2255, 7
      %v2453 = vsel %vm731, %v2450, %v2452
      %v2454 = vrot.slane %v2256, 7
      %v2455 = vsel %vm731, %v2452, %v2454
      %v2456 = vrot.slane %v2257, 7
      %v2457 = vsel %vm731, %v2454, %v2456
      %v2458 = vrot.slane %v2258, 7
      %v2459 = vsel %vm731, %v2456, %v2458
      %v2460 = vrot.slane %v2259, 7
      %v2461 = vsel %vm731, %v2458, %v2460
      %v2462 = vrot.slane %v2260, 7
      %v2463 = vsel %vm731, %v2460, %v2462
      %v2464 = vrot.slane %v2261, 7
      %v2465 = vsel %vm731, %v2462, %v2464
      %v2466 = vrot.slane %v2262, 7
      %v2467 = vsel %vm731, %v2464, %v2466
      %v2468 = vrot.slane %v2263, 7
      %v2469 = vsel %vm731, %v2466, %v2468
      %v2470 = vrot.slane %v2264, 7
      %v2471 = vsel %vm731, %v2468, %v2470
      %v2472 = vrot.slane %v2265, 7
      %v2473 = vsel %vm731, %v2470, %v2472
      %v2474 = vrot.slane %v2266, 7
      %v2475 = vsel %vm731, %v2472, %v2474
      %v2476 = vrot.slane %v2267, 7
      %v2477 = vsel %vm731, %v2474, %v2476
      %v2478 = vrot.slane %v2268, 7
      %v2479 = vsel %vm731, %v2476, %v2478
      %2497 = vst.msk [vmem:[#allocation2 + $0x5d0] sm:$0xfe] %vm780, %v2449
      %2498 = vst.msk [vmem:[#allocation2 + $0x5f8] sm:$0xff] %vm256, %v2451
      %2499 = vst.msk [vmem:[#allocation2 + $0x620] sm:$0xff] %vm256, %v2453
      %2500 = vst.msk [vmem:[#allocation2 + $0x648] sm:$0xff] %vm256, %v2455
      %2501 = vst.msk [vmem:[#allocation2 + $0x670] sm:$0xff] %vm256, %v2457
      %2502 = vst.msk [vmem:[#allocation2 + $0x698] sm:$0xff] %vm256, %v2459
      %2503 = vst.msk [vmem:[#allocation2 + $0x6c0] sm:$0xff] %vm256, %v2461
      %2504 = vst.msk [vmem:[#allocation2 + $0x6e8] sm:$0xff] %vm256, %v2463
      %2505 = vst.msk [vmem:[#allocation2 + $0x710] sm:$0xff] %vm256, %v2465
      %2506 = vst.msk [vmem:[#allocation2 + $0x738] sm:$0xff] %vm256, %v2467
      %2507 = vst.msk [vmem:[#allocation2 + $0x760] sm:$0xff] %vm256, %v2469
      %2508 = vst.msk [vmem:[#allocation2 + $0x788] sm:$0xff] %vm256, %v2471
      %2509 = vst.msk [vmem:[#allocation2 + $0x7b0] sm:$0xff] %vm256, %v2473
      %2510 = vst.msk [vmem:[#allocation2 + $0x7d8] sm:$0xff] %vm256, %v2475
      %2511 = vst.msk [vmem:[#allocation2 + $0x800] sm:$0xff] %vm256, %v2477
      %2512 = vst.msk [vmem:[#allocation2 + $0x828] sm:$0xff] %vm256, %v2479
      %2513 = vst.msk [vmem:[#allocation2 + $0x850] sm:$0x1] %vm797, %v2478
      %2514 = vrot.lane.b32.xlu0 %v2449, 64
      %v2515 = vpop.permute.xlu0 %2514
      %2516 = vrot.lane.b32.xlu0 %v2451, 64
      %v2517 = vpop.permute.xlu0 %2516
      %2518 = vrot.lane.b32.xlu0 %v2453, 64
      %v2519 = vpop.permute.xlu0 %2518
      %2520 = vrot.lane.b32.xlu0 %v2455, 64
      %v2521 = vpop.permute.xlu0 %2520
      %2522 = vrot.lane.b32.xlu0 %v2457, 64
      %v2523 = vpop.permute.xlu0 %2522
      %2524 = vrot.lane.b32.xlu0 %v2459, 64
      %v2525 = vpop.permute.xlu0 %2524
      %2526 = vrot.lane.b32.xlu0 %v2461, 64
      %v2527 = vpop.permute.xlu0 %2526
      %2528 = vrot.lane.b32.xlu0 %v2463, 64
      %v2529 = vpop.permute.xlu0 %2528
      %2530 = vrot.lane.b32.xlu0 %v2465, 64
      %v2531 = vpop.permute.xlu0 %2530
      %2532 = vrot.lane.b32.xlu0 %v2467, 64
      %v2533 = vpop.permute.xlu0 %2532
      %2534 = vrot.lane.b32.xlu0 %v2469, 64
      %v2535 = vpop.permute.xlu0 %2534
      %2536 = vrot.lane.b32.xlu0 %v2471, 64
      %v2537 = vpop.permute.xlu0 %2536
      %2538 = vrot.lane.b32.xlu0 %v2473, 64
      %v2539 = vpop.permute.xlu0 %2538
      %2540 = vrot.lane.b32.xlu0 %v2475, 64
      %v2541 = vpop.permute.xlu0 %2540
      %2542 = vrot.lane.b32.xlu0 %v2477, 64
      %v2543 = vpop.permute.xlu0 %2542
      %2544 = vrot.lane.b32.xlu0 %v2479, 64
      %v2545 = vpop.permute.xlu0 %2544
      %2546 = vrot.lane.b32.xlu0 %v2478, 64
      %v2547 = vpop.permute.xlu0 %2546
      %2565 = vst.msk [vmem:[#allocation2 + $0x580] sm:$0xfe] %vm850, %v2515
      %2566 = vst.msk [vmem:[#allocation2 + $0x5a8] sm:$0xff] %vm713, %v2517
      %2567 = vst.msk [vmem:[#allocation2 + $0x5d0] sm:$0xff] %vm713, %v2519
      %2568 = vst.msk [vmem:[#allocation2 + $0x5f8] sm:$0xff] %vm713, %v2521
      %2569 = vst.msk [vmem:[#allocation2 + $0x620] sm:$0xff] %vm713, %v2523
      %2570 = vst.msk [vmem:[#allocation2 + $0x648] sm:$0xff] %vm713, %v2525
      %2571 = vst.msk [vmem:[#allocation2 + $0x670] sm:$0xff] %vm713, %v2527
      %2572 = vst.msk [vmem:[#allocation2 + $0x698] sm:$0xff] %vm713, %v2529
      %2573 = vst.msk [vmem:[#allocation2 + $0x6c0] sm:$0xff] %vm713, %v2531
      %2574 = vst.msk [vmem:[#allocation2 + $0x6e8] sm:$0xff] %vm713, %v2533
      %2575 = vst.msk [vmem:[#allocation2 + $0x710] sm:$0xff] %vm713, %v2535
      %2576 = vst.msk [vmem:[#allocation2 + $0x738] sm:$0xff] %vm713, %v2537
      %2577 = vst.msk [vmem:[#allocation2 + $0x760] sm:$0xff] %vm713, %v2539
      %2578 = vst.msk [vmem:[#allocation2 + $0x788] sm:$0xff] %vm713, %v2541
      %2579 = vst.msk [vmem:[#allocation2 + $0x7b0] sm:$0xff] %vm713, %v2543
      %2580 = vst.msk [vmem:[#allocation2 + $0x7d8] sm:$0xff] %vm713, %v2545
      %2581 = vst.msk [vmem:[#allocation2 + $0x800] sm:$0x1] %vm867, %v2547
      %2582 = vst.msk [vmem:[#allocation2 + $0x588] sm:$0xff] %vm256, %v2253
      %2583 = vst.msk [vmem:[#allocation2 + $0x5b0] sm:$0xff] %vm256, %v2254
      %2584 = vst.msk [vmem:[#allocation2 + $0x5d8] sm:$0xff] %vm256, %v2255
      %2585 = vst.msk [vmem:[#allocation2 + $0x600] sm:$0xff] %vm256, %v2256
      %2586 = vst.msk [vmem:[#allocation2 + $0x628] sm:$0xff] %vm256, %v2257
      %2587 = vst.msk [vmem:[#allocation2 + $0x650] sm:$0xff] %vm256, %v2258
      %2588 = vst.msk [vmem:[#allocation2 + $0x678] sm:$0xff] %vm256, %v2259
      %2589 = vst.msk [vmem:[#allocation2 + $0x6a0] sm:$0xff] %vm256, %v2260
      %2590 = vst.msk [vmem:[#allocation2 + $0x6c8] sm:$0xff] %vm256, %v2261
      %2591 = vst.msk [vmem:[#allocation2 + $0x6f0] sm:$0xff] %vm256, %v2262
      %2592 = vst.msk [vmem:[#allocation2 + $0x718] sm:$0xff] %vm256, %v2263
      %2593 = vst.msk [vmem:[#allocation2 + $0x740] sm:$0xff] %vm256, %v2264
      %2594 = vst.msk [vmem:[#allocation2 + $0x768] sm:$0xff] %vm256, %v2265
      %2595 = vst.msk [vmem:[#allocation2 + $0x790] sm:$0xff] %vm256, %v2266
      %2596 = vst.msk [vmem:[#allocation2 + $0x7b8] sm:$0xff] %vm256, %v2267
      %2597 = vst.msk [vmem:[#allocation2 + $0x7e0] sm:$0xff] %vm256, %v2268
      %v2598 = vrot.slane %v2253, 1
      %v2599 = vrot.slane %v2254, 1
      %v2600 = vsel %vm885, %v2598, %v2599
      %v2601 = vrot.slane %v2255, 1
      %v2602 = vsel %vm885, %v2599, %v2601
      %v2603 = vrot.slane %v2256, 1
      %v2604 = vsel %vm885, %v2601, %v2603
      %v2605 = vrot.slane %v2257, 1
      %v2606 = vsel %vm885, %v2603, %v2605
      %v2607 = vrot.slane %v2258, 1
      %v2608 = vsel %vm885, %v2605, %v2607
      %v2609 = vrot.slane %v2259, 1
      %v2610 = vsel %vm885, %v2607, %v2609
      %v2611 = vrot.slane %v2260, 1
      %v2612 = vsel %vm885, %v2609, %v2611
      %v2613 = vrot.slane %v2261, 1
      %v2614 = vsel %vm885, %v2611, %v2613
      %v2615 = vrot.slane %v2262, 1
      %v2616 = vsel %vm885, %v2613, %v2615
      %v2617 = vrot.slane %v2263, 1
      %v2618 = vsel %vm885, %v2615, %v2617
      %v2619 = vrot.slane %v2264, 1
      %v2620 = vsel %vm885, %v2617, %v2619
      %v2621 = vrot.slane %v2265, 1
      %v2622 = vsel %vm885, %v2619, %v2621
      %v2623 = vrot.slane %v2266, 1
      %v2624 = vsel %vm885, %v2621, %v2623
      %v2625 = vrot.slane %v2267, 1
      %v2626 = vsel %vm885, %v2623, %v2625
      %v2627 = vrot.slane %v2268, 1
      %v2628 = vsel %vm885, %v2625, %v2627
      %2629 = vrot.lane.b32.xlu0 %v2598, 64
      %v2630 = vpop.permute.xlu0 %2629
      %2631 = vrot.lane.b32.xlu0 %v2600, 64
      %v2632 = vpop.permute.xlu0 %2631
      %2633 = vrot.lane.b32.xlu0 %v2602, 64
      %v2634 = vpop.permute.xlu0 %2633
      %2635 = vrot.lane.b32.xlu0 %v2604, 64
      %v2636 = vpop.permute.xlu0 %2635
      %2637 = vrot.lane.b32.xlu0 %v2606, 64
      %v2638 = vpop.permute.xlu0 %2637
      %2639 = vrot.lane.b32.xlu0 %v2608, 64
      %v2640 = vpop.permute.xlu0 %2639
      %2641 = vrot.lane.b32.xlu0 %v2610, 64
      %v2642 = vpop.permute.xlu0 %2641
      %2643 = vrot.lane.b32.xlu0 %v2612, 64
      %v2644 = vpop.permute.xlu0 %2643
      %2645 = vrot.lane.b32.xlu0 %v2614, 64
      %v2646 = vpop.permute.xlu0 %2645
      %2647 = vrot.lane.b32.xlu0 %v2616, 64
      %v2648 = vpop.permute.xlu0 %2647
      %2649 = vrot.lane.b32.xlu0 %v2618, 64
      %v2650 = vpop.permute.xlu0 %2649
      %2651 = vrot.lane.b32.xlu0 %v2620, 64
      %v2652 = vpop.permute.xlu0 %2651
      %2653 = vrot.lane.b32.xlu0 %v2622, 64
      %v2654 = vpop.permute.xlu0 %2653
      %2655 = vrot.lane.b32.xlu0 %v2624, 64
      %v2656 = vpop.permute.xlu0 %2655
      %2657 = vrot.lane.b32.xlu0 %v2626, 64
      %v2658 = vpop.permute.xlu0 %2657
      %2659 = vrot.lane.b32.xlu0 %v2628, 64
      %v2660 = vpop.permute.xlu0 %2659
      %2661 = vrot.lane.b32.xlu0 %v2627, 64
      %v2662 = vpop.permute.xlu0 %2661
      %2680 = vst.msk [vmem:[#allocation2 + $0x560] sm:$0x80] %vm968, %v2630
      %2681 = vst.msk [vmem:[#allocation2 + $0x588] sm:$0xff] %vm713, %v2632
      %2682 = vst.msk [vmem:[#allocation2 + $0x5b0] sm:$0xff] %vm713, %v2634
      %2683 = vst.msk [vmem:[#allocation2 + $0x5d8] sm:$0xff] %vm713, %v2636
      %2684 = vst.msk [vmem:[#allocation2 + $0x600] sm:$0xff] %vm713, %v2638
      %2685 = vst.msk [vmem:[#allocation2 + $0x628] sm:$0xff] %vm713, %v2640
      %2686 = vst.msk [vmem:[#allocation2 + $0x650] sm:$0xff] %vm713, %v2642
      %2687 = vst.msk [vmem:[#allocation2 + $0x678] sm:$0xff] %vm713, %v2644
      %2688 = vst.msk [vmem:[#allocation2 + $0x6a0] sm:$0xff] %vm713, %v2646
      %2689 = vst.msk [vmem:[#allocation2 + $0x6c8] sm:$0xff] %vm713, %v2648
      %2690 = vst.msk [vmem:[#allocation2 + $0x6f0] sm:$0xff] %vm713, %v2650
      %2691 = vst.msk [vmem:[#allocation2 + $0x718] sm:$0xff] %vm713, %v2652
      %2692 = vst.msk [vmem:[#allocation2 + $0x740] sm:$0xff] %vm713, %v2654
      %2693 = vst.msk [vmem:[#allocation2 + $0x768] sm:$0xff] %vm713, %v2656
      %2694 = vst.msk [vmem:[#allocation2 + $0x790] sm:$0xff] %vm713, %v2658
      %2695 = vst.msk [vmem:[#allocation2 + $0x7b8] sm:$0xff] %vm713, %v2660
      %2696 = vst.msk [vmem:[#allocation2 + $0x7e0] sm:$0x7f] %vm985, %v2662
      %2714 = vst.msk [vmem:[#allocation2 + $0x518] sm:$0x80] %vm1004, %v2598
      %2715 = vst.msk [vmem:[#allocation2 + $0x540] sm:$0xff] %vm256, %v2600
      %2716 = vst.msk [vmem:[#allocation2 + $0x568] sm:$0xff] %vm256, %v2602
      %2717 = vst.msk [vmem:[#allocation2 + $0x590] sm:$0xff] %vm256, %v2604
      %2718 = vst.msk [vmem:[#allocation2 + $0x5b8] sm:$0xff] %vm256, %v2606
      %2719 = vst.msk [vmem:[#allocation2 + $0x5e0] sm:$0xff] %vm256, %v2608
      %2720 = vst.msk [vmem:[#allocation2 + $0x608] sm:$0xff] %vm256, %v2610
      %2721 = vst.msk [vmem:[#allocation2 + $0x630] sm:$0xff] %vm256, %v2612
      %2722 = vst.msk [vmem:[#allocation2 + $0x658] sm:$0xff] %vm256, %v2614
      %2723 = vst.msk [vmem:[#allocation2 + $0x680] sm:$0xff] %vm256, %v2616
      %2724 = vst.msk [vmem:[#allocation2 + $0x6a8] sm:$0xff] %vm256, %v2618
      %2725 = vst.msk [vmem:[#allocation2 + $0x6d0] sm:$0xff] %vm256, %v2620
      %2726 = vst.msk [vmem:[#allocation2 + $0x6f8] sm:$0xff] %vm256, %v2622
      %2727 = vst.msk [vmem:[#allocation2 + $0x720] sm:$0xff] %vm256, %v2624
      %2728 = vst.msk [vmem:[#allocation2 + $0x748] sm:$0xff] %vm256, %v2626
      %2729 = vst.msk [vmem:[#allocation2 + $0x770] sm:$0xff] %vm256, %v2628
      %2730 = vst.msk [vmem:[#allocation2 + $0x798] sm:$0x7f] %vm1021, %v2627
      %v2731 = vrot.slane %v2253, 2
      %v2732 = vrot.slane %v2254, 2
      %v2733 = vsel %vm1023, %v2731, %v2732
      %v2734 = vrot.slane %v2255, 2
      %v2735 = vsel %vm1023, %v2732, %v2734
      %v2736 = vrot.slane %v2256, 2
      %v2737 = vsel %vm1023, %v2734, %v2736
      %v2738 = vrot.slane %v2257, 2
      %v2739 = vsel %vm1023, %v2736, %v2738
      %v2740 = vrot.slane %v2258, 2
      %v2741 = vsel %vm1023, %v2738, %v2740
      %v2742 = vrot.slane %v2259, 2
      %v2743 = vsel %vm1023, %v2740, %v2742
      %v2744 = vrot.slane %v2260, 2
      %v2745 = vsel %vm1023, %v2742, %v2744
      %v2746 = vrot.slane %v2261, 2
      %v2747 = vsel %vm1023, %v2744, %v2746
      %v2748 = vrot.slane %v2262, 2
      %v2749 = vsel %vm1023, %v2746, %v2748
      %v2750 = vrot.slane %v2263, 2
      %v2751 = vsel %vm1023, %v2748, %v2750
      %v2752 = vrot.slane %v2264, 2
      %v2753 = vsel %vm1023, %v2750, %v2752
      %v2754 = vrot.slane %v2265, 2
      %v2755 = vsel %vm1023, %v2752, %v2754
      %v2756 = vrot.slane %v2266, 2
      %v2757 = vsel %vm1023, %v2754, %v2756
      %v2758 = vrot.slane %v2267, 2
      %v2759 = vsel %vm1023, %v2756, %v2758
      %v2760 = vrot.slane %v2268, 2
      %v2761 = vsel %vm1023, %v2758, %v2760
      %2762 = vrot.lane.b32.xlu0 %v2731, 64
      %v2763 = vpop.permute.xlu0 %2762
      %2764 = vrot.lane.b32.xlu0 %v2733, 64
      %v2765 = vpop.permute.xlu0 %2764
      %2766 = vrot.lane.b32.xlu0 %v2735, 64
      %v2767 = vpop.permute.xlu0 %2766
      %2768 = vrot.lane.b32.xlu0 %v2737, 64
      %v2769 = vpop.permute.xlu0 %2768
      %2770 = vrot.lane.b32.xlu0 %v2739, 64
      %v2771 = vpop.permute.xlu0 %2770
      %2772 = vrot.lane.b32.xlu0 %v2741, 64
      %v2773 = vpop.permute.xlu0 %2772
      %2774 = vrot.lane.b32.xlu0 %v2743, 64
      %v2775 = vpop.permute.xlu0 %2774
      %2776 = vrot.lane.b32.xlu0 %v2745, 64
      %v2777 = vpop.permute.xlu0 %2776
      %2778 = vrot.lane.b32.xlu0 %v2747, 64
      %v2779 = vpop.permute.xlu0 %2778
      %2780 = vrot.lane.b32.xlu0 %v2749, 64
      %v2781 = vpop.permute.xlu0 %2780
      %2782 = vrot.lane.b32.xlu0 %v2751, 64
      %v2783 = vpop.permute.xlu0 %2782
      %2784 = vrot.lane.b32.xlu0 %v2753, 64
      %v2785 = vpop.permute.xlu0 %2784
      %2786 = vrot.lane.b32.xlu0 %v2755, 64
      %v2787 = vpop.permute.xlu0 %2786
      %2788 = vrot.lane.b32.xlu0 %v2757, 64
      %v2789 = vpop.permute.xlu0 %2788
      %2790 = vrot.lane.b32.xlu0 %v2759, 64
      %v2791 = vpop.permute.xlu0 %2790
      %2792 = vrot.lane.b32.xlu0 %v2761, 64
      %v2793 = vpop.permute.xlu0 %2792
      %2794 = vrot.lane.b32.xlu0 %v2760, 64
      %v2795 = vpop.permute.xlu0 %2794
      %2813 = vst.msk [vmem:[#allocation2 + $0x518] sm:$0xc0] %vm1106, %v2763
      %2814 = vst.msk [vmem:[#allocation2 + $0x540] sm:$0xff] %vm713, %v2765
      %2815 = vst.msk [vmem:[#allocation2 + $0x568] sm:$0xff] %vm713, %v2767
      %2816 = vst.msk [vmem:[#allocation2 + $0x590] sm:$0xff] %vm713, %v2769
      %2817 = vst.msk [vmem:[#allocation2 + $0x5b8] sm:$0xff] %vm713, %v2771
      %2818 = vst.msk [vmem:[#allocation2 + $0x5e0] sm:$0xff] %vm713, %v2773
      %2819 = vst.msk [vmem:[#allocation2 + $0x608] sm:$0xff] %vm713, %v2775
      %2820 = vst.msk [vmem:[#allocation2 + $0x630] sm:$0xff] %vm713, %v2777
      %2821 = vst.msk [vmem:[#allocation2 + $0x658] sm:$0xff] %vm713, %v2779
      %2822 = vst.msk [vmem:[#allocation2 + $0x680] sm:$0xff] %vm713, %v2781
      %2823 = vst.msk [vmem:[#allocation2 + $0x6a8] sm:$0xff] %vm713, %v2783
      %2824 = vst.msk [vmem:[#allocation2 + $0x6d0] sm:$0xff] %vm713, %v2785
      %2825 = vst.msk [vmem:[#allocation2 + $0x6f8] sm:$0xff] %vm713, %v2787
      %2826 = vst.msk [vmem:[#allocation2 + $0x720] sm:$0xff] %vm713, %v2789
      %2827 = vst.msk [vmem:[#allocation2 + $0x748] sm:$0xff] %vm713, %v2791
      %2828 = vst.msk [vmem:[#allocation2 + $0x770] sm:$0xff] %vm713, %v2793
      %2829 = vst.msk [vmem:[#allocation2 + $0x798] sm:$0x3f] %vm1123, %v2795
      %v2830 = vrot.slane %v2253, 3
      %v2831 = vrot.slane %v2254, 3
      %v2832 = vsel %vm1125, %v2830, %v2831
      %v2833 = vrot.slane %v2255, 3
      %v2834 = vsel %vm1125, %v2831, %v2833
      %v2835 = vrot.slane %v2256, 3
      %v2836 = vsel %vm1125, %v2833, %v2835
      %v2837 = vrot.slane %v2257, 3
      %v2838 = vsel %vm1125, %v2835, %v2837
      %v2839 = vrot.slane %v2258, 3
      %v2840 = vsel %vm1125, %v2837, %v2839
      %v2841 = vrot.slane %v2259, 3
      %v2842 = vsel %vm1125, %v2839, %v2841
      %v2843 = vrot.slane %v2260, 3
      %v2844 = vsel %vm1125, %v2841, %v2843
      %v2845 = vrot.slane %v2261, 3
      %v2846 = vsel %vm1125, %v2843, %v2845
      %v2847 = vrot.slane %v2262, 3
      %v2848 = vsel %vm1125, %v2845, %v2847
      %v2849 = vrot.slane %v2263, 3
      %v2850 = vsel %vm1125, %v2847, %v2849
      %v2851 = vrot.slane %v2264, 3
      %v2852 = vsel %vm1125, %v2849, %v2851
      %v2853 = vrot.slane %v2265, 3
      %v2854 = vsel %vm1125, %v2851, %v2853
      %v2855 = vrot.slane %v2266, 3
      %v2856 = vsel %vm1125, %v2853, %v2855
      %v2857 = vrot.slane %v2267, 3
      %v2858 = vsel %vm1125, %v2855, %v2857
      %v2859 = vrot.slane %v2268, 3
      %v2860 = vsel %vm1125, %v2857, %v2859
      %2878 = vst.msk [vmem:[#allocation2 + $0x520] sm:$0xe0] %vm1174, %v2830
      %2879 = vst.msk [vmem:[#allocation2 + $0x548] sm:$0xff] %vm256, %v2832
      %2880 = vst.msk [vmem:[#allocation2 + $0x570] sm:$0xff] %vm256, %v2834
      %2881 = vst.msk [vmem:[#allocation2 + $0x598] sm:$0xff] %vm256, %v2836
      %2882 = vst.msk [vmem:[#allocation2 + $0x5c0] sm:$0xff] %vm256, %v2838
      %2883 = vst.msk [vmem:[#allocation2 + $0x5e8] sm:$0xff] %vm256, %v2840
      %2884 = vst.msk [vmem:[#allocation2 + $0x610] sm:$0xff] %vm256, %v2842
      %2885 = vst.msk [vmem:[#allocation2 + $0x638] sm:$0xff] %vm256, %v2844
      %2886 = vst.msk [vmem:[#allocation2 + $0x660] sm:$0xff] %vm256, %v2846
      %2887 = vst.msk [vmem:[#allocation2 + $0x688] sm:$0xff] %vm256, %v2848
      %2888 = vst.msk [vmem:[#allocation2 + $0x6b0] sm:$0xff] %vm256, %v2850
      %2889 = vst.msk [vmem:[#allocation2 + $0x6d8] sm:$0xff] %vm256, %v2852
      %2890 = vst.msk [vmem:[#allocation2 + $0x700] sm:$0xff] %vm256, %v2854
      %2891 = vst.msk [vmem:[#allocation2 + $0x728] sm:$0xff] %vm256, %v2856
      %2892 = vst.msk [vmem:[#allocation2 + $0x750] sm:$0xff] %vm256, %v2858
      %2893 = vst.msk [vmem:[#allocation2 + $0x778] sm:$0xff] %vm256, %v2860
      %2894 = vst.msk [vmem:[#allocation2 + $0x7a0] sm:$0x1f] %vm1191, %v2859
      %v2895 = vld [vmem:[%s3] sm:$0x1]
      %v2896 = vld [vmem:[%s4] sm:$0xff]
      %v2897 = vld [vmem:[%s4 + $0x8] sm:$0xff]
      %v2898 = vld [vmem:[%s4 + $0x10] sm:$0xff]
      %v2899 = vld [vmem:[%s4 + $0x18] sm:$0xff]
      %v2900 = vld [vmem:[%s4 + $0x20] sm:$0xff]
      %v2901 = vld [vmem:[%s4 + $0x28] sm:$0xff]
      %v2902 = vld [vmem:[%s4 + $0x30] sm:$0xff]
      %v2903 = vld [vmem:[%s4 + $0x38] sm:$0xff]
      %v2904 = vld [vmem:[%s5] sm:$0x1]
      %v2905 = vld [vmem:[#allocation2 + $0x78] sm:$0xff]
      %v2906 = vld [vmem:[#allocation2 + $0x80] sm:$0xff]
      %v2907 = vld [vmem:[#allocation2 + $0x88] sm:$0xff]
      %v2908 = vld [vmem:[#allocation2 + $0x90] sm:$0xff]
      %v2909 = vld [vmem:[#allocation2 + $0x98] sm:$0xff]
      %v2910 = vld [vmem:[#allocation2 + $0xa0] sm:$0xff]
      %v2911 = vld [vmem:[#allocation2 + $0xa8] sm:$0xff]
      %v2912 = vld [vmem:[#allocation2 + $0xb0] sm:$0xff]
      %v2913 = vld [vmem:[#allocation2 + $0xb8] sm:$0xff]
      %v2914 = vld [vmem:[#allocation2 + $0xc0] sm:$0xff]
      %v2915 = vld [vmem:[#allocation2 + $0xc8] sm:$0xff]
      %v2916 = vld [vmem:[#allocation2 + $0xd0] sm:$0xff]
      %v2917 = vld [vmem:[#allocation2 + $0xd8] sm:$0xff]
      %v2918 = vld [vmem:[#allocation2 + $0xe0] sm:$0xff]
      %v2919 = vld [vmem:[#allocation2 + $0xe8] sm:$0xff]
      %v2920 = vld [vmem:[#allocation2 + $0xf0] sm:$0xff]
      %v2921 = vld [vmem:[#allocation2 + $0xf8] sm:$0xff]
      %v2922 = vld [vmem:[#allocation2 + $0x100] sm:$0xff]
      %v2923 = vld [vmem:[#allocation2 + $0x108] sm:$0xff]
      %v2924 = vld [vmem:[#allocation2 + $0x110] sm:$0xff]
      %v2925 = vld [vmem:[#allocation2 + $0x118] sm:$0xff]
      %v2926 = vld [vmem:[#allocation2 + $0x120] sm:$0xff]
      %v2927 = vld [vmem:[#allocation2 + $0x128] sm:$0xff]
      %v2928 = vld [vmem:[#allocation2 + $0x130] sm:$0xff]
      %v2929 = vld [vmem:[#allocation2 + $0x138] sm:$0xff]
      %v2930 = vld [vmem:[#allocation2 + $0x140] sm:$0xff]
      %v2931 = vld [vmem:[#allocation2 + $0x148] sm:$0xff]
      %v2932 = vld [vmem:[#allocation2 + $0x150] sm:$0xff]
      %v2933 = vld [vmem:[#allocation2 + $0x158] sm:$0xff]
      %v2934 = vld [vmem:[#allocation2 + $0x160] sm:$0xff]
      %v2935 = vld [vmem:[#allocation2 + $0x168] sm:$0xff]
      %v2936 = vld [vmem:[#allocation2 + $0x170] sm:$0xff]
      %v2937 = vld [vmem:[#allocation2 + $0x178] sm:$0xff]
      %v2938 = vld [vmem:[#allocation2 + $0x180] sm:$0xff]
      %v2939 = vld [vmem:[#allocation2 + $0x188] sm:$0xff]
      %v2940 = vld [vmem:[#allocation2 + $0x190] sm:$0xff]
      %v2941 = vld [vmem:[#allocation2 + $0x198] sm:$0xff]
      %v2942 = vld [vmem:[#allocation2 + $0x1a0] sm:$0xff]
      %v2943 = vld [vmem:[#allocation2 + $0x1a8] sm:$0xff]
      %v2944 = vld [vmem:[#allocation2 + $0x1b0] sm:$0xff]
      %v2945 = vld [vmem:[#allocation2 + $0x1b8] sm:$0xff]
      %v2946 = vld [vmem:[#allocation2 + $0x1c0] sm:$0xff]
      %v2947 = vld [vmem:[#allocation2 + $0x1c8] sm:$0xff]
      %v2948 = vld [vmem:[#allocation2 + $0x1d0] sm:$0xff]
      %v2949 = vld [vmem:[#allocation2 + $0x1d8] sm:$0xff]
      %v2950 = vld [vmem:[#allocation2 + $0x1e0] sm:$0xff]
      %v2951 = vld [vmem:[#allocation2 + $0x1e8] sm:$0xff]
      %v2952 = vld [vmem:[#allocation2 + $0x1f0] sm:$0xff]
      %v2953 = vld [vmem:[#allocation2 + $0x1f8] sm:$0xff]
      %v2954 = vld [vmem:[#allocation2 + $0x200] sm:$0xff]
      %v2955 = vld [vmem:[#allocation2 + $0x208] sm:$0xff]
      %v2956 = vld [vmem:[#allocation2 + $0x210] sm:$0xff]
      %v2957 = vld [vmem:[#allocation2 + $0x218] sm:$0xff]
      %v2958 = vld [vmem:[#allocation2 + $0x220] sm:$0xff]
      %v2959 = vld [vmem:[#allocation2 + $0x228] sm:$0xff]
      %v2960 = vld [vmem:[#allocation2 + $0x230] sm:$0xff]
      %v2961 = vld [vmem:[#allocation2 + $0x238] sm:$0xff]
      %v2962 = vld [vmem:[#allocation2 + $0x240] sm:$0xff]
      %v2963 = vld [vmem:[#allocation2 + $0x248] sm:$0xff]
      %v2964 = vld [vmem:[#allocation2 + $0x250] sm:$0xff]
      %v2965 = vld [vmem:[#allocation2 + $0x258] sm:$0xff]
      %v2966 = vld [vmem:[#allocation2 + $0x260] sm:$0xff]
      %v2967 = vld [vmem:[#allocation2 + $0x268] sm:$0xff]
      %v2968 = vld [vmem:[#allocation2 + $0x270] sm:$0xff]
      %v2969 = vld [vmem:[#allocation2 + $0x278] sm:$0xff]
      %v2970 = vld [vmem:[#allocation2 + $0x280] sm:$0xff]
      %v2971 = vld [vmem:[#allocation2 + $0x288] sm:$0xff]
      %v2972 = vld [vmem:[#allocation2 + $0x290] sm:$0xff]
      %v2973 = vld [vmem:[#allocation2 + $0x298] sm:$0xff]
      %v2974 = vld [vmem:[#allocation2 + $0x2a0] sm:$0xff]
      %v2975 = vld [vmem:[#allocation2 + $0x2a8] sm:$0xff]
      %v2976 = vld [vmem:[#allocation2 + $0x2b0] sm:$0xff]
      %v2977 = vld [vmem:[#allocation2 + $0x2b8] sm:$0xff]
      %v2978 = vld [vmem:[#allocation2 + $0x2c0] sm:$0xff]
      %v2979 = vld [vmem:[#allocation2 + $0x2c8] sm:$0xff]
      %v2980 = vld [vmem:[#allocation2 + $0x2d0] sm:$0xff]
      %v2981 = vld [vmem:[#allocation2 + $0x2d8] sm:$0xff]
      %v2982 = vld [vmem:[#allocation2 + $0x2e0] sm:$0xff]
      %v2983 = vld [vmem:[#allocation2 + $0x2e8] sm:$0xff]
      %v2984 = vld [vmem:[#allocation2 + $0x2f0] sm:$0xff]
      %v2985 = vld [vmem:[%s2] sm:$0xff]
      %v2986 = vld [vmem:[%s2 + $0x8] sm:$0xff]
      %v2987 = vld [vmem:[%s2 + $0x10] sm:$0xff]
      %v2988 = vld [vmem:[%s2 + $0x18] sm:$0xff]
      %v2989 = vld [vmem:[%s2 + $0x20] sm:$0xff]
      %v2990 = vld [vmem:[%s2 + $0x28] sm:$0xff]
      %v2991 = vld [vmem:[%s2 + $0x30] sm:$0xff]
      %v2992 = vld [vmem:[%s2 + $0x38] sm:$0xff]
      %v2993 = vld [vmem:[%s2 + $0x40] sm:$0xff]
      %v2994 = vld [vmem:[%s2 + $0x48] sm:$0xff]
      %v2995 = vld [vmem:[%s2 + $0x50] sm:$0xff]
      %v2996 = vld [vmem:[%s2 + $0x58] sm:$0xff]
      %v2997 = vld [vmem:[%s2 + $0x60] sm:$0xff]
      %v2998 = vld [vmem:[%s2 + $0x68] sm:$0xff]
      %v2999 = vld [vmem:[%s2 + $0x70] sm:$0xff]
      %v3000 = vld [vmem:[%s2 + $0x78] sm:$0xff]
      %v3001 = vld [vmem:[%s2 + $0x80] sm:$0xff]
      %v3002 = vld [vmem:[%s2 + $0x88] sm:$0xff]
      %v3003 = vld [vmem:[%s2 + $0x90] sm:$0xff]
      %v3004 = vld [vmem:[%s2 + $0x98] sm:$0xff]
      %v3005 = vld [vmem:[%s2 + $0xa0] sm:$0xff]
      %v3006 = vld [vmem:[%s2 + $0xa8] sm:$0xff]
      %v3007 = vld [vmem:[%s2 + $0xb0] sm:$0xff]
      %v3008 = vld [vmem:[%s2 + $0xb8] sm:$0xff]
      %v3009 = vld [vmem:[%s2 + $0xc0] sm:$0xff]
      %v3010 = vld [vmem:[%s2 + $0xc8] sm:$0xff]
      %v3011 = vld [vmem:[%s2 + $0xd0] sm:$0xff]
      %v3012 = vld [vmem:[%s2 + $0xd8] sm:$0xff]
      %v3013 = vld [vmem:[%s2 + $0xe0] sm:$0xff]
      %v3014 = vld [vmem:[%s2 + $0xe8] sm:$0xff]
      %v3015 = vld [vmem:[%s2 + $0xf0] sm:$0xff]
      %v3016 = vld [vmem:[%s2 + $0xf8] sm:$0xff]
      %v3017 = vld [vmem:[%s2 + $0x100] sm:$0xff]
      %v3018 = vld [vmem:[%s2 + $0x108] sm:$0xff]
      %v3019 = vld [vmem:[%s2 + $0x110] sm:$0xff]
      %v3020 = vld [vmem:[%s2 + $0x118] sm:$0xff]
      %v3021 = vld [vmem:[%s2 + $0x120] sm:$0xff]
      %v3022 = vld [vmem:[%s2 + $0x128] sm:$0xff]
      %v3023 = vld [vmem:[%s2 + $0x130] sm:$0xff]
      %v3024 = vld [vmem:[%s2 + $0x138] sm:$0xff]
      %v3025 = vld [vmem:[%s2 + $0x140] sm:$0xff]
      %v3026 = vld [vmem:[%s2 + $0x148] sm:$0xff]
      %v3027 = vld [vmem:[%s2 + $0x150] sm:$0xff]
      %v3028 = vld [vmem:[%s2 + $0x158] sm:$0xff]
      %v3029 = vld [vmem:[%s2 + $0x160] sm:$0xff]
      %v3030 = vld [vmem:[%s2 + $0x168] sm:$0xff]
      %v3031 = vld [vmem:[%s2 + $0x170] sm:$0xff]
      %v3032 = vld [vmem:[%s2 + $0x178] sm:$0xff]
      %v3033 = vld [vmem:[%s2 + $0x180] sm:$0xff]
      %v3034 = vld [vmem:[%s2 + $0x188] sm:$0xff]
      %v3035 = vld [vmem:[%s2 + $0x190] sm:$0xff]
      %v3036 = vld [vmem:[%s2 + $0x198] sm:$0xff]
      %v3037 = vld [vmem:[%s2 + $0x1a0] sm:$0xff]
      %v3038 = vld [vmem:[%s2 + $0x1a8] sm:$0xff]
      %v3039 = vld [vmem:[%s2 + $0x1b0] sm:$0xff]
      %v3040 = vld [vmem:[%s2 + $0x1b8] sm:$0xff]
      %v3041 = vld [vmem:[%s2 + $0x1c0] sm:$0xff]
      %v3042 = vld [vmem:[%s2 + $0x1c8] sm:$0xff]
      %v3043 = vld [vmem:[%s2 + $0x1d0] sm:$0xff]
      %v3044 = vld [vmem:[%s2 + $0x1d8] sm:$0xff]
      %v3045 = vld [vmem:[%s2 + $0x1e0] sm:$0xff]
      %v3046 = vld [vmem:[%s2 + $0x1e8] sm:$0xff]
      %v3047 = vld [vmem:[%s2 + $0x1f0] sm:$0xff]
      %v3048 = vld [vmem:[%s2 + $0x1f8] sm:$0xff]
      %v3049 = vld [vmem:[%s2 + $0x200] sm:$0xff]
      %v3050 = vld [vmem:[%s2 + $0x208] sm:$0xff]
      %v3051 = vld [vmem:[%s2 + $0x210] sm:$0xff]
      %v3052 = vld [vmem:[%s2 + $0x218] sm:$0xff]
      %v3053 = vld [vmem:[%s2 + $0x220] sm:$0xff]
      %v3054 = vld [vmem:[%s2 + $0x228] sm:$0xff]
      %v3055 = vld [vmem:[%s2 + $0x230] sm:$0xff]
      %v3056 = vld [vmem:[%s2 + $0x238] sm:$0xff]
      %v3057 = vld [vmem:[%s246] sm:$0xff]
      %v3058 = vld [vmem:[%s246 + $0x8] sm:$0xff]
      %v3059 = vld [vmem:[%s246 + $0x10] sm:$0xff]
      %v3060 = vld [vmem:[%s246 + $0x18] sm:$0xff]
      %v3061 = vld [vmem:[%s246 + $0x20] sm:$0xff]
      %v3062 = vld [vmem:[%s246 + $0x28] sm:$0xff]
      %v3063 = vld [vmem:[%s246 + $0x30] sm:$0xff]
      %v3064 = vld [vmem:[%s246 + $0x38] sm:$0xff]
      %v3065 = vld [vmem:[%s246 + $0x40] sm:$0xff]
      %v3066 = vld [vmem:[%s246 + $0x48] sm:$0xff]
      %v3067 = vld [vmem:[%s246 + $0x50] sm:$0xff]
      %v3068 = vld [vmem:[%s246 + $0x58] sm:$0xff]
      %v3069 = vld [vmem:[%s246 + $0x60] sm:$0xff]
      %v3070 = vld [vmem:[%s246 + $0x68] sm:$0xff]
      %v3071 = vld [vmem:[%s246 + $0x70] sm:$0xff]
      %v3072 = vld [vmem:[%s246 + $0x78] sm:$0xff]
      %v3074 = vlaneseq
      %v3075 = vshrl.u32 %v3074, 7
      %v3076 = vsub.s32 0, %v3075
      %v3077 = vrot.slane %v2895, %v3076
      %v3080 = vsel %vm256, %v2909, 0
      %v3083 = vsel %vm256, %v2914, 0
      %v3086 = vsel %vm256, %v2919, 0
      %v3089 = vsel %vm256, %v2924, 0
      %v3092 = vsel %vm256, %v2929, 0
      %v3095 = vsel %vm256, %v2934, 0
      %v3098 = vsel %vm256, %v2939, 0
      %v3101 = vsel %vm256, %v2944, 0
      %v3104 = vsel %vm256, %v2949, 0
      %v3107 = vsel %vm256, %v2954, 0
      %v3110 = vsel %vm256, %v2959, 0
      %v3113 = vsel %vm256, %v2964, 0
      %v3116 = vsel %vm256, %v2969, 0
      %v3119 = vsel %vm256, %v2974, 0
      %v3122 = vsel %vm256, %v2979, 0
      %v3125 = vsel %vm256, %v2984, 0
      %3127 = vmatprep.subr.mxu0 0.0
      %3128 = vmatpush1.msra.mxu0 %v3000
      %3129 = vmatprep.subr.mxu0 0.0
      %3130 = vmatpush1.msra.mxu0 %v2999
      %3131 = vmatprep.subr.mxu0 0.0
      %3132 = vmatpush1.msra.mxu0 %v2998
      %3133 = vmatprep.subr.mxu0 0.0
      %3134 = vmatpush1.msra.mxu0 %v2997
      %3135 = vmatprep.subr.mxu0 0.0
      %3136 = vmatpush1.msra.mxu0 %v2996
      %3137 = vmatprep.subr.mxu0 0.0
      %3138 = vmatpush1.msra.mxu0 %v2995
      %3139 = vmatprep.subr.mxu0 0.0
      %3140 = vmatpush1.msra.mxu0 %v2994
      %3141 = vmatprep.subr.mxu0 0.0
      %3142 = vmatpush1.msra.mxu0 %v2993
      %3143 = vmatprep.subr.mxu0 0.0
      %3144 = vmatpush1.msra.mxu0 %v2992
      %3145 = vmatprep.subr.mxu0 0.0
      %3146 = vmatpush1.msra.mxu0 %v2991
      %3147 = vmatprep.subr.mxu0 0.0
      %3148 = vmatpush1.msra.mxu0 %v2990
      %3149 = vmatprep.subr.mxu0 0.0
      %3150 = vmatpush1.msra.mxu0 %v2989
      %3151 = vmatprep.subr.mxu0 0.0
      %3152 = vmatpush1.msra.mxu0 %v2988
      %3153 = vmatprep.subr.mxu0 0.0
      %3154 = vmatpush1.msra.mxu0 %v2987
      %3155 = vmatprep.subr.mxu0 0.0
      %3156 = vmatpush1.msra.mxu0 %v2986
      %3157 = vmatprep.subr.mxu0 0.0
      %3158 = vmatpush1.msra.mxu0 %v2985
      %3159 = vmatprep.subr.mxu0 0.0
      %3160 = vmatpush2.msra.mxu0 %v3016
      %3161 = vmatprep.subr.mxu0 0.0
      %3162 = vmatpush2.msra.mxu0 %v3015
      %3163 = vmatprep.subr.mxu0 0.0
      %3164 = vmatpush2.msra.mxu0 %v3014
      %3165 = vmatprep.subr.mxu0 0.0
      %3166 = vmatpush2.msra.mxu0 %v3013
      %3167 = vmatprep.subr.mxu0 0.0
      %3168 = vmatpush2.msra.mxu0 %v3012
      %3169 = vmatprep.subr.mxu0 0.0
      %3170 = vmatpush2.msra.mxu0 %v3011
      %3171 = vmatprep.subr.mxu0 0.0
      %3172 = vmatpush2.msra.mxu0 %v3010
      %3173 = vmatprep.subr.mxu0 0.0
      %3174 = vmatpush2.msra.mxu0 %v3009
      %3175 = vmatprep.subr.mxu0 0.0
      %3176 = vmatpush2.msra.mxu0 %v3008
      %3177 = vmatprep.subr.mxu0 0.0
      %3178 = vmatpush2.msra.mxu0 %v3007
      %3179 = vmatprep.subr.mxu0 0.0
      %3180 = vmatpush2.msra.mxu0 %v3006
      %3181 = vmatprep.subr.mxu0 0.0
      %3182 = vmatpush2.msra.mxu0 %v3005
      %3183 = vmatprep.subr.mxu0 0.0
      %3184 = vmatpush2.msra.mxu0 %v3004
      %3185 = vmatprep.subr.mxu0 0.0
      %3186 = vmatpush2.msra.mxu0 %v3003
      %3187 = vmatprep.subr.mxu0 0.0
      %3188 = vmatpush2.msra.mxu0 %v3002
      %3189 = vmatprep.subr.mxu0 0.0
      %3190 = vmatpush2.msra.mxu0 %v3001
      %3191 = vmatprep.mubr.f32.mxu0 %v2906
      %3192 = vmatmul.mubr.f32.gmra.mxu0 %v2905
      %v3193 = vpop.f32.mrf.mxu0
      %v3194 = vadd.f32 %v3077, %v3193
      %v3195 = vpop.f32.mrf.mxu0
      %3196 = vmatprep.mubr.f32.mxu0 %v2911
      %3197 = vmatmul.mubr.f32.gmra.mxu0 %v2910
      %v3198 = vpop.f32.mrf.mxu0
      %v3199 = vadd.f32 %v3077, %v3198
      %v3200 = vpop.f32.mrf.mxu0
      %3201 = vmatprep.mubr.f32.mxu0 %v2916
      %3202 = vmatmul.mubr.f32.gmra.mxu0 %v2915
      %v3203 = vpop.f32.mrf.mxu0
      %v3204 = vadd.f32 %v3077, %v3203
      %v3205 = vpop.f32.mrf.mxu0
      %3206 = vmatprep.mubr.f32.mxu0 %v2921
      %3207 = vmatmul.mubr.f32.gmra.mxu0 %v2920
      %v3208 = vpop.f32.mrf.mxu0
      %v3209 = vadd.f32 %v3077, %v3208
      %v3210 = vpop.f32.mrf.mxu0
      %3211 = vmatprep.mubr.f32.mxu0 %v2926
      %3212 = vmatmul.mubr.f32.gmra.mxu0 %v2925
      %v3213 = vpop.f32.mrf.mxu0
      %v3214 = vadd.f32 %v3077, %v3213
      %v3215 = vpop.f32.mrf.mxu0
      %3216 = vmatprep.mubr.f32.mxu0 %v2931
      %3217 = vmatmul.mubr.f32.gmra.mxu0 %v2930
      %v3218 = vpop.f32.mrf.mxu0
      %v3219 = vadd.f32 %v3077, %v3218
      %v3220 = vpop.f32.mrf.mxu0
      %3221 = vmatprep.mubr.f32.mxu0 %v2936
      %3222 = vmatmul.mubr.f32.gmra.mxu0 %v2935
      %v3223 = vpop.f32.mrf.mxu0
      %v3224 = vadd.f32 %v3077, %v3223
      %v3225 = vpop.f32.mrf.mxu0
      %3226 = vmatprep.mubr.f32.mxu0 %v2941
      %3227 = vmatmul.mubr.f32.gmra.mxu0 %v2940
      %v3228 = vpop.f32.mrf.mxu0
      %v3229 = vadd.f32 %v3077, %v3228
      %v3230 = vpop.f32.mrf.mxu0
      %3231 = vmatprep.mubr.f32.mxu0 %v2946
      %3232 = vmatmul.mubr.f32.gmra.mxu0 %v2945
      %v3233 = vpop.f32.mrf.mxu0
      %v3234 = vadd.f32 %v3077, %v3233
      %v3235 = vpop.f32.mrf.mxu0
      %3236 = vmatprep.mubr.f32.mxu0 %v2951
      %3237 = vmatmul.mubr.f32.gmra.mxu0 %v2950
      %v3238 = vpop.f32.mrf.mxu0
      %v3239 = vadd.f32 %v3077, %v3238
      %v3240 = vpop.f32.mrf.mxu0
      %3241 = vmatprep.mubr.f32.mxu0 %v2956
      %3242 = vmatmul.mubr.f32.gmra.mxu0 %v2955
      %v3243 = vpop.f32.mrf.mxu0
      %v3244 = vadd.f32 %v3077, %v3243
      %v3245 = vpop.f32.mrf.mxu0
      %3246 = vmatprep.mubr.f32.mxu0 %v2961
      %3247 = vmatmul.mubr.f32.gmra.mxu0 %v2960
      %v3248 = vpop.f32.mrf.mxu0
      %v3249 = vadd.f32 %v3077, %v3248
      %v3250 = vpop.f32.mrf.mxu0
      %3251 = vmatprep.mubr.f32.mxu0 %v2966
      %3252 = vmatmul.mubr.f32.gmra.mxu0 %v2965
      %v3253 = vpop.f32.mrf.mxu0
      %v3254 = vadd.f32 %v3077, %v3253
      %v3255 = vpop.f32.mrf.mxu0
      %3256 = vmatprep.mubr.f32.mxu0 %v2971
      %3257 = vmatmul.mubr.f32.gmra.mxu0 %v2970
      %v3258 = vpop.f32.mrf.mxu0
      %v3259 = vadd.f32 %v3077, %v3258
      %v3260 = vpop.f32.mrf.mxu0
      %3261 = vmatprep.mubr.f32.mxu0 %v2976
      %3262 = vmatmul.mubr.f32.gmra.mxu0 %v2975
      %v3263 = vpop.f32.mrf.mxu0
      %v3264 = vadd.f32 %v3077, %v3263
      %v3265 = vpop.f32.mrf.mxu0
      %3266 = vmatprep.mubr.f32.mxu0 %v2981
      %3267 = vmatmul.mubr.f32.gmra.mxu0 %v2980
      %v3268 = vpop.f32.mrf.mxu0
      %v3269 = vadd.f32 %v3077, %v3268
      %v3270 = vpop.f32.mrf.mxu0
      %3271 = vdwg.mxu0
      %3272 = vmatprep.subr.mxu0 0.0
      %3273 = vmatpush1.msra.mxu0 %v3032
      %3274 = vmatprep.subr.mxu0 0.0
      %3275 = vmatpush1.msra.mxu0 %v3031
      %3276 = vmatprep.subr.mxu0 0.0
      %3277 = vmatpush1.msra.mxu0 %v3030
      %3278 = vmatprep.subr.mxu0 0.0
      %3279 = vmatpush1.msra.mxu0 %v3029
      %3280 = vmatprep.subr.mxu0 0.0
      %3281 = vmatpush1.msra.mxu0 %v3028
      %3282 = vmatprep.subr.mxu0 0.0
      %3283 = vmatpush1.msra.mxu0 %v3027
      %3284 = vmatprep.subr.mxu0 0.0
      %3285 = vmatpush1.msra.mxu0 %v3026
      %3286 = vmatprep.subr.mxu0 0.0
      %3287 = vmatpush1.msra.mxu0 %v3025
      %3288 = vmatprep.subr.mxu0 0.0
      %3289 = vmatpush1.msra.mxu0 %v3024
      %3290 = vmatprep.subr.mxu0 0.0
      %3291 = vmatpush1.msra.mxu0 %v3023
      %3292 = vmatprep.subr.mxu0 0.0
      %3293 = vmatpush1.msra.mxu0 %v3022
      %3294 = vmatprep.subr.mxu0 0.0
      %3295 = vmatpush1.msra.mxu0 %v3021
      %3296 = vmatprep.subr.mxu0 0.0
      %3297 = vmatpush1.msra.mxu0 %v3020
      %3298 = vmatprep.subr.mxu0 0.0
      %3299 = vmatpush1.msra.mxu0 %v3019
      %3300 = vmatprep.subr.mxu0 0.0
      %3301 = vmatpush1.msra.mxu0 %v3018
      %3302 = vmatprep.subr.mxu0 0.0
      %3303 = vmatpush1.msra.mxu0 %v3017
      %3304 = vmatprep.subr.mxu0 0.0
      %3305 = vmatpush2.msra.mxu0 %v3048
      %3306 = vmatprep.subr.mxu0 0.0
      %3307 = vmatpush2.msra.mxu0 %v3047
      %3308 = vmatprep.subr.mxu0 0.0
      %3309 = vmatpush2.msra.mxu0 %v3046
      %3310 = vmatprep.subr.mxu0 0.0
      %3311 = vmatpush2.msra.mxu0 %v3045
      %3312 = vmatprep.subr.mxu0 0.0
      %3313 = vmatpush2.msra.mxu0 %v3044
      %3314 = vmatprep.subr.mxu0 0.0
      %3315 = vmatpush2.msra.mxu0 %v3043
      %3316 = vmatprep.subr.mxu0 0.0
      %3317 = vmatpush2.msra.mxu0 %v3042
      %3318 = vmatprep.subr.mxu0 0.0
      %3319 = vmatpush2.msra.mxu0 %v3041
      %3320 = vmatprep.subr.mxu0 0.0
      %3321 = vmatpush2.msra.mxu0 %v3040
      %3322 = vmatprep.subr.mxu0 0.0
      %3323 = vmatpush2.msra.mxu0 %v3039
      %3324 = vmatprep.subr.mxu0 0.0
      %3325 = vmatpush2.msra.mxu0 %v3038
      %3326 = vmatprep.subr.mxu0 0.0
      %3327 = vmatpush2.msra.mxu0 %v3037
      %3328 = vmatprep.subr.mxu0 0.0
      %3329 = vmatpush2.msra.mxu0 %v3036
      %3330 = vmatprep.subr.mxu0 0.0
      %3331 = vmatpush2.msra.mxu0 %v3035
      %3332 = vmatprep.subr.mxu0 0.0
      %3333 = vmatpush2.msra.mxu0 %v3034
      %3334 = vmatprep.subr.mxu0 0.0
      %3335 = vmatpush2.msra.mxu0 %v3033
      %3336 = vmatprep.mubr.f32.mxu0 %v2908
      %3337 = vmatmul.mubr.f32.gmra.mxu0 %v2907
      %v3338 = vpop.f32.mrf.mxu0
      %v3339 = vadd.f32 %v3194, %v3338
      %v3340 = vpop.f32.mrf.mxu0
      %3341 = vmatprep.mubr.f32.mxu0 %v2913
      %3342 = vmatmul.mubr.f32.gmra.mxu0 %v2912
      %v3343 = vpop.f32.mrf.mxu0
      %v3344 = vadd.f32 %v3199, %v3343
      %v3345 = vpop.f32.mrf.mxu0
      %3346 = vmatprep.mubr.f32.mxu0 %v2918
      %3347 = vmatmul.mubr.f32.gmra.mxu0 %v2917
      %v3348 = vpop.f32.mrf.mxu0
      %v3349 = vadd.f32 %v3204, %v3348
      %v3350 = vpop.f32.mrf.mxu0
      %3351 = vmatprep.mubr.f32.mxu0 %v2923
      %3352 = vmatmul.mubr.f32.gmra.mxu0 %v2922
      %v3353 = vpop.f32.mrf.mxu0
      %v3354 = vadd.f32 %v3209, %v3353
      %v3355 = vpop.f32.mrf.mxu0
      %3356 = vmatprep.mubr.f32.mxu0 %v2928
      %3357 = vmatmul.mubr.f32.gmra.mxu0 %v2927
      %v3358 = vpop.f32.mrf.mxu0
      %v3359 = vadd.f32 %v3214, %v3358
      %v3360 = vpop.f32.mrf.mxu0
      %3361 = vmatprep.mubr.f32.mxu0 %v2933
      %3362 = vmatmul.mubr.f32.gmra.mxu0 %v2932
      %v3363 = vpop.f32.mrf.mxu0
      %v3364 = vadd.f32 %v3219, %v3363
      %v3365 = vpop.f32.mrf.mxu0
      %3366 = vmatprep.mubr.f32.mxu0 %v2938
      %3367 = vmatmul.mubr.f32.gmra.mxu0 %v2937
      %v3368 = vpop.f32.mrf.mxu0
      %v3369 = vadd.f32 %v3224, %v3368
      %v3370 = vpop.f32.mrf.mxu0
      %3371 = vmatprep.mubr.f32.mxu0 %v2943
      %3372 = vmatmul.mubr.f32.gmra.mxu0 %v2942
      %v3373 = vpop.f32.mrf.mxu0
      %v3374 = vadd.f32 %v3229, %v3373
      %v3375 = vpop.f32.mrf.mxu0
      %3376 = vmatprep.mubr.f32.mxu0 %v2948
      %3377 = vmatmul.mubr.f32.gmra.mxu0 %v2947
      %v3378 = vpop.f32.mrf.mxu0
      %v3379 = vadd.f32 %v3234, %v3378
      %v3380 = vpop.f32.mrf.mxu0
      %3381 = vmatprep.mubr.f32.mxu0 %v2953
      %3382 = vmatmul.mubr.f32.gmra.mxu0 %v2952
      %v3383 = vpop.f32.mrf.mxu0
      %v3384 = vadd.f32 %v3239, %v3383
      %v3385 = vpop.f32.mrf.mxu0
      %3386 = vmatprep.mubr.f32.mxu0 %v2958
      %3387 = vmatmul.mubr.f32.gmra.mxu0 %v2957
      %v3388 = vpop.f32.mrf.mxu0
      %v3389 = vadd.f32 %v3244, %v3388
      %v3390 = vpop.f32.mrf.mxu0
      %3391 = vmatprep.mubr.f32.mxu0 %v2963
      %3392 = vmatmul.mubr.f32.gmra.mxu0 %v2962
      %v3393 = vpop.f32.mrf.mxu0
      %v3394 = vadd.f32 %v3249, %v3393
      %v3395 = vpop.f32.mrf.mxu0
      %3396 = vmatprep.mubr.f32.mxu0 %v2968
      %3397 = vmatmul.mubr.f32.gmra.mxu0 %v2967
      %v3398 = vpop.f32.mrf.mxu0
      %v3399 = vadd.f32 %v3254, %v3398
      %v3400 = vpop.f32.mrf.mxu0
      %3401 = vmatprep.mubr.f32.mxu0 %v2973
      %3402 = vmatmul.mubr.f32.gmra.mxu0 %v2972
      %v3403 = vpop.f32.mrf.mxu0
      %v3404 = vadd.f32 %v3259, %v3403
      %v3405 = vpop.f32.mrf.mxu0
      %3406 = vmatprep.mubr.f32.mxu0 %v2978
      %3407 = vmatmul.mubr.f32.gmra.mxu0 %v2977
      %v3408 = vpop.f32.mrf.mxu0
      %v3409 = vadd.f32 %v3264, %v3408
      %v3410 = vpop.f32.mrf.mxu0
      %3411 = vmatprep.mubr.f32.mxu0 %v2983
      %3412 = vmatmul.mubr.f32.gmra.mxu0 %v2982
      %v3413 = vpop.f32.mrf.mxu0
      %v3414 = vadd.f32 %v3269, %v3413
      %v3415 = vpop.f32.mrf.mxu0
      %3416 = vdwg.mxu0
      %3417 = vmatprep.subr.mxu0 0.0
      %3418 = vmatpush1.msra.mxu0 0.0
      %3419 = vmatprep.subr.mxu0 0.0
      %3420 = vmatpush1.msra.mxu0 0.0
      %3421 = vmatprep.subr.mxu0 0.0
      %3422 = vmatpush1.msra.mxu0 0.0
      %3423 = vmatprep.subr.mxu0 0.0
      %3424 = vmatpush1.msra.mxu0 0.0
      %3425 = vmatprep.subr.mxu0 0.0
      %3426 = vmatpush1.msra.mxu0 0.0
      %3427 = vmatprep.subr.mxu0 0.0
      %3428 = vmatpush1.msra.mxu0 0.0
      %3429 = vmatprep.subr.mxu0 0.0
      %3430 = vmatpush1.msra.mxu0 0.0
      %3431 = vmatprep.subr.mxu0 0.0
      %3432 = vmatpush1.msra.mxu0 0.0
      %3433 = vmatprep.subr.mxu0 0.0
      %3434 = vmatpush1.msra.mxu0 %v3056
      %3435 = vmatprep.subr.mxu0 0.0
      %3436 = vmatpush1.msra.mxu0 %v3055
      %3437 = vmatprep.subr.mxu0 0.0
      %3438 = vmatpush1.msra.mxu0 %v3054
      %3439 = vmatprep.subr.mxu0 0.0
      %3440 = vmatpush1.msra.mxu0 %v3053
      %3441 = vmatprep.subr.mxu0 0.0
      %3442 = vmatpush1.msra.mxu0 %v3052
      %3443 = vmatprep.subr.mxu0 0.0
      %3444 = vmatpush1.msra.mxu0 %v3051
      %3445 = vmatprep.subr.mxu0 0.0
      %3446 = vmatpush1.msra.mxu0 %v3050
      %3447 = vmatprep.subr.mxu0 0.0
      %3448 = vmatpush1.msra.mxu0 %v3049
      %3449 = vmatprep.subr.mxu0 0.0
      %3450 = vmatpush2.msra.mxu0 0.0
      %3451 = vmatprep.subr.mxu0 0.0
      %3452 = vmatpush2.msra.mxu0 0.0
      %3453 = vmatprep.subr.mxu0 0.0
      %3454 = vmatpush2.msra.mxu0 0.0
      %3455 = vmatprep.subr.mxu0 0.0
      %3456 = vmatpush2.msra.mxu0 0.0
      %3457 = vmatprep.subr.mxu0 0.0
      %3458 = vmatpush2.msra.mxu0 0.0
      %3459 = vmatprep.subr.mxu0 0.0
      %3460 = vmatpush2.msra.mxu0 0.0
      %3461 = vmatprep.subr.mxu0 0.0
      %3462 = vmatpush2.msra.mxu0 0.0
      %3463 = vmatprep.subr.mxu0 0.0
      %3464 = vmatpush2.msra.mxu0 0.0
      %3465 = vmatprep.subr.mxu0 0.0
      %3466 = vmatpush2.msra.mxu0 0.0
      %3467 = vmatprep.subr.mxu0 0.0
      %3468 = vmatpush2.msra.mxu0 0.0
      %3469 = vmatprep.subr.mxu0 0.0
      %3470 = vmatpush2.msra.mxu0 0.0
      %3471 = vmatprep.subr.mxu0 0.0
      %3472 = vmatpush2.msra.mxu0 0.0
      %3473 = vmatprep.subr.mxu0 0.0
      %3474 = vmatpush2.msra.mxu0 0.0
      %3475 = vmatprep.subr.mxu0 0.0
      %3476 = vmatpush2.msra.mxu0 0.0
      %3477 = vmatprep.subr.mxu0 0.0
      %3478 = vmatpush2.msra.mxu0 0.0
      %3479 = vmatprep.subr.mxu0 0.0
      %3480 = vmatpush2.msra.mxu0 0.0
      %3481 = vmatprep.mubr.f32.mxu0 0.0
      %3482 = vmatmul.mubr.f32.gmra.mxu0 %v3080
      %v3483 = vpop.f32.mrf.mxu0
      %v3484 = vadd.f32 %v3339, %v3483
      %v3485 = vpop.f32.mrf.mxu0
      %3486 = vmatprep.mubr.f32.mxu0 0.0
      %3487 = vmatmul.mubr.f32.gmra.mxu0 %v3083
      %v3488 = vpop.f32.mrf.mxu0
      %v3489 = vadd.f32 %v3344, %v3488
      %v3490 = vpop.f32.mrf.mxu0
      %3491 = vmatprep.mubr.f32.mxu0 0.0
      %3492 = vmatmul.mubr.f32.gmra.mxu0 %v3086
      %v3493 = vpop.f32.mrf.mxu0
      %v3494 = vadd.f32 %v3349, %v3493
      %v3495 = vpop.f32.mrf.mxu0
      %3496 = vmatprep.mubr.f32.mxu0 0.0
      %3497 = vmatmul.mubr.f32.gmra.mxu0 %v3089
      %v3498 = vpop.f32.mrf.mxu0
      %v3499 = vadd.f32 %v3354, %v3498
      %v3500 = vpop.f32.mrf.mxu0
      %3501 = vmatprep.mubr.f32.mxu0 0.0
      %3502 = vmatmul.mubr.f32.gmra.mxu0 %v3092
      %v3503 = vpop.f32.mrf.mxu0
      %v3504 = vadd.f32 %v3359, %v3503
      %v3505 = vpop.f32.mrf.mxu0
      %3506 = vmatprep.mubr.f32.mxu0 0.0
      %3507 = vmatmul.mubr.f32.gmra.mxu0 %v3095
      %v3508 = vpop.f32.mrf.mxu0
      %v3509 = vadd.f32 %v3364, %v3508
      %v3510 = vpop.f32.mrf.mxu0
      %3511 = vmatprep.mubr.f32.mxu0 0.0
      %3512 = vmatmul.mubr.f32.gmra.mxu0 %v3098
      %v3513 = vpop.f32.mrf.mxu0
      %v3514 = vadd.f32 %v3369, %v3513
      %v3515 = vpop.f32.mrf.mxu0
      %3516 = vmatprep.mubr.f32.mxu0 0.0
      %3517 = vmatmul.mubr.f32.gmra.mxu0 %v3101
      %v3518 = vpop.f32.mrf.mxu0
      %v3519 = vadd.f32 %v3374, %v3518
      %v3520 = vpop.f32.mrf.mxu0
      %3521 = vmatprep.mubr.f32.mxu0 0.0
      %3522 = vmatmul.mubr.f32.gmra.mxu0 %v3104
      %v3523 = vpop.f32.mrf.mxu0
      %v3524 = vadd.f32 %v3379, %v3523
      %v3525 = vpop.f32.mrf.mxu0
      %3526 = vmatprep.mubr.f32.mxu0 0.0
      %3527 = vmatmul.mubr.f32.gmra.mxu0 %v3107
      %v3528 = vpop.f32.mrf.mxu0
      %v3529 = vadd.f32 %v3384, %v3528
      %v3530 = vpop.f32.mrf.mxu0
      %3531 = vmatprep.mubr.f32.mxu0 0.0
      %3532 = vmatmul.mubr.f32.gmra.mxu0 %v3110
      %v3533 = vpop.f32.mrf.mxu0
      %v3534 = vadd.f32 %v3389, %v3533
      %v3535 = vpop.f32.mrf.mxu0
      %3536 = vmatprep.mubr.f32.mxu0 0.0
      %3537 = vmatmul.mubr.f32.gmra.mxu0 %v3113
      %v3538 = vpop.f32.mrf.mxu0
      %v3539 = vadd.f32 %v3394, %v3538
      %v3540 = vpop.f32.mrf.mxu0
      %3541 = vmatprep.mubr.f32.mxu0 0.0
      %3542 = vmatmul.mubr.f32.gmra.mxu0 %v3116
      %v3543 = vpop.f32.mrf.mxu0
      %v3544 = vadd.f32 %v3399, %v3543
      %v3545 = vpop.f32.mrf.mxu0
      %3546 = vmatprep.mubr.f32.mxu0 0.0
      %3547 = vmatmul.mubr.f32.gmra.mxu0 %v3119
      %v3548 = vpop.f32.mrf.mxu0
      %v3549 = vadd.f32 %v3404, %v3548
      %v3550 = vpop.f32.mrf.mxu0
      %3551 = vmatprep.mubr.f32.mxu0 0.0
      %3552 = vmatmul.mubr.f32.gmra.mxu0 %v3122
      %v3553 = vpop.f32.mrf.mxu0
      %v3554 = vadd.f32 %v3409, %v3553
      %v3555 = vpop.f32.mrf.mxu0
      %3556 = vmatprep.mubr.f32.mxu0 0.0
      %3557 = vmatmul.mubr.f32.gmra.mxu0 %v3125
      %v3558 = vpop.f32.mrf.mxu0
      %v3559 = vadd.f32 %v3414, %v3558
      %v3560 = vpop.f32.mrf.mxu0
      %3561 = vdwg.mxu0
      %v3562 = vmax.f32 %v3484, 0.0
      %v3563 = vmax.f32 %v3489, 0.0
      %v3564 = vmax.f32 %v3494, 0.0
      %v3565 = vmax.f32 %v3499, 0.0
      %v3566 = vmax.f32 %v3504, 0.0
      %v3567 = vmax.f32 %v3509, 0.0
      %v3568 = vmax.f32 %v3514, 0.0
      %v3569 = vmax.f32 %v3519, 0.0
      %v3570 = vmax.f32 %v3524, 0.0
      %v3571 = vmax.f32 %v3529, 0.0
      %v3572 = vmax.f32 %v3534, 0.0
      %v3573 = vmax.f32 %v3539, 0.0
      %v3574 = vmax.f32 %v3544, 0.0
      %v3575 = vmax.f32 %v3549, 0.0
      %v3576 = vmax.f32 %v3554, 0.0
      %v3577 = vmax.f32 %v3559, 0.0
      %3579 = vset.pattern.permute.xlu0 9
      %3580 = vperm.xlu0 %3579, %v3057
      %v3581 = vpop.permute.xlu0 %3580
      %3584 = vset.pattern.permute.xlu0 9
      %3585 = vperm.xlu0 %3584, %v3058
      %v3586 = vpop.permute.xlu0 %3585
      %3589 = vset.pattern.permute.xlu0 9
      %3590 = vperm.xlu0 %3589, %v3059
      %v3591 = vpop.permute.xlu0 %3590
      %3594 = vset.pattern.permute.xlu0 9
      %3595 = vperm.xlu0 %3594, %v3060
      %v3596 = vpop.permute.xlu0 %3595
      %3599 = vset.pattern.permute.xlu0 9
      %3600 = vperm.xlu0 %3599, %v3061
      %v3601 = vpop.permute.xlu0 %3600
      %3604 = vset.pattern.permute.xlu0 9
      %3605 = vperm.xlu0 %3604, %v3062
      %v3606 = vpop.permute.xlu0 %3605
      %3609 = vset.pattern.permute.xlu0 9
      %3610 = vperm.xlu0 %3609, %v3063
      %v3611 = vpop.permute.xlu0 %3610
      %3614 = vset.pattern.permute.xlu0 9
      %3615 = vperm.xlu0 %3614, %v3064
      %v3616 = vpop.permute.xlu0 %3615
      %3619 = vset.pattern.permute.xlu0 9
      %3620 = vperm.xlu0 %3619, %v3065
      %v3621 = vpop.permute.xlu0 %3620
      %3624 = vset.pattern.permute.xlu0 9
      %3625 = vperm.xlu0 %3624, %v3066
      %v3626 = vpop.permute.xlu0 %3625
      %3629 = vset.pattern.permute.xlu0 9
      %3630 = vperm.xlu0 %3629, %v3067
      %v3631 = vpop.permute.xlu0 %3630
      %3634 = vset.pattern.permute.xlu0 9
      %3635 = vperm.xlu0 %3634, %v3068
      %v3636 = vpop.permute.xlu0 %3635
      %3639 = vset.pattern.permute.xlu0 9
      %3640 = vperm.xlu0 %3639, %v3069
      %v3641 = vpop.permute.xlu0 %3640
      %3644 = vset.pattern.permute.xlu0 9
      %3645 = vperm.xlu0 %3644, %v3070
      %v3646 = vpop.permute.xlu0 %3645
      %3649 = vset.pattern.permute.xlu0 9
      %3650 = vperm.xlu0 %3649, %v3071
      %v3651 = vpop.permute.xlu0 %3650
      %3654 = vset.pattern.permute.xlu0 9
      %3655 = vperm.xlu0 %3654, %v3072
      %v3656 = vpop.permute.xlu0 %3655
      %v3658 = vmul.f32 %v3562, %v3581
      %v3659 = vmul.f32 %v3563, %v3586
      %v3660 = vmul.f32 %v3564, %v3591
      %v3661 = vmul.f32 %v3565, %v3596
      %v3662 = vmul.f32 %v3566, %v3601
      %v3663 = vmul.f32 %v3567, %v3606
      %v3664 = vmul.f32 %v3568, %v3611
      %v3665 = vmul.f32 %v3569, %v3616
      %v3666 = vmul.f32 %v3570, %v3621
      %v3667 = vmul.f32 %v3571, %v3626
      %v3668 = vmul.f32 %v3572, %v3631
      %v3669 = vmul.f32 %v3573, %v3636
      %v3670 = vmul.f32 %v3574, %v3641
      %v3671 = vmul.f32 %v3575, %v3646
      %v3672 = vmul.f32 %v3576, %v3651
      %v3673 = vmul.f32 %v3577, %v3656
      %v3675 = vlaneseq
      %v3676 = vshrl.u32 %v3675, 7
      %v3677 = vsub.s32 0, %v3676
      %v3678 = vrot.slane %v2904, %v3677
      %v3681 = vsel %vm256, %v3658, 0
      %v3684 = vsel %vm256, %v3659, 0
      %v3687 = vsel %vm256, %v3660, 0
      %v3690 = vsel %vm256, %v3661, 0
      %v3693 = vsel %vm256, %v3662, 0
      %v3696 = vsel %vm256, %v3663, 0
      %v3699 = vsel %vm256, %v3664, 0
      %v3702 = vsel %vm256, %v3665, 0
      %v3705 = vsel %vm256, %v3666, 0
      %v3708 = vsel %vm256, %v3667, 0
      %v3711 = vsel %vm256, %v3668, 0
      %v3714 = vsel %vm256, %v3669, 0
      %v3717 = vsel %vm256, %v3670, 0
      %v3720 = vsel %vm256, %v3671, 0
      %v3723 = vsel %vm256, %v3672, 0
      %v3726 = vsel %vm256, %v3673, 0
      %3728 = vmatprep.subr.mxu0 0.0
      %3729 = vmatpush1.msra.mxu0 0.0
      %3730 = vmatprep.subr.mxu0 0.0
      %3731 = vmatpush1.msra.mxu0 0.0
      %3732 = vmatprep.subr.mxu0 0.0
      %3733 = vmatpush1.msra.mxu0 0.0
      %3734 = vmatprep.subr.mxu0 0.0
      %3735 = vmatpush1.msra.mxu0 0.0
      %3736 = vmatprep.subr.mxu0 0.0
      %3737 = vmatpush1.msra.mxu0 0.0
      %3738 = vmatprep.subr.mxu0 0.0
      %3739 = vmatpush1.msra.mxu0 0.0
      %3740 = vmatprep.subr.mxu0 0.0
      %3741 = vmatpush1.msra.mxu0 0.0
      %3742 = vmatprep.subr.mxu0 0.0
      %3743 = vmatpush1.msra.mxu0 0.0
      %3744 = vmatprep.subr.mxu0 0.0
      %3745 = vmatpush1.msra.mxu0 %v2903
      %3746 = vmatprep.subr.mxu0 0.0
      %3747 = vmatpush1.msra.mxu0 %v2902
      %3748 = vmatprep.subr.mxu0 0.0
      %3749 = vmatpush1.msra.mxu0 %v2901
      %3750 = vmatprep.subr.mxu0 0.0
      %3751 = vmatpush1.msra.mxu0 %v2900
      %3752 = vmatprep.subr.mxu0 0.0
      %3753 = vmatpush1.msra.mxu0 %v2899
      %3754 = vmatprep.subr.mxu0 0.0
      %3755 = vmatpush1.msra.mxu0 %v2898
      %3756 = vmatprep.subr.mxu0 0.0
      %3757 = vmatpush1.msra.mxu0 %v2897
      %3758 = vmatprep.subr.mxu0 0.0
      %3759 = vmatpush1.msra.mxu0 %v2896
      %3760 = vmatprep.subr.mxu0 0.0
      %3761 = vmatpush2.msra.mxu0 0.0
      %3762 = vmatprep.subr.mxu0 0.0
      %3763 = vmatpush2.msra.mxu0 0.0
      %3764 = vmatprep.subr.mxu0 0.0
      %3765 = vmatpush2.msra.mxu0 0.0
      %3766 = vmatprep.subr.mxu0 0.0
      %3767 = vmatpush2.msra.mxu0 0.0
      %3768 = vmatprep.subr.mxu0 0.0
      %3769 = vmatpush2.msra.mxu0 0.0
      %3770 = vmatprep.subr.mxu0 0.0
      %3771 = vmatpush2.msra.mxu0 0.0
      %3772 = vmatprep.subr.mxu0 0.0
      %3773 = vmatpush2.msra.mxu0 0.0
      %3774 = vmatprep.subr.mxu0 0.0
      %3775 = vmatpush2.msra.mxu0 0.0
      %3776 = vmatprep.subr.mxu0 0.0
      %3777 = vmatpush2.msra.mxu0 0.0
      %3778 = vmatprep.subr.mxu0 0.0
      %3779 = vmatpush2.msra.mxu0 0.0
      %3780 = vmatprep.subr.mxu0 0.0
      %3781 = vmatpush2.msra.mxu0 0.0
      %3782 = vmatprep.subr.mxu0 0.0
      %3783 = vmatpush2.msra.mxu0 0.0
      %3784 = vmatprep.subr.mxu0 0.0
      %3785 = vmatpush2.msra.mxu0 0.0
      %3786 = vmatprep.subr.mxu0 0.0
      %3787 = vmatpush2.msra.mxu0 0.0
      %3788 = vmatprep.subr.mxu0 0.0
      %3789 = vmatpush2.msra.mxu0 0.0
      %3790 = vmatprep.subr.mxu0 0.0
      %3791 = vmatpush2.msra.mxu0 0.0
      %3792 = vmatprep.mubr.f32.mxu0 0.0
      %3793 = vmatmul.mubr.f32.gmra.mxu0 %v3681
      %v3794 = vpop.f32.mrf.mxu0
      %v3795 = vadd.f32 %v3678, %v3794
      %v3796 = vpop.f32.mrf.mxu0
      %3797 = vmatprep.mubr.f32.mxu0 0.0
      %3798 = vmatmul.mubr.f32.gmra.mxu0 %v3684
      %v3799 = vpop.f32.mrf.mxu0
      %v3800 = vadd.f32 %v3678, %v3799
      %v3801 = vpop.f32.mrf.mxu0
      %3802 = vmatprep.mubr.f32.mxu0 0.0
      %3803 = vmatmul.mubr.f32.gmra.mxu0 %v3687
      %v3804 = vpop.f32.mrf.mxu0
      %v3805 = vadd.f32 %v3678, %v3804
      %v3806 = vpop.f32.mrf.mxu0
      %3807 = vmatprep.mubr.f32.mxu0 0.0
      %3808 = vmatmul.mubr.f32.gmra.mxu0 %v3690
      %v3809 = vpop.f32.mrf.mxu0
      %v3810 = vadd.f32 %v3678, %v3809
      %v3811 = vpop.f32.mrf.mxu0
      %3812 = vmatprep.mubr.f32.mxu0 0.0
      %3813 = vmatmul.mubr.f32.gmra.mxu0 %v3693
      %v3814 = vpop.f32.mrf.mxu0
      %v3815 = vadd.f32 %v3678, %v3814
      %v3816 = vpop.f32.mrf.mxu0
      %3817 = vmatprep.mubr.f32.mxu0 0.0
      %3818 = vmatmul.mubr.f32.gmra.mxu0 %v3696
      %v3819 = vpop.f32.mrf.mxu0
      %v3820 = vadd.f32 %v3678, %v3819
      %v3821 = vpop.f32.mrf.mxu0
      %3822 = vmatprep.mubr.f32.mxu0 0.0
      %3823 = vmatmul.mubr.f32.gmra.mxu0 %v3699
      %v3824 = vpop.f32.mrf.mxu0
      %v3825 = vadd.f32 %v3678, %v3824
      %v3826 = vpop.f32.mrf.mxu0
      %3827 = vmatprep.mubr.f32.mxu0 0.0
      %3828 = vmatmul.mubr.f32.gmra.mxu0 %v3702
      %v3829 = vpop.f32.mrf.mxu0
      %v3830 = vadd.f32 %v3678, %v3829
      %v3831 = vpop.f32.mrf.mxu0
      %3832 = vmatprep.mubr.f32.mxu0 0.0
      %3833 = vmatmul.mubr.f32.gmra.mxu0 %v3705
      %v3834 = vpop.f32.mrf.mxu0
      %v3835 = vadd.f32 %v3678, %v3834
      %v3836 = vpop.f32.mrf.mxu0
      %3837 = vmatprep.mubr.f32.mxu0 0.0
      %3838 = vmatmul.mubr.f32.gmra.mxu0 %v3708
      %v3839 = vpop.f32.mrf.mxu0
      %v3840 = vadd.f32 %v3678, %v3839
      %v3841 = vpop.f32.mrf.mxu0
      %3842 = vmatprep.mubr.f32.mxu0 0.0
      %3843 = vmatmul.mubr.f32.gmra.mxu0 %v3711
      %v3844 = vpop.f32.mrf.mxu0
      %v3845 = vadd.f32 %v3678, %v3844
      %v3846 = vpop.f32.mrf.mxu0
      %3847 = vmatprep.mubr.f32.mxu0 0.0
      %3848 = vmatmul.mubr.f32.gmra.mxu0 %v3714
      %v3849 = vpop.f32.mrf.mxu0
      %v3850 = vadd.f32 %v3678, %v3849
      %v3851 = vpop.f32.mrf.mxu0
      %3852 = vmatprep.mubr.f32.mxu0 0.0
      %3853 = vmatmul.mubr.f32.gmra.mxu0 %v3717
      %v3854 = vpop.f32.mrf.mxu0
      %v3855 = vadd.f32 %v3678, %v3854
      %v3856 = vpop.f32.mrf.mxu0
      %3857 = vmatprep.mubr.f32.mxu0 0.0
      %3858 = vmatmul.mubr.f32.gmra.mxu0 %v3720
      %v3859 = vpop.f32.mrf.mxu0
      %v3860 = vadd.f32 %v3678, %v3859
      %v3861 = vpop.f32.mrf.mxu0
      %3862 = vmatprep.mubr.f32.mxu0 0.0
      %3863 = vmatmul.mubr.f32.gmra.mxu0 %v3723
      %v3864 = vpop.f32.mrf.mxu0
      %v3865 = vadd.f32 %v3678, %v3864
      %v3866 = vpop.f32.mrf.mxu0
      %3867 = vmatprep.mubr.f32.mxu0 0.0
      %3868 = vmatmul.mubr.f32.gmra.mxu0 %v3726
      %v3869 = vpop.f32.mrf.mxu0
      %v3870 = vadd.f32 %v3678, %v3869
      %v3871 = vpop.f32.mrf.mxu0
      %3872 = vdwg.mxu0
      %v3873 = vmax.f32 %v3795, 0.0
      %v3874 = vmax.f32 %v3800, 0.0
      %v3875 = vmax.f32 %v3805, 0.0
      %v3876 = vmax.f32 %v3810, 0.0
      %v3877 = vmax.f32 %v3815, 0.0
      %v3878 = vmax.f32 %v3820, 0.0
      %v3879 = vmax.f32 %v3825, 0.0
      %v3880 = vmax.f32 %v3830, 0.0
      %v3881 = vmax.f32 %v3835, 0.0
      %v3882 = vmax.f32 %v3840, 0.0
      %v3883 = vmax.f32 %v3845, 0.0
      %v3884 = vmax.f32 %v3850, 0.0
      %v3885 = vmax.f32 %v3855, 0.0
      %v3886 = vmax.f32 %v3860, 0.0
      %v3887 = vmax.f32 %v3865, 0.0
      %v3888 = vmax.f32 %v3870, 0.0
      %3889 = vst [vmem:[%s251] sm:$0xff] %v3873
      %3890 = vst [vmem:[%s251 + $0x8] sm:$0xff] %v3874
      %3891 = vst [vmem:[%s251 + $0x10] sm:$0xff] %v3875
      %3892 = vst [vmem:[%s251 + $0x18] sm:$0xff] %v3876
      %3893 = vst [vmem:[%s251 + $0x20] sm:$0xff] %v3877
      %3894 = vst [vmem:[%s251 + $0x28] sm:$0xff] %v3878
      %3895 = vst [vmem:[%s251 + $0x30] sm:$0xff] %v3879
      %3896 = vst [vmem:[%s251 + $0x38] sm:$0xff] %v3880
      %3897 = vst [vmem:[%s251 + $0x40] sm:$0xff] %v3881
      %3898 = vst [vmem:[%s251 + $0x48] sm:$0xff] %v3882
      %3899 = vst [vmem:[%s251 + $0x50] sm:$0xff] %v3883
      %3900 = vst [vmem:[%s251 + $0x58] sm:$0xff] %v3884
      %3901 = vst [vmem:[%s251 + $0x60] sm:$0xff] %v3885
      %3902 = vst [vmem:[%s251 + $0x68] sm:$0xff] %v3886
      %3903 = vst [vmem:[%s251 + $0x70] sm:$0xff] %v3887
      %3904 = vst [vmem:[%s251 + $0x78] sm:$0xff] %v3888
      %v3905 = vld [vmem:[#allocation2 + $0x2f8] sm:$0xff]
      %v3906 = vld [vmem:[#allocation2 + $0x300] sm:$0xff]
      %v3907 = vld [vmem:[#allocation2 + $0x308] sm:$0xff]
      %v3908 = vld [vmem:[#allocation2 + $0x310] sm:$0xff]
      %v3909 = vld [vmem:[#allocation2 + $0x318] sm:$0xff]
      %v3910 = vld [vmem:[#allocation2 + $0x320] sm:$0xff]
      %v3911 = vld [vmem:[#allocation2 + $0x328] sm:$0xff]
      %v3912 = vld [vmem:[#allocation2 + $0x330] sm:$0xff]
      %v3913 = vld [vmem:[#allocation2 + $0x338] sm:$0xff]
      %v3914 = vld [vmem:[#allocation2 + $0x340] sm:$0xff]
      %v3915 = vld [vmem:[#allocation2 + $0x348] sm:$0xff]
      %v3916 = vld [vmem:[#allocation2 + $0x350] sm:$0xff]
      %v3917 = vld [vmem:[#allocation2 + $0x358] sm:$0xff]
      %v3918 = vld [vmem:[#allocation2 + $0x360] sm:$0xff]
      %v3919 = vld [vmem:[#allocation2 + $0x368] sm:$0xff]
      %v3920 = vld [vmem:[#allocation2 + $0x370] sm:$0xff]
      %v3921 = vld [vmem:[#allocation2 + $0x378] sm:$0xff]
      %v3922 = vld [vmem:[#allocation2 + $0x380] sm:$0xff]
      %v3923 = vld [vmem:[#allocation2 + $0x388] sm:$0xff]
      %v3924 = vld [vmem:[#allocation2 + $0x390] sm:$0xff]
      %v3925 = vld [vmem:[#allocation2 + $0x398] sm:$0xff]
      %v3926 = vld [vmem:[#allocation2 + $0x3a0] sm:$0xff]
      %v3927 = vld [vmem:[#allocation2 + $0x3a8] sm:$0xff]
      %v3928 = vld [vmem:[#allocation2 + $0x3b0] sm:$0xff]
      %v3929 = vld [vmem:[#allocation2 + $0x3b8] sm:$0xff]
      %v3930 = vld [vmem:[#allocation2 + $0x3c0] sm:$0xff]
      %v3931 = vld [vmem:[#allocation2 + $0x3c8] sm:$0xff]
      %v3932 = vld [vmem:[#allocation2 + $0x3d0] sm:$0xff]
      %v3933 = vld [vmem:[#allocation2 + $0x3d8] sm:$0xff]
      %v3934 = vld [vmem:[#allocation2 + $0x3e0] sm:$0xff]
      %v3935 = vld [vmem:[#allocation2 + $0x3e8] sm:$0xff]
      %v3936 = vld [vmem:[#allocation2 + $0x3f0] sm:$0xff]
      %v3937 = vld [vmem:[#allocation2 + $0x3f8] sm:$0xff]
      %v3938 = vld [vmem:[#allocation2 + $0x400] sm:$0xff]
      %v3939 = vld [vmem:[#allocation2 + $0x408] sm:$0xff]
      %v3940 = vld [vmem:[#allocation2 + $0x410] sm:$0xff]
      %v3941 = vld [vmem:[#allocation2 + $0x418] sm:$0xff]
      %v3942 = vld [vmem:[#allocation2 + $0x420] sm:$0xff]
      %v3943 = vld [vmem:[#allocation2 + $0x428] sm:$0xff]
      %v3944 = vld [vmem:[#allocation2 + $0x430] sm:$0xff]
      %v3945 = vld [vmem:[#allocation2 + $0x438] sm:$0xff]
      %v3946 = vld [vmem:[#allocation2 + $0x440] sm:$0xff]
      %v3947 = vld [vmem:[#allocation2 + $0x448] sm:$0xff]
      %v3948 = vld [vmem:[#allocation2 + $0x450] sm:$0xff]
      %v3949 = vld [vmem:[#allocation2 + $0x458] sm:$0xff]
      %v3950 = vld [vmem:[#allocation2 + $0x460] sm:$0xff]
      %v3951 = vld [vmem:[#allocation2 + $0x468] sm:$0xff]
      %v3952 = vld [vmem:[#allocation2 + $0x470] sm:$0xff]
      %v3953 = vld [vmem:[#allocation2 + $0x478] sm:$0xff]
      %v3954 = vld [vmem:[#allocation2 + $0x480] sm:$0xff]
      %v3955 = vld [vmem:[#allocation2 + $0x488] sm:$0xff]
      %v3956 = vld [vmem:[#allocation2 + $0x490] sm:$0xff]
      %v3957 = vld [vmem:[#allocation2 + $0x498] sm:$0xff]
      %v3958 = vld [vmem:[#allocation2 + $0x4a0] sm:$0xff]
      %v3959 = vld [vmem:[#allocation2 + $0x4a8] sm:$0xff]
      %v3960 = vld [vmem:[#allocation2 + $0x4b0] sm:$0xff]
      %v3961 = vld [vmem:[#allocation2 + $0x4b8] sm:$0xff]
      %v3962 = vld [vmem:[#allocation2 + $0x4c0] sm:$0xff]
      %v3963 = vld [vmem:[#allocation2 + $0x4c8] sm:$0xff]
      %v3964 = vld [vmem:[#allocation2 + $0x4d0] sm:$0xff]
      %v3965 = vld [vmem:[#allocation2 + $0x4d8] sm:$0xff]
      %v3966 = vld [vmem:[#allocation2 + $0x4e0] sm:$0xff]
      %v3967 = vld [vmem:[#allocation2 + $0x4e8] sm:$0xff]
      %v3968 = vld [vmem:[#allocation2 + $0x4f0] sm:$0xff]
      %v3969 = vld [vmem:[#allocation2 + $0x4f8] sm:$0xff]
      %v3970 = vld [vmem:[#allocation2 + $0x500] sm:$0xff]
      %v3971 = vld [vmem:[#allocation2 + $0x508] sm:$0xff]
      %v3972 = vld [vmem:[#allocation2 + $0x510] sm:$0xff]
      %v3973 = vld [vmem:[#allocation2 + $0x518] sm:$0xff]
      %v3974 = vld [vmem:[#allocation2 + $0x520] sm:$0xff]
      %v3975 = vld [vmem:[#allocation2 + $0x528] sm:$0xff]
      %v3976 = vld [vmem:[#allocation2 + $0x530] sm:$0xff]
      %v3977 = vld [vmem:[#allocation2 + $0x538] sm:$0xff]
      %v3978 = vld [vmem:[#allocation2 + $0x540] sm:$0xff]
      %v3979 = vld [vmem:[#allocation2 + $0x548] sm:$0xff]
      %v3980 = vld [vmem:[#allocation2 + $0x550] sm:$0xff]
      %v3981 = vld [vmem:[#allocation2 + $0x558] sm:$0xff]
      %v3982 = vld [vmem:[#allocation2 + $0x560] sm:$0xff]
      %v3983 = vld [vmem:[#allocation2 + $0x568] sm:$0xff]
      %v3984 = vld [vmem:[#allocation2 + $0x570] sm:$0xff]
      %v3985 = vld [vmem:[%s2] sm:$0xff]
      %v3986 = vld [vmem:[%s2 + $0x8] sm:$0xff]
      %v3987 = vld [vmem:[%s2 + $0x10] sm:$0xff]
      %v3988 = vld [vmem:[%s2 + $0x18] sm:$0xff]
      %v3989 = vld [vmem:[%s2 + $0x20] sm:$0xff]
      %v3990 = vld [vmem:[%s2 + $0x28] sm:$0xff]
      %v3991 = vld [vmem:[%s2 + $0x30] sm:$0xff]
      %v3992 = vld [vmem:[%s2 + $0x38] sm:$0xff]
      %v3993 = vld [vmem:[%s2 + $0x40] sm:$0xff]
      %v3994 = vld [vmem:[%s2 + $0x48] sm:$0xff]
      %v3995 = vld [vmem:[%s2 + $0x50] sm:$0xff]
      %v3996 = vld [vmem:[%s2 + $0x58] sm:$0xff]
      %v3997 = vld [vmem:[%s2 + $0x60] sm:$0xff]
      %v3998 = vld [vmem:[%s2 + $0x68] sm:$0xff]
      %v3999 = vld [vmem:[%s2 + $0x70] sm:$0xff]
      %v4000 = vld [vmem:[%s2 + $0x78] sm:$0xff]
      %v4001 = vld [vmem:[%s2 + $0x80] sm:$0xff]
      %v4002 = vld [vmem:[%s2 + $0x88] sm:$0xff]
      %v4003 = vld [vmem:[%s2 + $0x90] sm:$0xff]
      %v4004 = vld [vmem:[%s2 + $0x98] sm:$0xff]
      %v4005 = vld [vmem:[%s2 + $0xa0] sm:$0xff]
      %v4006 = vld [vmem:[%s2 + $0xa8] sm:$0xff]
      %v4007 = vld [vmem:[%s2 + $0xb0] sm:$0xff]
      %v4008 = vld [vmem:[%s2 + $0xb8] sm:$0xff]
      %v4009 = vld [vmem:[%s2 + $0xc0] sm:$0xff]
      %v4010 = vld [vmem:[%s2 + $0xc8] sm:$0xff]
      %v4011 = vld [vmem:[%s2 + $0xd0] sm:$0xff]
      %v4012 = vld [vmem:[%s2 + $0xd8] sm:$0xff]
      %v4013 = vld [vmem:[%s2 + $0xe0] sm:$0xff]
      %v4014 = vld [vmem:[%s2 + $0xe8] sm:$0xff]
      %v4015 = vld [vmem:[%s2 + $0xf0] sm:$0xff]
      %v4016 = vld [vmem:[%s2 + $0xf8] sm:$0xff]
      %v4017 = vld [vmem:[%s2 + $0x100] sm:$0xff]
      %v4018 = vld [vmem:[%s2 + $0x108] sm:$0xff]
      %v4019 = vld [vmem:[%s2 + $0x110] sm:$0xff]
      %v4020 = vld [vmem:[%s2 + $0x118] sm:$0xff]
      %v4021 = vld [vmem:[%s2 + $0x120] sm:$0xff]
      %v4022 = vld [vmem:[%s2 + $0x128] sm:$0xff]
      %v4023 = vld [vmem:[%s2 + $0x130] sm:$0xff]
      %v4024 = vld [vmem:[%s2 + $0x138] sm:$0xff]
      %v4025 = vld [vmem:[%s2 + $0x140] sm:$0xff]
      %v4026 = vld [vmem:[%s2 + $0x148] sm:$0xff]
      %v4027 = vld [vmem:[%s2 + $0x150] sm:$0xff]
      %v4028 = vld [vmem:[%s2 + $0x158] sm:$0xff]
      %v4029 = vld [vmem:[%s2 + $0x160] sm:$0xff]
      %v4030 = vld [vmem:[%s2 + $0x168] sm:$0xff]
      %v4031 = vld [vmem:[%s2 + $0x170] sm:$0xff]
      %v4032 = vld [vmem:[%s2 + $0x178] sm:$0xff]
      %v4033 = vld [vmem:[%s2 + $0x180] sm:$0xff]
      %v4034 = vld [vmem:[%s2 + $0x188] sm:$0xff]
      %v4035 = vld [vmem:[%s2 + $0x190] sm:$0xff]
      %v4036 = vld [vmem:[%s2 + $0x198] sm:$0xff]
      %v4037 = vld [vmem:[%s2 + $0x1a0] sm:$0xff]
      %v4038 = vld [vmem:[%s2 + $0x1a8] sm:$0xff]
      %v4039 = vld [vmem:[%s2 + $0x1b0] sm:$0xff]
      %v4040 = vld [vmem:[%s2 + $0x1b8] sm:$0xff]
      %v4041 = vld [vmem:[%s2 + $0x1c0] sm:$0xff]
      %v4042 = vld [vmem:[%s2 + $0x1c8] sm:$0xff]
      %v4043 = vld [vmem:[%s2 + $0x1d0] sm:$0xff]
      %v4044 = vld [vmem:[%s2 + $0x1d8] sm:$0xff]
      %v4045 = vld [vmem:[%s2 + $0x1e0] sm:$0xff]
      %v4046 = vld [vmem:[%s2 + $0x1e8] sm:$0xff]
      %v4047 = vld [vmem:[%s2 + $0x1f0] sm:$0xff]
      %v4048 = vld [vmem:[%s2 + $0x1f8] sm:$0xff]
      %v4049 = vld [vmem:[%s2 + $0x200] sm:$0xff]
      %v4050 = vld [vmem:[%s2 + $0x208] sm:$0xff]
      %v4051 = vld [vmem:[%s2 + $0x210] sm:$0xff]
      %v4052 = vld [vmem:[%s2 + $0x218] sm:$0xff]
      %v4053 = vld [vmem:[%s2 + $0x220] sm:$0xff]
      %v4054 = vld [vmem:[%s2 + $0x228] sm:$0xff]
      %v4055 = vld [vmem:[%s2 + $0x230] sm:$0xff]
      %v4056 = vld [vmem:[%s2 + $0x238] sm:$0xff]
      %v4057 = vld [vmem:[%s246 + $0x80] sm:$0xff]
      %v4058 = vld [vmem:[%s246 + $0x88] sm:$0xff]
      %v4059 = vld [vmem:[%s246 + $0x90] sm:$0xff]
      %v4060 = vld [vmem:[%s246 + $0x98] sm:$0xff]
      %v4061 = vld [vmem:[%s246 + $0xa0] sm:$0xff]
      %v4062 = vld [vmem:[%s246 + $0xa8] sm:$0xff]
      %v4063 = vld [vmem:[%s246 + $0xb0] sm:$0xff]
      %v4064 = vld [vmem:[%s246 + $0xb8] sm:$0xff]
      %v4065 = vld [vmem:[%s246 + $0xc0] sm:$0xff]
      %v4066 = vld [vmem:[%s246 + $0xc8] sm:$0xff]
      %v4067 = vld [vmem:[%s246 + $0xd0] sm:$0xff]
      %v4068 = vld [vmem:[%s246 + $0xd8] sm:$0xff]
      %v4069 = vld [vmem:[%s246 + $0xe0] sm:$0xff]
      %v4070 = vld [vmem:[%s246 + $0xe8] sm:$0xff]
      %v4071 = vld [vmem:[%s246 + $0xf0] sm:$0xff]
      %v4072 = vld [vmem:[%s246 + $0xf8] sm:$0xff]
      %v4074 = vsel %vm256, %v3909, 0
      %v4077 = vsel %vm256, %v3914, 0
      %v4080 = vsel %vm256, %v3919, 0
      %v4083 = vsel %vm256, %v3924, 0
      %v4086 = vsel %vm256, %v3929, 0
      %v4089 = vsel %vm256, %v3934, 0
      %v4092 = vsel %vm256, %v3939, 0
      %v4095 = vsel %vm256, %v3944, 0
      %v4098 = vsel %vm256, %v3949, 0
      %v4101 = vsel %vm256, %v3954, 0
      %v4104 = vsel %vm256, %v3959, 0
      %v4107 = vsel %vm256, %v3964, 0
      %v4110 = vsel %vm256, %v3969, 0
      %v4113 = vsel %vm256, %v3974, 0
      %v4116 = vsel %vm256, %v3979, 0
      %v4119 = vsel %vm256, %v3984, 0
      %4121 = vmatprep.subr.mxu0 0.0
      %4122 = vmatpush1.msra.mxu0 %v4000
      %4123 = vmatprep.subr.mxu0 0.0
      %4124 = vmatpush1.msra.mxu0 %v3999
      %4125 = vmatprep.subr.mxu0 0.0
      %4126 = vmatpush1.msra.mxu0 %v3998
      %4127 = vmatprep.subr.mxu0 0.0
      %4128 = vmatpush1.msra.mxu0 %v3997
      %4129 = vmatprep.subr.mxu0 0.0
      %4130 = vmatpush1.msra.mxu0 %v3996
      %4131 = vmatprep.subr.mxu0 0.0
      %4132 = vmatpush1.msra.mxu0 %v3995
      %4133 = vmatprep.subr.mxu0 0.0
      %4134 = vmatpush1.msra.mxu0 %v3994
      %4135 = vmatprep.subr.mxu0 0.0
      %4136 = vmatpush1.msra.mxu0 %v3993
      %4137 = vmatprep.subr.mxu0 0.0
      %4138 = vmatpush1.msra.mxu0 %v3992
      %4139 = vmatprep.subr.mxu0 0.0
      %4140 = vmatpush1.msra.mxu0 %v3991
      %4141 = vmatprep.subr.mxu0 0.0
      %4142 = vmatpush1.msra.mxu0 %v3990
      %4143 = vmatprep.subr.mxu0 0.0
      %4144 = vmatpush1.msra.mxu0 %v3989
      %4145 = vmatprep.subr.mxu0 0.0
      %4146 = vmatpush1.msra.mxu0 %v3988
      %4147 = vmatprep.subr.mxu0 0.0
      %4148 = vmatpush1.msra.mxu0 %v3987
      %4149 = vmatprep.subr.mxu0 0.0
      %4150 = vmatpush1.msra.mxu0 %v3986
      %4151 = vmatprep.subr.mxu0 0.0
      %4152 = vmatpush1.msra.mxu0 %v3985
      %4153 = vmatprep.subr.mxu0 0.0
      %4154 = vmatpush2.msra.mxu0 %v4016
      %4155 = vmatprep.subr.mxu0 0.0
      %4156 = vmatpush2.msra.mxu0 %v4015
      %4157 = vmatprep.subr.mxu0 0.0
      %4158 = vmatpush2.msra.mxu0 %v4014
      %4159 = vmatprep.subr.mxu0 0.0
      %4160 = vmatpush2.msra.mxu0 %v4013
      %4161 = vmatprep.subr.mxu0 0.0
      %4162 = vmatpush2.msra.mxu0 %v4012
      %4163 = vmatprep.subr.mxu0 0.0
      %4164 = vmatpush2.msra.mxu0 %v4011
      %4165 = vmatprep.subr.mxu0 0.0
      %4166 = vmatpush2.msra.mxu0 %v4010
      %4167 = vmatprep.subr.mxu0 0.0
      %4168 = vmatpush2.msra.mxu0 %v4009
      %4169 = vmatprep.subr.mxu0 0.0
      %4170 = vmatpush2.msra.mxu0 %v4008
      %4171 = vmatprep.subr.mxu0 0.0
      %4172 = vmatpush2.msra.mxu0 %v4007
      %4173 = vmatprep.subr.mxu0 0.0
      %4174 = vmatpush2.msra.mxu0 %v4006
      %4175 = vmatprep.subr.mxu0 0.0
      %4176 = vmatpush2.msra.mxu0 %v4005
      %4177 = vmatprep.subr.mxu0 0.0
      %4178 = vmatpush2.msra.mxu0 %v4004
      %4179 = vmatprep.subr.mxu0 0.0
      %4180 = vmatpush2.msra.mxu0 %v4003
      %4181 = vmatprep.subr.mxu0 0.0
      %4182 = vmatpush2.msra.mxu0 %v4002
      %4183 = vmatprep.subr.mxu0 0.0
      %4184 = vmatpush2.msra.mxu0 %v4001
      %4185 = vmatprep.mubr.f32.mxu0 %v3906
      %4186 = vmatmul.mubr.f32.gmra.mxu0 %v3905
      %v4187 = vpop.f32.mrf.mxu0
      %v4188 = vadd.f32 %v3077, %v4187
      %v4189 = vpop.f32.mrf.mxu0
      %4190 = vmatprep.mubr.f32.mxu0 %v3911
      %4191 = vmatmul.mubr.f32.gmra.mxu0 %v3910
      %v4192 = vpop.f32.mrf.mxu0
      %v4193 = vadd.f32 %v3077, %v4192
      %v4194 = vpop.f32.mrf.mxu0
      %4195 = vmatprep.mubr.f32.mxu0 %v3916
      %4196 = vmatmul.mubr.f32.gmra.mxu0 %v3915
      %v4197 = vpop.f32.mrf.mxu0
      %v4198 = vadd.f32 %v3077, %v4197
      %v4199 = vpop.f32.mrf.mxu0
      %4200 = vmatprep.mubr.f32.mxu0 %v3921
      %4201 = vmatmul.mubr.f32.gmra.mxu0 %v3920
      %v4202 = vpop.f32.mrf.mxu0
      %v4203 = vadd.f32 %v3077, %v4202
      %v4204 = vpop.f32.mrf.mxu0
      %4205 = vmatprep.mubr.f32.mxu0 %v3926
      %4206 = vmatmul.mubr.f32.gmra.mxu0 %v3925
      %v4207 = vpop.f32.mrf.mxu0
      %v4208 = vadd.f32 %v3077, %v4207
      %v4209 = vpop.f32.mrf.mxu0
      %4210 = vmatprep.mubr.f32.mxu0 %v3931
      %4211 = vmatmul.mubr.f32.gmra.mxu0 %v3930
      %v4212 = vpop.f32.mrf.mxu0
      %v4213 = vadd.f32 %v3077, %v4212
      %v4214 = vpop.f32.mrf.mxu0
      %4215 = vmatprep.mubr.f32.mxu0 %v3936
      %4216 = vmatmul.mubr.f32.gmra.mxu0 %v3935
      %v4217 = vpop.f32.mrf.mxu0
      %v4218 = vadd.f32 %v3077, %v4217
      %v4219 = vpop.f32.mrf.mxu0
      %4220 = vmatprep.mubr.f32.mxu0 %v3941
      %4221 = vmatmul.mubr.f32.gmra.mxu0 %v3940
      %v4222 = vpop.f32.mrf.mxu0
      %v4223 = vadd.f32 %v3077, %v4222
      %v4224 = vpop.f32.mrf.mxu0
      %4225 = vmatprep.mubr.f32.mxu0 %v3946
      %4226 = vmatmul.mubr.f32.gmra.mxu0 %v3945
      %v4227 = vpop.f32.mrf.mxu0
      %v4228 = vadd.f32 %v3077, %v4227
      %v4229 = vpop.f32.mrf.mxu0
      %4230 = vmatprep.mubr.f32.mxu0 %v3951
      %4231 = vmatmul.mubr.f32.gmra.mxu0 %v3950
      %v4232 = vpop.f32.mrf.mxu0
      %v4233 = vadd.f32 %v3077, %v4232
      %v4234 = vpop.f32.mrf.mxu0
      %4235 = vmatprep.mubr.f32.mxu0 %v3956
      %4236 = vmatmul.mubr.f32.gmra.mxu0 %v3955
      %v4237 = vpop.f32.mrf.mxu0
      %v4238 = vadd.f32 %v3077, %v4237
      %v4239 = vpop.f32.mrf.mxu0
      %4240 = vmatprep.mubr.f32.mxu0 %v3961
      %4241 = vmatmul.mubr.f32.gmra.mxu0 %v3960
      %v4242 = vpop.f32.mrf.mxu0
      %v4243 = vadd.f32 %v3077, %v4242
      %v4244 = vpop.f32.mrf.mxu0
      %4245 = vmatprep.mubr.f32.mxu0 %v3966
      %4246 = vmatmul.mubr.f32.gmra.mxu0 %v3965
      %v4247 = vpop.f32.mrf.mxu0
      %v4248 = vadd.f32 %v3077, %v4247
      %v4249 = vpop.f32.mrf.mxu0
      %4250 = vmatprep.mubr.f32.mxu0 %v3971
      %4251 = vmatmul.mubr.f32.gmra.mxu0 %v3970
      %v4252 = vpop.f32.mrf.mxu0
      %v4253 = vadd.f32 %v3077, %v4252
      %v4254 = vpop.f32.mrf.mxu0
      %4255 = vmatprep.mubr.f32.mxu0 %v3976
      %4256 = vmatmul.mubr.f32.gmra.mxu0 %v3975
      %v4257 = vpop.f32.mrf.mxu0
      %v4258 = vadd.f32 %v3077, %v4257
      %v4259 = vpop.f32.mrf.mxu0
      %4260 = vmatprep.mubr.f32.mxu0 %v3981
      %4261 = vmatmul.mubr.f32.gmra.mxu0 %v3980
      %v4262 = vpop.f32.mrf.mxu0
      %v4263 = vadd.f32 %v3077, %v4262
      %v4264 = vpop.f32.mrf.mxu0
      %4265 = vdwg.mxu0
      %4266 = vmatprep.subr.mxu0 0.0
      %4267 = vmatpush1.msra.mxu0 %v4032
      %4268 = vmatprep.subr.mxu0 0.0
      %4269 = vmatpush1.msra.mxu0 %v4031
      %4270 = vmatprep.subr.mxu0 0.0
      %4271 = vmatpush1.msra.mxu0 %v4030
      %4272 = vmatprep.subr.mxu0 0.0
      %4273 = vmatpush1.msra.mxu0 %v4029
      %4274 = vmatprep.subr.mxu0 0.0
      %4275 = vmatpush1.msra.mxu0 %v4028
      %4276 = vmatprep.subr.mxu0 0.0
      %4277 = vmatpush1.msra.mxu0 %v4027
      %4278 = vmatprep.subr.mxu0 0.0
      %4279 = vmatpush1.msra.mxu0 %v4026
      %4280 = vmatprep.subr.mxu0 0.0
      %4281 = vmatpush1.msra.mxu0 %v4025
      %4282 = vmatprep.subr.mxu0 0.0
      %4283 = vmatpush1.msra.mxu0 %v4024
      %4284 = vmatprep.subr.mxu0 0.0
      %4285 = vmatpush1.msra.mxu0 %v4023
      %4286 = vmatprep.subr.mxu0 0.0
      %4287 = vmatpush1.msra.mxu0 %v4022
      %4288 = vmatprep.subr.mxu0 0.0
      %4289 = vmatpush1.msra.mxu0 %v4021
      %4290 = vmatprep.subr.mxu0 0.0
      %4291 = vmatpush1.msra.mxu0 %v4020
      %4292 = vmatprep.subr.mxu0 0.0
      %4293 = vmatpush1.msra.mxu0 %v4019
      %4294 = vmatprep.subr.mxu0 0.0
      %4295 = vmatpush1.msra.mxu0 %v4018
      %4296 = vmatprep.subr.mxu0 0.0
      %4297 = vmatpush1.msra.mxu0 %v4017
      %4298 = vmatprep.subr.mxu0 0.0
      %4299 = vmatpush2.msra.mxu0 %v4048
      %4300 = vmatprep.subr.mxu0 0.0
      %4301 = vmatpush2.msra.mxu0 %v4047
      %4302 = vmatprep.subr.mxu0 0.0
      %4303 = vmatpush2.msra.mxu0 %v4046
      %4304 = vmatprep.subr.mxu0 0.0
      %4305 = vmatpush2.msra.mxu0 %v4045
      %4306 = vmatprep.subr.mxu0 0.0
      %4307 = vmatpush2.msra.mxu0 %v4044
      %4308 = vmatprep.subr.mxu0 0.0
      %4309 = vmatpush2.msra.mxu0 %v4043
      %4310 = vmatprep.subr.mxu0 0.0
      %4311 = vmatpush2.msra.mxu0 %v4042
      %4312 = vmatprep.subr.mxu0 0.0
      %4313 = vmatpush2.msra.mxu0 %v4041
      %4314 = vmatprep.subr.mxu0 0.0
      %4315 = vmatpush2.msra.mxu0 %v4040
      %4316 = vmatprep.subr.mxu0 0.0
      %4317 = vmatpush2.msra.mxu0 %v4039
      %4318 = vmatprep.subr.mxu0 0.0
      %4319 = vmatpush2.msra.mxu0 %v4038
      %4320 = vmatprep.subr.mxu0 0.0
      %4321 = vmatpush2.msra.mxu0 %v4037
      %4322 = vmatprep.subr.mxu0 0.0
      %4323 = vmatpush2.msra.mxu0 %v4036
      %4324 = vmatprep.subr.mxu0 0.0
      %4325 = vmatpush2.msra.mxu0 %v4035
      %4326 = vmatprep.subr.mxu0 0.0
      %4327 = vmatpush2.msra.mxu0 %v4034
      %4328 = vmatprep.subr.mxu0 0.0
      %4329 = vmatpush2.msra.mxu0 %v4033
      %4330 = vmatprep.mubr.f32.mxu0 %v3908
      %4331 = vmatmul.mubr.f32.gmra.mxu0 %v3907
      %v4332 = vpop.f32.mrf.mxu0
      %v4333 = vadd.f32 %v4188, %v4332
      %v4334 = vpop.f32.mrf.mxu0
      %4335 = vmatprep.mubr.f32.mxu0 %v3913
      %4336 = vmatmul.mubr.f32.gmra.mxu0 %v3912
      %v4337 = vpop.f32.mrf.mxu0
      %v4338 = vadd.f32 %v4193, %v4337
      %v4339 = vpop.f32.mrf.mxu0
      %4340 = vmatprep.mubr.f32.mxu0 %v3918
      %4341 = vmatmul.mubr.f32.gmra.mxu0 %v3917
      %v4342 = vpop.f32.mrf.mxu0
      %v4343 = vadd.f32 %v4198, %v4342
      %v4344 = vpop.f32.mrf.mxu0
      %4345 = vmatprep.mubr.f32.mxu0 %v3923
      %4346 = vmatmul.mubr.f32.gmra.mxu0 %v3922
      %v4347 = vpop.f32.mrf.mxu0
      %v4348 = vadd.f32 %v4203, %v4347
      %v4349 = vpop.f32.mrf.mxu0
      %4350 = vmatprep.mubr.f32.mxu0 %v3928
      %4351 = vmatmul.mubr.f32.gmra.mxu0 %v3927
      %v4352 = vpop.f32.mrf.mxu0
      %v4353 = vadd.f32 %v4208, %v4352
      %v4354 = vpop.f32.mrf.mxu0
      %4355 = vmatprep.mubr.f32.mxu0 %v3933
      %4356 = vmatmul.mubr.f32.gmra.mxu0 %v3932
      %v4357 = vpop.f32.mrf.mxu0
      %v4358 = vadd.f32 %v4213, %v4357
      %v4359 = vpop.f32.mrf.mxu0
      %4360 = vmatprep.mubr.f32.mxu0 %v3938
      %4361 = vmatmul.mubr.f32.gmra.mxu0 %v3937
      %v4362 = vpop.f32.mrf.mxu0
      %v4363 = vadd.f32 %v4218, %v4362
      %v4364 = vpop.f32.mrf.mxu0
      %4365 = vmatprep.mubr.f32.mxu0 %v3943
      %4366 = vmatmul.mubr.f32.gmra.mxu0 %v3942
      %v4367 = vpop.f32.mrf.mxu0
      %v4368 = vadd.f32 %v4223, %v4367
      %v4369 = vpop.f32.mrf.mxu0
      %4370 = vmatprep.mubr.f32.mxu0 %v3948
      %4371 = vmatmul.mubr.f32.gmra.mxu0 %v3947
      %v4372 = vpop.f32.mrf.mxu0
      %v4373 = vadd.f32 %v4228, %v4372
      %v4374 = vpop.f32.mrf.mxu0
      %4375 = vmatprep.mubr.f32.mxu0 %v3953
      %4376 = vmatmul.mubr.f32.gmra.mxu0 %v3952
      %v4377 = vpop.f32.mrf.mxu0
      %v4378 = vadd.f32 %v4233, %v4377
      %v4379 = vpop.f32.mrf.mxu0
      %4380 = vmatprep.mubr.f32.mxu0 %v3958
      %4381 = vmatmul.mubr.f32.gmra.mxu0 %v3957
      %v4382 = vpop.f32.mrf.mxu0
      %v4383 = vadd.f32 %v4238, %v4382
      %v4384 = vpop.f32.mrf.mxu0
      %4385 = vmatprep.mubr.f32.mxu0 %v3963
      %4386 = vmatmul.mubr.f32.gmra.mxu0 %v3962
      %v4387 = vpop.f32.mrf.mxu0
      %v4388 = vadd.f32 %v4243, %v4387
      %v4389 = vpop.f32.mrf.mxu0
      %4390 = vmatprep.mubr.f32.mxu0 %v3968
      %4391 = vmatmul.mubr.f32.gmra.mxu0 %v3967
      %v4392 = vpop.f32.mrf.mxu0
      %v4393 = vadd.f32 %v4248, %v4392
      %v4394 = vpop.f32.mrf.mxu0
      %4395 = vmatprep.mubr.f32.mxu0 %v3973
      %4396 = vmatmul.mubr.f32.gmra.mxu0 %v3972
      %v4397 = vpop.f32.mrf.mxu0
      %v4398 = vadd.f32 %v4253, %v4397
      %v4399 = vpop.f32.mrf.mxu0
      %4400 = vmatprep.mubr.f32.mxu0 %v3978
      %4401 = vmatmul.mubr.f32.gmra.mxu0 %v3977
      %v4402 = vpop.f32.mrf.mxu0
      %v4403 = vadd.f32 %v4258, %v4402
      %v4404 = vpop.f32.mrf.mxu0
      %4405 = vmatprep.mubr.f32.mxu0 %v3983
      %4406 = vmatmul.mubr.f32.gmra.mxu0 %v3982
      %v4407 = vpop.f32.mrf.mxu0
      %v4408 = vadd.f32 %v4263, %v4407
      %v4409 = vpop.f32.mrf.mxu0
      %4410 = vdwg.mxu0
      %4411 = vmatprep.subr.mxu0 0.0
      %4412 = vmatpush1.msra.mxu0 0.0
      %4413 = vmatprep.subr.mxu0 0.0
      %4414 = vmatpush1.msra.mxu0 0.0
      %4415 = vmatprep.subr.mxu0 0.0
      %4416 = vmatpush1.msra.mxu0 0.0
      %4417 = vmatprep.subr.mxu0 0.0
      %4418 = vmatpush1.msra.mxu0 0.0
      %4419 = vmatprep.subr.mxu0 0.0
      %4420 = vmatpush1.msra.mxu0 0.0
      %4421 = vmatprep.subr.mxu0 0.0
      %4422 = vmatpush1.msra.mxu0 0.0
      %4423 = vmatprep.subr.mxu0 0.0
      %4424 = vmatpush1.msra.mxu0 0.0
      %4425 = vmatprep.subr.mxu0 0.0
      %4426 = vmatpush1.msra.mxu0 0.0
      %4427 = vmatprep.subr.mxu0 0.0
      %4428 = vmatpush1.msra.mxu0 %v4056
      %4429 = vmatprep.subr.mxu0 0.0
      %4430 = vmatpush1.msra.mxu0 %v4055
      %4431 = vmatprep.subr.mxu0 0.0
      %4432 = vmatpush1.msra.mxu0 %v4054
      %4433 = vmatprep.subr.mxu0 0.0
      %4434 = vmatpush1.msra.mxu0 %v4053
      %4435 = vmatprep.subr.mxu0 0.0
      %4436 = vmatpush1.msra.mxu0 %v4052
      %4437 = vmatprep.subr.mxu0 0.0
      %4438 = vmatpush1.msra.mxu0 %v4051
      %4439 = vmatprep.subr.mxu0 0.0
      %4440 = vmatpush1.msra.mxu0 %v4050
      %4441 = vmatprep.subr.mxu0 0.0
      %4442 = vmatpush1.msra.mxu0 %v4049
      %4443 = vmatprep.subr.mxu0 0.0
      %4444 = vmatpush2.msra.mxu0 0.0
      %4445 = vmatprep.subr.mxu0 0.0
      %4446 = vmatpush2.msra.mxu0 0.0
      %4447 = vmatprep.subr.mxu0 0.0
      %4448 = vmatpush2.msra.mxu0 0.0
      %4449 = vmatprep.subr.mxu0 0.0
      %4450 = vmatpush2.msra.mxu0 0.0
      %4451 = vmatprep.subr.mxu0 0.0
      %4452 = vmatpush2.msra.mxu0 0.0
      %4453 = vmatprep.subr.mxu0 0.0
      %4454 = vmatpush2.msra.mxu0 0.0
      %4455 = vmatprep.subr.mxu0 0.0
      %4456 = vmatpush2.msra.mxu0 0.0
      %4457 = vmatprep.subr.mxu0 0.0
      %4458 = vmatpush2.msra.mxu0 0.0
      %4459 = vmatprep.subr.mxu0 0.0
      %4460 = vmatpush2.msra.mxu0 0.0
      %4461 = vmatprep.subr.mxu0 0.0
      %4462 = vmatpush2.msra.mxu0 0.0
      %4463 = vmatprep.subr.mxu0 0.0
      %4464 = vmatpush2.msra.mxu0 0.0
      %4465 = vmatprep.subr.mxu0 0.0
      %4466 = vmatpush2.msra.mxu0 0.0
      %4467 = vmatprep.subr.mxu0 0.0
      %4468 = vmatpush2.msra.mxu0 0.0
      %4469 = vmatprep.subr.mxu0 0.0
      %4470 = vmatpush2.msra.mxu0 0.0
      %4471 = vmatprep.subr.mxu0 0.0
      %4472 = vmatpush2.msra.mxu0 0.0
      %4473 = vmatprep.subr.mxu0 0.0
      %4474 = vmatpush2.msra.mxu0 0.0
      %4475 = vmatprep.mubr.f32.mxu0 0.0
      %4476 = vmatmul.mubr.f32.gmra.mxu0 %v4074
      %v4477 = vpop.f32.mrf.mxu0
      %v4478 = vadd.f32 %v4333, %v4477
      %v4479 = vpop.f32.mrf.mxu0
      %4480 = vmatprep.mubr.f32.mxu0 0.0
      %4481 = vmatmul.mubr.f32.gmra.mxu0 %v4077
      %v4482 = vpop.f32.mrf.mxu0
      %v4483 = vadd.f32 %v4338, %v4482
      %v4484 = vpop.f32.mrf.mxu0
      %4485 = vmatprep.mubr.f32.mxu0 0.0
      %4486 = vmatmul.mubr.f32.gmra.mxu0 %v4080
      %v4487 = vpop.f32.mrf.mxu0
      %v4488 = vadd.f32 %v4343, %v4487
      %v4489 = vpop.f32.mrf.mxu0
      %4490 = vmatprep.mubr.f32.mxu0 0.0
      %4491 = vmatmul.mubr.f32.gmra.mxu0 %v4083
      %v4492 = vpop.f32.mrf.mxu0
      %v4493 = vadd.f32 %v4348, %v4492
      %v4494 = vpop.f32.mrf.mxu0
      %4495 = vmatprep.mubr.f32.mxu0 0.0
      %4496 = vmatmul.mubr.f32.gmra.mxu0 %v4086
      %v4497 = vpop.f32.mrf.mxu0
      %v4498 = vadd.f32 %v4353, %v4497
      %v4499 = vpop.f32.mrf.mxu0
      %4500 = vmatprep.mubr.f32.mxu0 0.0
      %4501 = vmatmul.mubr.f32.gmra.mxu0 %v4089
      %v4502 = vpop.f32.mrf.mxu0
      %v4503 = vadd.f32 %v4358, %v4502
      %v4504 = vpop.f32.mrf.mxu0
      %4505 = vmatprep.mubr.f32.mxu0 0.0
      %4506 = vmatmul.mubr.f32.gmra.mxu0 %v4092
      %v4507 = vpop.f32.mrf.mxu0
      %v4508 = vadd.f32 %v4363, %v4507
      %v4509 = vpop.f32.mrf.mxu0
      %4510 = vmatprep.mubr.f32.mxu0 0.0
      %4511 = vmatmul.mubr.f32.gmra.mxu0 %v4095
      %v4512 = vpop.f32.mrf.mxu0
      %v4513 = vadd.f32 %v4368, %v4512
      %v4514 = vpop.f32.mrf.mxu0
      %4515 = vmatprep.mubr.f32.mxu0 0.0
      %4516 = vmatmul.mubr.f32.gmra.mxu0 %v4098
      %v4517 = vpop.f32.mrf.mxu0
      %v4518 = vadd.f32 %v4373, %v4517
      %v4519 = vpop.f32.mrf.mxu0
      %4520 = vmatprep.mubr.f32.mxu0 0.0
      %4521 = vmatmul.mubr.f32.gmra.mxu0 %v4101
      %v4522 = vpop.f32.mrf.mxu0
      %v4523 = vadd.f32 %v4378, %v4522
      %v4524 = vpop.f32.mrf.mxu0
      %4525 = vmatprep.mubr.f32.mxu0 0.0
      %4526 = vmatmul.mubr.f32.gmra.mxu0 %v4104
      %v4527 = vpop.f32.mrf.mxu0
      %v4528 = vadd.f32 %v4383, %v4527
      %v4529 = vpop.f32.mrf.mxu0
      %4530 = vmatprep.mubr.f32.mxu0 0.0
      %4531 = vmatmul.mubr.f32.gmra.mxu0 %v4107
      %v4532 = vpop.f32.mrf.mxu0
      %v4533 = vadd.f32 %v4388, %v4532
      %v4534 = vpop.f32.mrf.mxu0
      %4535 = vmatprep.mubr.f32.mxu0 0.0
      %4536 = vmatmul.mubr.f32.gmra.mxu0 %v4110
      %v4537 = vpop.f32.mrf.mxu0
      %v4538 = vadd.f32 %v4393, %v4537
      %v4539 = vpop.f32.mrf.mxu0
      %4540 = vmatprep.mubr.f32.mxu0 0.0
      %4541 = vmatmul.mubr.f32.gmra.mxu0 %v4113
      %v4542 = vpop.f32.mrf.mxu0
      %v4543 = vadd.f32 %v4398, %v4542
      %v4544 = vpop.f32.mrf.mxu0
      %4545 = vmatprep.mubr.f32.mxu0 0.0
      %4546 = vmatmul.mubr.f32.gmra.mxu0 %v4116
      %v4547 = vpop.f32.mrf.mxu0
      %v4548 = vadd.f32 %v4403, %v4547
      %v4549 = vpop.f32.mrf.mxu0
      %4550 = vmatprep.mubr.f32.mxu0 0.0
      %4551 = vmatmul.mubr.f32.gmra.mxu0 %v4119
      %v4552 = vpop.f32.mrf.mxu0
      %v4553 = vadd.f32 %v4408, %v4552
      %v4554 = vpop.f32.mrf.mxu0
      %4555 = vdwg.mxu0
      %v4556 = vmax.f32 %v4478, 0.0
      %v4557 = vmax.f32 %v4483, 0.0
      %v4558 = vmax.f32 %v4488, 0.0
      %v4559 = vmax.f32 %v4493, 0.0
      %v4560 = vmax.f32 %v4498, 0.0
      %v4561 = vmax.f32 %v4503, 0.0
      %v4562 = vmax.f32 %v4508, 0.0
      %v4563 = vmax.f32 %v4513, 0.0
      %v4564 = vmax.f32 %v4518, 0.0
      %v4565 = vmax.f32 %v4523, 0.0
      %v4566 = vmax.f32 %v4528, 0.0
      %v4567 = vmax.f32 %v4533, 0.0
      %v4568 = vmax.f32 %v4538, 0.0
      %v4569 = vmax.f32 %v4543, 0.0
      %v4570 = vmax.f32 %v4548, 0.0
      %v4571 = vmax.f32 %v4553, 0.0
      %4573 = vset.pattern.permute.xlu0 9
      %4574 = vperm.xlu0 %4573, %v4057
      %v4575 = vpop.permute.xlu0 %4574
      %4578 = vset.pattern.permute.xlu0 9
      %4579 = vperm.xlu0 %4578, %v4058
      %v4580 = vpop.permute.xlu0 %4579
      %4583 = vset.pattern.permute.xlu0 9
      %4584 = vperm.xlu0 %4583, %v4059
      %v4585 = vpop.permute.xlu0 %4584
      %4588 = vset.pattern.permute.xlu0 9
      %4589 = vperm.xlu0 %4588, %v4060
      %v4590 = vpop.permute.xlu0 %4589
      %4593 = vset.pattern.permute.xlu0 9
      %4594 = vperm.xlu0 %4593, %v4061
      %v4595 = vpop.permute.xlu0 %4594
      %4598 = vset.pattern.permute.xlu0 9
      %4599 = vperm.xlu0 %4598, %v4062
      %v4600 = vpop.permute.xlu0 %4599
      %4603 = vset.pattern.permute.xlu0 9
      %4604 = vperm.xlu0 %4603, %v4063
      %v4605 = vpop.permute.xlu0 %4604
      %4608 = vset.pattern.permute.xlu0 9
      %4609 = vperm.xlu0 %4608, %v4064
      %v4610 = vpop.permute.xlu0 %4609
      %4613 = vset.pattern.permute.xlu0 9
      %4614 = vperm.xlu0 %4613, %v4065
      %v4615 = vpop.permute.xlu0 %4614
      %4618 = vset.pattern.permute.xlu0 9
      %4619 = vperm.xlu0 %4618, %v4066
      %v4620 = vpop.permute.xlu0 %4619
      %4623 = vset.pattern.permute.xlu0 9
      %4624 = vperm.xlu0 %4623, %v4067
      %v4625 = vpop.permute.xlu0 %4624
      %4628 = vset.pattern.permute.xlu0 9
      %4629 = vperm.xlu0 %4628, %v4068
      %v4630 = vpop.permute.xlu0 %4629
      %4633 = vset.pattern.permute.xlu0 9
      %4634 = vperm.xlu0 %4633, %v4069
      %v4635 = vpop.permute.xlu0 %4634
      %4638 = vset.pattern.permute.xlu0 9
      %4639 = vperm.xlu0 %4638, %v4070
      %v4640 = vpop.permute.xlu0 %4639
      %4643 = vset.pattern.permute.xlu0 9
      %4644 = vperm.xlu0 %4643, %v4071
      %v4645 = vpop.permute.xlu0 %4644
      %4648 = vset.pattern.permute.xlu0 9
      %4649 = vperm.xlu0 %4648, %v4072
      %v4650 = vpop.permute.xlu0 %4649
      %v4652 = vmul.f32 %v4556, %v4575
      %v4653 = vmul.f32 %v4557, %v4580
      %v4654 = vmul.f32 %v4558, %v4585
      %v4655 = vmul.f32 %v4559, %v4590
      %v4656 = vmul.f32 %v4560, %v4595
      %v4657 = vmul.f32 %v4561, %v4600
      %v4658 = vmul.f32 %v4562, %v4605
      %v4659 = vmul.f32 %v4563, %v4610
      %v4660 = vmul.f32 %v4564, %v4615
      %v4661 = vmul.f32 %v4565, %v4620
      %v4662 = vmul.f32 %v4566, %v4625
      %v4663 = vmul.f32 %v4567, %v4630
      %v4664 = vmul.f32 %v4568, %v4635
      %v4665 = vmul.f32 %v4569, %v4640
      %v4666 = vmul.f32 %v4570, %v4645
      %v4667 = vmul.f32 %v4571, %v4650
      %v4669 = vsel %vm256, %v4652, 0
      %v4672 = vsel %vm256, %v4653, 0
      %v4675 = vsel %vm256, %v4654, 0
      %v4678 = vsel %vm256, %v4655, 0
      %v4681 = vsel %vm256, %v4656, 0
      %v4684 = vsel %vm256, %v4657, 0
      %v4687 = vsel %vm256, %v4658, 0
      %v4690 = vsel %vm256, %v4659, 0
      %v4693 = vsel %vm256, %v4660, 0
      %v4696 = vsel %vm256, %v4661, 0
      %v4699 = vsel %vm256, %v4662, 0
      %v4702 = vsel %vm256, %v4663, 0
      %v4705 = vsel %vm256, %v4664, 0
      %v4708 = vsel %vm256, %v4665, 0
      %v4711 = vsel %vm256, %v4666, 0
      %v4714 = vsel %vm256, %v4667, 0
      %4716 = vmatprep.subr.mxu0 0.0
      %4717 = vmatpush1.msra.mxu0 0.0
      %4718 = vmatprep.subr.mxu0 0.0
      %4719 = vmatpush1.msra.mxu0 0.0
      %4720 = vmatprep.subr.mxu0 0.0
      %4721 = vmatpush1.msra.mxu0 0.0
      %4722 = vmatprep.subr.mxu0 0.0
      %4723 = vmatpush1.msra.mxu0 0.0
      %4724 = vmatprep.subr.mxu0 0.0
      %4725 = vmatpush1.msra.mxu0 0.0
      %4726 = vmatprep.subr.mxu0 0.0
      %4727 = vmatpush1.msra.mxu0 0.0
      %4728 = vmatprep.subr.mxu0 0.0
      %4729 = vmatpush1.msra.mxu0 0.0
      %4730 = vmatprep.subr.mxu0 0.0
      %4731 = vmatpush1.msra.mxu0 0.0
      %4732 = vmatprep.subr.mxu0 0.0
      %4733 = vmatpush1.msra.mxu0 %v2903
      %4734 = vmatprep.subr.mxu0 0.0
      %4735 = vmatpush1.msra.mxu0 %v2902
      %4736 = vmatprep.subr.mxu0 0.0
      %4737 = vmatpush1.msra.mxu0 %v2901
      %4738 = vmatprep.subr.mxu0 0.0
      %4739 = vmatpush1.msra.mxu0 %v2900
      %4740 = vmatprep.subr.mxu0 0.0
      %4741 = vmatpush1.msra.mxu0 %v2899
      %4742 = vmatprep.subr.mxu0 0.0
      %4743 = vmatpush1.msra.mxu0 %v2898
      %4744 = vmatprep.subr.mxu0 0.0
      %4745 = vmatpush1.msra.mxu0 %v2897
      %4746 = vmatprep.subr.mxu0 0.0
      %4747 = vmatpush1.msra.mxu0 %v2896
      %4748 = vmatprep.subr.mxu0 0.0
      %4749 = vmatpush2.msra.mxu0 0.0
      %4750 = vmatprep.subr.mxu0 0.0
      %4751 = vmatpush2.msra.mxu0 0.0
      %4752 = vmatprep.subr.mxu0 0.0
      %4753 = vmatpush2.msra.mxu0 0.0
      %4754 = vmatprep.subr.mxu0 0.0
      %4755 = vmatpush2.msra.mxu0 0.0
      %4756 = vmatprep.subr.mxu0 0.0
      %4757 = vmatpush2.msra.mxu0 0.0
      %4758 = vmatprep.subr.mxu0 0.0
      %4759 = vmatpush2.msra.mxu0 0.0
      %4760 = vmatprep.subr.mxu0 0.0
      %4761 = vmatpush2.msra.mxu0 0.0
      %4762 = vmatprep.subr.mxu0 0.0
      %4763 = vmatpush2.msra.mxu0 0.0
      %4764 = vmatprep.subr.mxu0 0.0
      %4765 = vmatpush2.msra.mxu0 0.0
      %4766 = vmatprep.subr.mxu0 0.0
      %4767 = vmatpush2.msra.mxu0 0.0
      %4768 = vmatprep.subr.mxu0 0.0
      %4769 = vmatpush2.msra.mxu0 0.0
      %4770 = vmatprep.subr.mxu0 0.0
      %4771 = vmatpush2.msra.mxu0 0.0
      %4772 = vmatprep.subr.mxu0 0.0
      %4773 = vmatpush2.msra.mxu0 0.0
      %4774 = vmatprep.subr.mxu0 0.0
      %4775 = vmatpush2.msra.mxu0 0.0
      %4776 = vmatprep.subr.mxu0 0.0
      %4777 = vmatpush2.msra.mxu0 0.0
      %4778 = vmatprep.subr.mxu0 0.0
      %4779 = vmatpush2.msra.mxu0 0.0
      %4780 = vmatprep.mubr.f32.mxu0 0.0
      %4781 = vmatmul.mubr.f32.gmra.mxu0 %v4669
      %v4782 = vpop.f32.mrf.mxu0
      %v4783 = vadd.f32 %v3678, %v4782
      %v4784 = vpop.f32.mrf.mxu0
      %4785 = vmatprep.mubr.f32.mxu0 0.0
      %4786 = vmatmul.mubr.f32.gmra.mxu0 %v4672
      %v4787 = vpop.f32.mrf.mxu0
      %v4788 = vadd.f32 %v3678, %v4787
      %v4789 = vpop.f32.mrf.mxu0
      %4790 = vmatprep.mubr.f32.mxu0 0.0
      %4791 = vmatmul.mubr.f32.gmra.mxu0 %v4675
      %v4792 = vpop.f32.mrf.mxu0
      %v4793 = vadd.f32 %v3678, %v4792
      %v4794 = vpop.f32.mrf.mxu0
      %4795 = vmatprep.mubr.f32.mxu0 0.0
      %4796 = vmatmul.mubr.f32.gmra.mxu0 %v4678
      %v4797 = vpop.f32.mrf.mxu0
      %v4798 = vadd.f32 %v3678, %v4797
      %v4799 = vpop.f32.mrf.mxu0
      %4800 = vmatprep.mubr.f32.mxu0 0.0
      %4801 = vmatmul.mubr.f32.gmra.mxu0 %v4681
      %v4802 = vpop.f32.mrf.mxu0
      %v4803 = vadd.f32 %v3678, %v4802
      %v4804 = vpop.f32.mrf.mxu0
      %4805 = vmatprep.mubr.f32.mxu0 0.0
      %4806 = vmatmul.mubr.f32.gmra.mxu0 %v4684
      %v4807 = vpop.f32.mrf.mxu0
      %v4808 = vadd.f32 %v3678, %v4807
      %v4809 = vpop.f32.mrf.mxu0
      %4810 = vmatprep.mubr.f32.mxu0 0.0
      %4811 = vmatmul.mubr.f32.gmra.mxu0 %v4687
      %v4812 = vpop.f32.mrf.mxu0
      %v4813 = vadd.f32 %v3678, %v4812
      %v4814 = vpop.f32.mrf.mxu0
      %4815 = vmatprep.mubr.f32.mxu0 0.0
      %4816 = vmatmul.mubr.f32.gmra.mxu0 %v4690
      %v4817 = vpop.f32.mrf.mxu0
      %v4818 = vadd.f32 %v3678, %v4817
      %v4819 = vpop.f32.mrf.mxu0
      %4820 = vmatprep.mubr.f32.mxu0 0.0
      %4821 = vmatmul.mubr.f32.gmra.mxu0 %v4693
      %v4822 = vpop.f32.mrf.mxu0
      %v4823 = vadd.f32 %v3678, %v4822
      %v4824 = vpop.f32.mrf.mxu0
      %4825 = vmatprep.mubr.f32.mxu0 0.0
      %4826 = vmatmul.mubr.f32.gmra.mxu0 %v4696
      %v4827 = vpop.f32.mrf.mxu0
      %v4828 = vadd.f32 %v3678, %v4827
      %v4829 = vpop.f32.mrf.mxu0
      %4830 = vmatprep.mubr.f32.mxu0 0.0
      %4831 = vmatmul.mubr.f32.gmra.mxu0 %v4699
      %v4832 = vpop.f32.mrf.mxu0
      %v4833 = vadd.f32 %v3678, %v4832
      %v4834 = vpop.f32.mrf.mxu0
      %4835 = vmatprep.mubr.f32.mxu0 0.0
      %4836 = vmatmul.mubr.f32.gmra.mxu0 %v4702
      %v4837 = vpop.f32.mrf.mxu0
      %v4838 = vadd.f32 %v3678, %v4837
      %v4839 = vpop.f32.mrf.mxu0
      %4840 = vmatprep.mubr.f32.mxu0 0.0
      %4841 = vmatmul.mubr.f32.gmra.mxu0 %v4705
      %v4842 = vpop.f32.mrf.mxu0
      %v4843 = vadd.f32 %v3678, %v4842
      %v4844 = vpop.f32.mrf.mxu0
      %4845 = vmatprep.mubr.f32.mxu0 0.0
      %4846 = vmatmul.mubr.f32.gmra.mxu0 %v4708
      %v4847 = vpop.f32.mrf.mxu0
      %v4848 = vadd.f32 %v3678, %v4847
      %v4849 = vpop.f32.mrf.mxu0
      %4850 = vmatprep.mubr.f32.mxu0 0.0
      %4851 = vmatmul.mubr.f32.gmra.mxu0 %v4711
      %v4852 = vpop.f32.mrf.mxu0
      %v4853 = vadd.f32 %v3678, %v4852
      %v4854 = vpop.f32.mrf.mxu0
      %4855 = vmatprep.mubr.f32.mxu0 0.0
      %4856 = vmatmul.mubr.f32.gmra.mxu0 %v4714
      %v4857 = vpop.f32.mrf.mxu0
      %v4858 = vadd.f32 %v3678, %v4857
      %v4859 = vpop.f32.mrf.mxu0
      %4860 = vdwg.mxu0
      %v4861 = vmax.f32 %v4783, 0.0
      %v4862 = vmax.f32 %v4788, 0.0
      %v4863 = vmax.f32 %v4793, 0.0
      %v4864 = vmax.f32 %v4798, 0.0
      %v4865 = vmax.f32 %v4803, 0.0
      %v4866 = vmax.f32 %v4808, 0.0
      %v4867 = vmax.f32 %v4813, 0.0
      %v4868 = vmax.f32 %v4818, 0.0
      %v4869 = vmax.f32 %v4823, 0.0
      %v4870 = vmax.f32 %v4828, 0.0
      %v4871 = vmax.f32 %v4833, 0.0
      %v4872 = vmax.f32 %v4838, 0.0
      %v4873 = vmax.f32 %v4843, 0.0
      %v4874 = vmax.f32 %v4848, 0.0
      %v4875 = vmax.f32 %v4853, 0.0
      %v4876 = vmax.f32 %v4858, 0.0
      %4877 = vst [vmem:[%s251 + $0x80] sm:$0xff] %v4861
      %4878 = vst [vmem:[%s251 + $0x88] sm:$0xff] %v4862
      %4879 = vst [vmem:[%s251 + $0x90] sm:$0xff] %v4863
      %4880 = vst [vmem:[%s251 + $0x98] sm:$0xff] %v4864
      %4881 = vst [vmem:[%s251 + $0xa0] sm:$0xff] %v4865
      %4882 = vst [vmem:[%s251 + $0xa8] sm:$0xff] %v4866
      %4883 = vst [vmem:[%s251 + $0xb0] sm:$0xff] %v4867
      %4884 = vst [vmem:[%s251 + $0xb8] sm:$0xff] %v4868
      %4885 = vst [vmem:[%s251 + $0xc0] sm:$0xff] %v4869
      %4886 = vst [vmem:[%s251 + $0xc8] sm:$0xff] %v4870
      %4887 = vst [vmem:[%s251 + $0xd0] sm:$0xff] %v4871
      %4888 = vst [vmem:[%s251 + $0xd8] sm:$0xff] %v4872
      %4889 = vst [vmem:[%s251 + $0xe0] sm:$0xff] %v4873
      %4890 = vst [vmem:[%s251 + $0xe8] sm:$0xff] %v4874
      %4891 = vst [vmem:[%s251 + $0xf0] sm:$0xff] %v4875
      %4892 = vst [vmem:[%s251 + $0xf8] sm:$0xff] %v4876
      %v4893 = vld [vmem:[#allocation2 + $0x578] sm:$0xff]
      %v4894 = vld [vmem:[#allocation2 + $0x580] sm:$0xff]
      %v4895 = vld [vmem:[#allocation2 + $0x588] sm:$0xff]
      %v4896 = vld [vmem:[#allocation2 + $0x590] sm:$0xff]
      %v4897 = vld [vmem:[#allocation2 + $0x598] sm:$0xff]
      %v4898 = vld [vmem:[#allocation2 + $0x5a0] sm:$0xff]
      %v4899 = vld [vmem:[#allocation2 + $0x5a8] sm:$0xff]
      %v4900 = vld [vmem:[#allocation2 + $0x5b0] sm:$0xff]
      %v4901 = vld [vmem:[#allocation2 + $0x5b8] sm:$0xff]
      %v4902 = vld [vmem:[#allocation2 + $0x5c0] sm:$0xff]
      %v4903 = vld [vmem:[#allocation2 + $0x5c8] sm:$0xff]
      %v4904 = vld [vmem:[#allocation2 + $0x5d0] sm:$0xff]
      %v4905 = vld [vmem:[#allocation2 + $0x5d8] sm:$0xff]
      %v4906 = vld [vmem:[#allocation2 + $0x5e0] sm:$0xff]
      %v4907 = vld [vmem:[#allocation2 + $0x5e8] sm:$0xff]
      %v4908 = vld [vmem:[#allocation2 + $0x5f0] sm:$0xff]
      %v4909 = vld [vmem:[#allocation2 + $0x5f8] sm:$0xff]
      %v4910 = vld [vmem:[#allocation2 + $0x600] sm:$0xff]
      %v4911 = vld [vmem:[#allocation2 + $0x608] sm:$0xff]
      %v4912 = vld [vmem:[#allocation2 + $0x610] sm:$0xff]
      %v4913 = vld [vmem:[#allocation2 + $0x618] sm:$0xff]
      %v4914 = vld [vmem:[#allocation2 + $0x620] sm:$0xff]
      %v4915 = vld [vmem:[#allocation2 + $0x628] sm:$0xff]
      %v4916 = vld [vmem:[#allocation2 + $0x630] sm:$0xff]
      %v4917 = vld [vmem:[#allocation2 + $0x638] sm:$0xff]
      %v4918 = vld [vmem:[#allocation2 + $0x640] sm:$0xff]
      %v4919 = vld [vmem:[#allocation2 + $0x648] sm:$0xff]
      %v4920 = vld [vmem:[#allocation2 + $0x650] sm:$0xff]
      %v4921 = vld [vmem:[#allocation2 + $0x658] sm:$0xff]
      %v4922 = vld [vmem:[#allocation2 + $0x660] sm:$0xff]
      %v4923 = vld [vmem:[#allocation2 + $0x668] sm:$0xff]
      %v4924 = vld [vmem:[#allocation2 + $0x670] sm:$0xff]
      %v4925 = vld [vmem:[#allocation2 + $0x678] sm:$0xff]
      %v4926 = vld [vmem:[#allocation2 + $0x680] sm:$0xff]
      %v4927 = vld [vmem:[#allocation2 + $0x688] sm:$0xff]
      %v4928 = vld [vmem:[#allocation2 + $0x690] sm:$0xff]
      %v4929 = vld [vmem:[#allocation2 + $0x698] sm:$0xff]
      %v4930 = vld [vmem:[#allocation2 + $0x6a0] sm:$0xff]
      %v4931 = vld [vmem:[#allocation2 + $0x6a8] sm:$0xff]
      %v4932 = vld [vmem:[#allocation2 + $0x6b0] sm:$0xff]
      %v4933 = vld [vmem:[#allocation2 + $0x6b8] sm:$0xff]
      %v4934 = vld [vmem:[#allocation2 + $0x6c0] sm:$0xff]
      %v4935 = vld [vmem:[#allocation2 + $0x6c8] sm:$0xff]
      %v4936 = vld [vmem:[#allocation2 + $0x6d0] sm:$0xff]
      %v4937 = vld [vmem:[#allocation2 + $0x6d8] sm:$0xff]
      %v4938 = vld [vmem:[#allocation2 + $0x6e0] sm:$0xff]
      %v4939 = vld [vmem:[#allocation2 + $0x6e8] sm:$0xff]
      %v4940 = vld [vmem:[#allocation2 + $0x6f0] sm:$0xff]
      %v4941 = vld [vmem:[#allocation2 + $0x6f8] sm:$0xff]
      %v4942 = vld [vmem:[#allocation2 + $0x700] sm:$0xff]
      %v4943 = vld [vmem:[#allocation2 + $0x708] sm:$0xff]
      %v4944 = vld [vmem:[#allocation2 + $0x710] sm:$0xff]
      %v4945 = vld [vmem:[#allocation2 + $0x718] sm:$0xff]
      %v4946 = vld [vmem:[#allocation2 + $0x720] sm:$0xff]
      %v4947 = vld [vmem:[#allocation2 + $0x728] sm:$0xff]
      %v4948 = vld [vmem:[#allocation2 + $0x730] sm:$0xff]
      %v4949 = vld [vmem:[#allocation2 + $0x738] sm:$0xff]
      %v4950 = vld [vmem:[#allocation2 + $0x740] sm:$0xff]
      %v4951 = vld [vmem:[#allocation2 + $0x748] sm:$0xff]
      %v4952 = vld [vmem:[#allocation2 + $0x750] sm:$0xff]
      %v4953 = vld [vmem:[#allocation2 + $0x758] sm:$0xff]
      %v4954 = vld [vmem:[#allocation2 + $0x760] sm:$0xff]
      %v4955 = vld [vmem:[#allocation2 + $0x768] sm:$0xff]
      %v4956 = vld [vmem:[#allocation2 + $0x770] sm:$0xff]
      %v4957 = vld [vmem:[#allocation2 + $0x778] sm:$0xff]
      %v4958 = vld [vmem:[#allocation2 + $0x780] sm:$0xff]
      %v4959 = vld [vmem:[#allocation2 + $0x788] sm:$0xff]
      %v4960 = vld [vmem:[#allocation2 + $0x790] sm:$0xff]
      %v4961 = vld [vmem:[#allocation2 + $0x798] sm:$0xff]
      %v4962 = vld [vmem:[#allocation2 + $0x7a0] sm:$0xff]
      %v4963 = vld [vmem:[#allocation2 + $0x7a8] sm:$0xff]
      %v4964 = vld [vmem:[#allocation2 + $0x7b0] sm:$0xff]
      %v4965 = vld [vmem:[#allocation2 + $0x7b8] sm:$0xff]
      %v4966 = vld [vmem:[#allocation2 + $0x7c0] sm:$0xff]
      %v4967 = vld [vmem:[#allocation2 + $0x7c8] sm:$0xff]
      %v4968 = vld [vmem:[#allocation2 + $0x7d0] sm:$0xff]
      %v4969 = vld [vmem:[#allocation2 + $0x7d8] sm:$0xff]
      %v4970 = vld [vmem:[#allocation2 + $0x7e0] sm:$0xff]
      %v4971 = vld [vmem:[#allocation2 + $0x7e8] sm:$0xff]
      %v4972 = vld [vmem:[#allocation2 + $0x7f0] sm:$0xff]
      %v4973 = vld [vmem:[%s2] sm:$0xff]
      %v4974 = vld [vmem:[%s2 + $0x8] sm:$0xff]
      %v4975 = vld [vmem:[%s2 + $0x10] sm:$0xff]
      %v4976 = vld [vmem:[%s2 + $0x18] sm:$0xff]
      %v4977 = vld [vmem:[%s2 + $0x20] sm:$0xff]
      %v4978 = vld [vmem:[%s2 + $0x28] sm:$0xff]
      %v4979 = vld [vmem:[%s2 + $0x30] sm:$0xff]
      %v4980 = vld [vmem:[%s2 + $0x38] sm:$0xff]
      %v4981 = vld [vmem:[%s2 + $0x40] sm:$0xff]
      %v4982 = vld [vmem:[%s2 + $0x48] sm:$0xff]
      %v4983 = vld [vmem:[%s2 + $0x50] sm:$0xff]
      %v4984 = vld [vmem:[%s2 + $0x58] sm:$0xff]
      %v4985 = vld [vmem:[%s2 + $0x60] sm:$0xff]
      %v4986 = vld [vmem:[%s2 + $0x68] sm:$0xff]
      %v4987 = vld [vmem:[%s2 + $0x70] sm:$0xff]
      %v4988 = vld [vmem:[%s2 + $0x78] sm:$0xff]
      %v4989 = vld [vmem:[%s2 + $0x80] sm:$0xff]
      %v4990 = vld [vmem:[%s2 + $0x88] sm:$0xff]
      %v4991 = vld [vmem:[%s2 + $0x90] sm:$0xff]
      %v4992 = vld [vmem:[%s2 + $0x98] sm:$0xff]
      %v4993 = vld [vmem:[%s2 + $0xa0] sm:$0xff]
      %v4994 = vld [vmem:[%s2 + $0xa8] sm:$0xff]
      %v4995 = vld [vmem:[%s2 + $0xb0] sm:$0xff]
      %v4996 = vld [vmem:[%s2 + $0xb8] sm:$0xff]
      %v4997 = vld [vmem:[%s2 + $0xc0] sm:$0xff]
      %v4998 = vld [vmem:[%s2 + $0xc8] sm:$0xff]
      %v4999 = vld [vmem:[%s2 + $0xd0] sm:$0xff]
      %v5000 = vld [vmem:[%s2 + $0xd8] sm:$0xff]
      %v5001 = vld [vmem:[%s2 + $0xe0] sm:$0xff]
      %v5002 = vld [vmem:[%s2 + $0xe8] sm:$0xff]
      %v5003 = vld [vmem:[%s2 + $0xf0] sm:$0xff]
      %v5004 = vld [vmem:[%s2 + $0xf8] sm:$0xff]
      %v5005 = vld [vmem:[%s2 + $0x100] sm:$0xff]
      %v5006 = vld [vmem:[%s2 + $0x108] sm:$0xff]
      %v5007 = vld [vmem:[%s2 + $0x110] sm:$0xff]
      %v5008 = vld [vmem:[%s2 + $0x118] sm:$0xff]
      %v5009 = vld [vmem:[%s2 + $0x120] sm:$0xff]
      %v5010 = vld [vmem:[%s2 + $0x128] sm:$0xff]
      %v5011 = vld [vmem:[%s2 + $0x130] sm:$0xff]
      %v5012 = vld [vmem:[%s2 + $0x138] sm:$0xff]
      %v5013 = vld [vmem:[%s2 + $0x140] sm:$0xff]
      %v5014 = vld [vmem:[%s2 + $0x148] sm:$0xff]
      %v5015 = vld [vmem:[%s2 + $0x150] sm:$0xff]
      %v5016 = vld [vmem:[%s2 + $0x158] sm:$0xff]
      %v5017 = vld [vmem:[%s2 + $0x160] sm:$0xff]
      %v5018 = vld [vmem:[%s2 + $0x168] sm:$0xff]
      %v5019 = vld [vmem:[%s2 + $0x170] sm:$0xff]
      %v5020 = vld [vmem:[%s2 + $0x178] sm:$0xff]
      %v5021 = vld [vmem:[%s2 + $0x180] sm:$0xff]
      %v5022 = vld [vmem:[%s2 + $0x188] sm:$0xff]
      %v5023 = vld [vmem:[%s2 + $0x190] sm:$0xff]
      %v5024 = vld [vmem:[%s2 + $0x198] sm:$0xff]
      %v5025 = vld [vmem:[%s2 + $0x1a0] sm:$0xff]
      %v5026 = vld [vmem:[%s2 + $0x1a8] sm:$0xff]
      %v5027 = vld [vmem:[%s2 + $0x1b0] sm:$0xff]
      %v5028 = vld [vmem:[%s2 + $0x1b8] sm:$0xff]
      %v5029 = vld [vmem:[%s2 + $0x1c0] sm:$0xff]
      %v5030 = vld [vmem:[%s2 + $0x1c8] sm:$0xff]
      %v5031 = vld [vmem:[%s2 + $0x1d0] sm:$0xff]
      %v5032 = vld [vmem:[%s2 + $0x1d8] sm:$0xff]
      %v5033 = vld [vmem:[%s2 + $0x1e0] sm:$0xff]
      %v5034 = vld [vmem:[%s2 + $0x1e8] sm:$0xff]
      %v5035 = vld [vmem:[%s2 + $0x1f0] sm:$0xff]
      %v5036 = vld [vmem:[%s2 + $0x1f8] sm:$0xff]
      %v5037 = vld [vmem:[%s2 + $0x200] sm:$0xff]
      %v5038 = vld [vmem:[%s2 + $0x208] sm:$0xff]
      %v5039 = vld [vmem:[%s2 + $0x210] sm:$0xff]
      %v5040 = vld [vmem:[%s2 + $0x218] sm:$0xff]
      %v5041 = vld [vmem:[%s2 + $0x220] sm:$0xff]
      %v5042 = vld [vmem:[%s2 + $0x228] sm:$0xff]
      %v5043 = vld [vmem:[%s2 + $0x230] sm:$0xff]
      %v5044 = vld [vmem:[%s2 + $0x238] sm:$0xff]
      %v5045 = vld [vmem:[%s246 + $0x100] sm:$0xff]
      %v5046 = vld [vmem:[%s246 + $0x108] sm:$0xff]
      %v5047 = vld [vmem:[%s246 + $0x110] sm:$0xff]
      %v5048 = vld [vmem:[%s246 + $0x118] sm:$0xff]
      %v5049 = vld [vmem:[%s246 + $0x120] sm:$0xff]
      %v5050 = vld [vmem:[%s246 + $0x128] sm:$0xff]
      %v5051 = vld [vmem:[%s246 + $0x130] sm:$0xff]
      %v5052 = vld [vmem:[%s246 + $0x138] sm:$0xff]
      %v5053 = vld [vmem:[%s246 + $0x140] sm:$0xff]
      %v5054 = vld [vmem:[%s246 + $0x148] sm:$0xff]
      %v5055 = vld [vmem:[%s246 + $0x150] sm:$0xff]
      %v5056 = vld [vmem:[%s246 + $0x158] sm:$0xff]
      %v5057 = vld [vmem:[%s246 + $0x160] sm:$0xff]
      %v5058 = vld [vmem:[%s246 + $0x168] sm:$0xff]
      %v5059 = vld [vmem:[%s246 + $0x170] sm:$0xff]
      %v5060 = vld [vmem:[%s246 + $0x178] sm:$0xff]
      %v5062 = vsel %vm256, %v4897, 0
      %v5065 = vsel %vm256, %v4902, 0
      %v5068 = vsel %vm256, %v4907, 0
      %v5071 = vsel %vm256, %v4912, 0
      %v5074 = vsel %vm256, %v4917, 0
      %v5077 = vsel %vm256, %v4922, 0
      %v5080 = vsel %vm256, %v4927, 0
      %v5083 = vsel %vm256, %v4932, 0
      %v5086 = vsel %vm256, %v4937, 0
      %v5089 = vsel %vm256, %v4942, 0
      %v5092 = vsel %vm256, %v4947, 0
      %v5095 = vsel %vm256, %v4952, 0
      %v5098 = vsel %vm256, %v4957, 0
      %v5101 = vsel %vm256, %v4962, 0
      %v5104 = vsel %vm256, %v4967, 0
      %v5107 = vsel %vm256, %v4972, 0
      %5109 = vmatprep.subr.mxu0 0.0
      %5110 = vmatpush1.msra.mxu0 %v4988
      %5111 = vmatprep.subr.mxu0 0.0
      %5112 = vmatpush1.msra.mxu0 %v4987
      %5113 = vmatprep.subr.mxu0 0.0
      %5114 = vmatpush1.msra.mxu0 %v4986
      %5115 = vmatprep.subr.mxu0 0.0
      %5116 = vmatpush1.msra.mxu0 %v4985
      %5117 = vmatprep.subr.mxu0 0.0
      %5118 = vmatpush1.msra.mxu0 %v4984
      %5119 = vmatprep.subr.mxu0 0.0
      %5120 = vmatpush1.msra.mxu0 %v4983
      %5121 = vmatprep.subr.mxu0 0.0
      %5122 = vmatpush1.msra.mxu0 %v4982
      %5123 = vmatprep.subr.mxu0 0.0
      %5124 = vmatpush1.msra.mxu0 %v4981
      %5125 = vmatprep.subr.mxu0 0.0
      %5126 = vmatpush1.msra.mxu0 %v4980
      %5127 = vmatprep.subr.mxu0 0.0
      %5128 = vmatpush1.msra.mxu0 %v4979
      %5129 = vmatprep.subr.mxu0 0.0
      %5130 = vmatpush1.msra.mxu0 %v4978
      %5131 = vmatprep.subr.mxu0 0.0
      %5132 = vmatpush1.msra.mxu0 %v4977
      %5133 = vmatprep.subr.mxu0 0.0
      %5134 = vmatpush1.msra.mxu0 %v4976
      %5135 = vmatprep.subr.mxu0 0.0
      %5136 = vmatpush1.msra.mxu0 %v4975
      %5137 = vmatprep.subr.mxu0 0.0
      %5138 = vmatpush1.msra.mxu0 %v4974
      %5139 = vmatprep.subr.mxu0 0.0
      %5140 = vmatpush1.msra.mxu0 %v4973
      %5141 = vmatprep.subr.mxu0 0.0
      %5142 = vmatpush2.msra.mxu0 %v5004
      %5143 = vmatprep.subr.mxu0 0.0
      %5144 = vmatpush2.msra.mxu0 %v5003
      %5145 = vmatprep.subr.mxu0 0.0
      %5146 = vmatpush2.msra.mxu0 %v5002
      %5147 = vmatprep.subr.mxu0 0.0
      %5148 = vmatpush2.msra.mxu0 %v5001
      %5149 = vmatprep.subr.mxu0 0.0
      %5150 = vmatpush2.msra.mxu0 %v5000
      %5151 = vmatprep.subr.mxu0 0.0
      %5152 = vmatpush2.msra.mxu0 %v4999
      %5153 = vmatprep.subr.mxu0 0.0
      %5154 = vmatpush2.msra.mxu0 %v4998
      %5155 = vmatprep.subr.mxu0 0.0
      %5156 = vmatpush2.msra.mxu0 %v4997
      %5157 = vmatprep.subr.mxu0 0.0
      %5158 = vmatpush2.msra.mxu0 %v4996
      %5159 = vmatprep.subr.mxu0 0.0
      %5160 = vmatpush2.msra.mxu0 %v4995
      %5161 = vmatprep.subr.mxu0 0.0
      %5162 = vmatpush2.msra.mxu0 %v4994
      %5163 = vmatprep.subr.mxu0 0.0
      %5164 = vmatpush2.msra.mxu0 %v4993
      %5165 = vmatprep.subr.mxu0 0.0
      %5166 = vmatpush2.msra.mxu0 %v4992
      %5167 = vmatprep.subr.mxu0 0.0
      %5168 = vmatpush2.msra.mxu0 %v4991
      %5169 = vmatprep.subr.mxu0 0.0
      %5170 = vmatpush2.msra.mxu0 %v4990
      %5171 = vmatprep.subr.mxu0 0.0
      %5172 = vmatpush2.msra.mxu0 %v4989
      %5173 = vmatprep.mubr.f32.mxu0 %v4894
      %5174 = vmatmul.mubr.f32.gmra.mxu0 %v4893
      %v5175 = vpop.f32.mrf.mxu0
      %v5176 = vadd.f32 %v3077, %v5175
      %v5177 = vpop.f32.mrf.mxu0
      %5178 = vmatprep.mubr.f32.mxu0 %v4899
      %5179 = vmatmul.mubr.f32.gmra.mxu0 %v4898
      %v5180 = vpop.f32.mrf.mxu0
      %v5181 = vadd.f32 %v3077, %v5180
      %v5182 = vpop.f32.mrf.mxu0
      %5183 = vmatprep.mubr.f32.mxu0 %v4904
      %5184 = vmatmul.mubr.f32.gmra.mxu0 %v4903
      %v5185 = vpop.f32.mrf.mxu0
      %v5186 = vadd.f32 %v3077, %v5185
      %v5187 = vpop.f32.mrf.mxu0
      %5188 = vmatprep.mubr.f32.mxu0 %v4909
      %5189 = vmatmul.mubr.f32.gmra.mxu0 %v4908
      %v5190 = vpop.f32.mrf.mxu0
      %v5191 = vadd.f32 %v3077, %v5190
      %v5192 = vpop.f32.mrf.mxu0
      %5193 = vmatprep.mubr.f32.mxu0 %v4914
      %5194 = vmatmul.mubr.f32.gmra.mxu0 %v4913
      %v5195 = vpop.f32.mrf.mxu0
      %v5196 = vadd.f32 %v3077, %v5195
      %v5197 = vpop.f32.mrf.mxu0
      %5198 = vmatprep.mubr.f32.mxu0 %v4919
      %5199 = vmatmul.mubr.f32.gmra.mxu0 %v4918
      %v5200 = vpop.f32.mrf.mxu0
      %v5201 = vadd.f32 %v3077, %v5200
      %v5202 = vpop.f32.mrf.mxu0
      %5203 = vmatprep.mubr.f32.mxu0 %v4924
      %5204 = vmatmul.mubr.f32.gmra.mxu0 %v4923
      %v5205 = vpop.f32.mrf.mxu0
      %v5206 = vadd.f32 %v3077, %v5205
      %v5207 = vpop.f32.mrf.mxu0
      %5208 = vmatprep.mubr.f32.mxu0 %v4929
      %5209 = vmatmul.mubr.f32.gmra.mxu0 %v4928
      %v5210 = vpop.f32.mrf.mxu0
      %v5211 = vadd.f32 %v3077, %v5210
      %v5212 = vpop.f32.mrf.mxu0
      %5213 = vmatprep.mubr.f32.mxu0 %v4934
      %5214 = vmatmul.mubr.f32.gmra.mxu0 %v4933
      %v5215 = vpop.f32.mrf.mxu0
      %v5216 = vadd.f32 %v3077, %v5215
      %v5217 = vpop.f32.mrf.mxu0
      %5218 = vmatprep.mubr.f32.mxu0 %v4939
      %5219 = vmatmul.mubr.f32.gmra.mxu0 %v4938
      %v5220 = vpop.f32.mrf.mxu0
      %v5221 = vadd.f32 %v3077, %v5220
      %v5222 = vpop.f32.mrf.mxu0
      %5223 = vmatprep.mubr.f32.mxu0 %v4944
      %5224 = vmatmul.mubr.f32.gmra.mxu0 %v4943
      %v5225 = vpop.f32.mrf.mxu0
      %v5226 = vadd.f32 %v3077, %v5225
      %v5227 = vpop.f32.mrf.mxu0
      %5228 = vmatprep.mubr.f32.mxu0 %v4949
      %5229 = vmatmul.mubr.f32.gmra.mxu0 %v4948
      %v5230 = vpop.f32.mrf.mxu0
      %v5231 = vadd.f32 %v3077, %v5230
      %v5232 = vpop.f32.mrf.mxu0
      %5233 = vmatprep.mubr.f32.mxu0 %v4954
      %5234 = vmatmul.mubr.f32.gmra.mxu0 %v4953
      %v5235 = vpop.f32.mrf.mxu0
      %v5236 = vadd.f32 %v3077, %v5235
      %v5237 = vpop.f32.mrf.mxu0
      %5238 = vmatprep.mubr.f32.mxu0 %v4959
      %5239 = vmatmul.mubr.f32.gmra.mxu0 %v4958
      %v5240 = vpop.f32.mrf.mxu0
      %v5241 = vadd.f32 %v3077, %v5240
      %v5242 = vpop.f32.mrf.mxu0
      %5243 = vmatprep.mubr.f32.mxu0 %v4964
      %5244 = vmatmul.mubr.f32.gmra.mxu0 %v4963
      %v5245 = vpop.f32.mrf.mxu0
      %v5246 = vadd.f32 %v3077, %v5245
      %v5247 = vpop.f32.mrf.mxu0
      %5248 = vmatprep.mubr.f32.mxu0 %v4969
      %5249 = vmatmul.mubr.f32.gmra.mxu0 %v4968
      %v5250 = vpop.f32.mrf.mxu0
      %v5251 = vadd.f32 %v3077, %v5250
      %v5252 = vpop.f32.mrf.mxu0
      %5253 = vdwg.mxu0
      %5254 = vmatprep.subr.mxu0 0.0
      %5255 = vmatpush1.msra.mxu0 %v5020
      %5256 = vmatprep.subr.mxu0 0.0
      %5257 = vmatpush1.msra.mxu0 %v5019
      %5258 = vmatprep.subr.mxu0 0.0
      %5259 = vmatpush1.msra.mxu0 %v5018
      %5260 = vmatprep.subr.mxu0 0.0
      %5261 = vmatpush1.msra.mxu0 %v5017
      %5262 = vmatprep.subr.mxu0 0.0
      %5263 = vmatpush1.msra.mxu0 %v5016
      %5264 = vmatprep.subr.mxu0 0.0
      %5265 = vmatpush1.msra.mxu0 %v5015
      %5266 = vmatprep.subr.mxu0 0.0
      %5267 = vmatpush1.msra.mxu0 %v5014
      %5268 = vmatprep.subr.mxu0 0.0
      %5269 = vmatpush1.msra.mxu0 %v5013
      %5270 = vmatprep.subr.mxu0 0.0
      %5271 = vmatpush1.msra.mxu0 %v5012
      %5272 = vmatprep.subr.mxu0 0.0
      %5273 = vmatpush1.msra.mxu0 %v5011
      %5274 = vmatprep.subr.mxu0 0.0
      %5275 = vmatpush1.msra.mxu0 %v5010
      %5276 = vmatprep.subr.mxu0 0.0
      %5277 = vmatpush1.msra.mxu0 %v5009
      %5278 = vmatprep.subr.mxu0 0.0
      %5279 = vmatpush1.msra.mxu0 %v5008
      %5280 = vmatprep.subr.mxu0 0.0
      %5281 = vmatpush1.msra.mxu0 %v5007
      %5282 = vmatprep.subr.mxu0 0.0
      %5283 = vmatpush1.msra.mxu0 %v5006
      %5284 = vmatprep.subr.mxu0 0.0
      %5285 = vmatpush1.msra.mxu0 %v5005
      %5286 = vmatprep.subr.mxu0 0.0
      %5287 = vmatpush2.msra.mxu0 %v5036
      %5288 = vmatprep.subr.mxu0 0.0
      %5289 = vmatpush2.msra.mxu0 %v5035
      %5290 = vmatprep.subr.mxu0 0.0
      %5291 = vmatpush2.msra.mxu0 %v5034
      %5292 = vmatprep.subr.mxu0 0.0
      %5293 = vmatpush2.msra.mxu0 %v5033
      %5294 = vmatprep.subr.mxu0 0.0
      %5295 = vmatpush2.msra.mxu0 %v5032
      %5296 = vmatprep.subr.mxu0 0.0
      %5297 = vmatpush2.msra.mxu0 %v5031
      %5298 = vmatprep.subr.mxu0 0.0
      %5299 = vmatpush2.msra.mxu0 %v5030
      %5300 = vmatprep.subr.mxu0 0.0
      %5301 = vmatpush2.msra.mxu0 %v5029
      %5302 = vmatprep.subr.mxu0 0.0
      %5303 = vmatpush2.msra.mxu0 %v5028
      %5304 = vmatprep.subr.mxu0 0.0
      %5305 = vmatpush2.msra.mxu0 %v5027
      %5306 = vmatprep.subr.mxu0 0.0
      %5307 = vmatpush2.msra.mxu0 %v5026
      %5308 = vmatprep.subr.mxu0 0.0
      %5309 = vmatpush2.msra.mxu0 %v5025
      %5310 = vmatprep.subr.mxu0 0.0
      %5311 = vmatpush2.msra.mxu0 %v5024
      %5312 = vmatprep.subr.mxu0 0.0
      %5313 = vmatpush2.msra.mxu0 %v5023
      %5314 = vmatprep.subr.mxu0 0.0
      %5315 = vmatpush2.msra.mxu0 %v5022
      %5316 = vmatprep.subr.mxu0 0.0
      %5317 = vmatpush2.msra.mxu0 %v5021
      %5318 = vmatprep.mubr.f32.mxu0 %v4896
      %5319 = vmatmul.mubr.f32.gmra.mxu0 %v4895
      %v5320 = vpop.f32.mrf.mxu0
      %v5321 = vadd.f32 %v5176, %v5320
      %v5322 = vpop.f32.mrf.mxu0
      %5323 = vmatprep.mubr.f32.mxu0 %v4901
      %5324 = vmatmul.mubr.f32.gmra.mxu0 %v4900
      %v5325 = vpop.f32.mrf.mxu0
      %v5326 = vadd.f32 %v5181, %v5325
      %v5327 = vpop.f32.mrf.mxu0
      %5328 = vmatprep.mubr.f32.mxu0 %v4906
      %5329 = vmatmul.mubr.f32.gmra.mxu0 %v4905
      %v5330 = vpop.f32.mrf.mxu0
      %v5331 = vadd.f32 %v5186, %v5330
      %v5332 = vpop.f32.mrf.mxu0
      %5333 = vmatprep.mubr.f32.mxu0 %v4911
      %5334 = vmatmul.mubr.f32.gmra.mxu0 %v4910
      %v5335 = vpop.f32.mrf.mxu0
      %v5336 = vadd.f32 %v5191, %v5335
      %v5337 = vpop.f32.mrf.mxu0
      %5338 = vmatprep.mubr.f32.mxu0 %v4916
      %5339 = vmatmul.mubr.f32.gmra.mxu0 %v4915
      %v5340 = vpop.f32.mrf.mxu0
      %v5341 = vadd.f32 %v5196, %v5340
      %v5342 = vpop.f32.mrf.mxu0
      %5343 = vmatprep.mubr.f32.mxu0 %v4921
      %5344 = vmatmul.mubr.f32.gmra.mxu0 %v4920
      %v5345 = vpop.f32.mrf.mxu0
      %v5346 = vadd.f32 %v5201, %v5345
      %v5347 = vpop.f32.mrf.mxu0
      %5348 = vmatprep.mubr.f32.mxu0 %v4926
      %5349 = vmatmul.mubr.f32.gmra.mxu0 %v4925
      %v5350 = vpop.f32.mrf.mxu0
      %v5351 = vadd.f32 %v5206, %v5350
      %v5352 = vpop.f32.mrf.mxu0
      %5353 = vmatprep.mubr.f32.mxu0 %v4931
      %5354 = vmatmul.mubr.f32.gmra.mxu0 %v4930
      %v5355 = vpop.f32.mrf.mxu0
      %v5356 = vadd.f32 %v5211, %v5355
      %v5357 = vpop.f32.mrf.mxu0
      %5358 = vmatprep.mubr.f32.mxu0 %v4936
      %5359 = vmatmul.mubr.f32.gmra.mxu0 %v4935
      %v5360 = vpop.f32.mrf.mxu0
      %v5361 = vadd.f32 %v5216, %v5360
      %v5362 = vpop.f32.mrf.mxu0
      %5363 = vmatprep.mubr.f32.mxu0 %v4941
      %5364 = vmatmul.mubr.f32.gmra.mxu0 %v4940
      %v5365 = vpop.f32.mrf.mxu0
      %v5366 = vadd.f32 %v5221, %v5365
      %v5367 = vpop.f32.mrf.mxu0
      %5368 = vmatprep.mubr.f32.mxu0 %v4946
      %5369 = vmatmul.mubr.f32.gmra.mxu0 %v4945
      %v5370 = vpop.f32.mrf.mxu0
      %v5371 = vadd.f32 %v5226, %v5370
      %v5372 = vpop.f32.mrf.mxu0
      %5373 = vmatprep.mubr.f32.mxu0 %v4951
      %5374 = vmatmul.mubr.f32.gmra.mxu0 %v4950
      %v5375 = vpop.f32.mrf.mxu0
      %v5376 = vadd.f32 %v5231, %v5375
      %v5377 = vpop.f32.mrf.mxu0
      %5378 = vmatprep.mubr.f32.mxu0 %v4956
      %5379 = vmatmul.mubr.f32.gmra.mxu0 %v4955
      %v5380 = vpop.f32.mrf.mxu0
      %v5381 = vadd.f32 %v5236, %v5380
      %v5382 = vpop.f32.mrf.mxu0
      %5383 = vmatprep.mubr.f32.mxu0 %v4961
      %5384 = vmatmul.mubr.f32.gmra.mxu0 %v4960
      %v5385 = vpop.f32.mrf.mxu0
      %v5386 = vadd.f32 %v5241, %v5385
      %v5387 = vpop.f32.mrf.mxu0
      %5388 = vmatprep.mubr.f32.mxu0 %v4966
      %5389 = vmatmul.mubr.f32.gmra.mxu0 %v4965
      %v5390 = vpop.f32.mrf.mxu0
      %v5391 = vadd.f32 %v5246, %v5390
      %v5392 = vpop.f32.mrf.mxu0
      %5393 = vmatprep.mubr.f32.mxu0 %v4971
      %5394 = vmatmul.mubr.f32.gmra.mxu0 %v4970
      %v5395 = vpop.f32.mrf.mxu0
      %v5396 = vadd.f32 %v5251, %v5395
      %v5397 = vpop.f32.mrf.mxu0
      %5398 = vdwg.mxu0
      %5399 = vmatprep.subr.mxu0 0.0
      %5400 = vmatpush1.msra.mxu0 0.0
      %5401 = vmatprep.subr.mxu0 0.0
      %5402 = vmatpush1.msra.mxu0 0.0
      %5403 = vmatprep.subr.mxu0 0.0
      %5404 = vmatpush1.msra.mxu0 0.0
      %5405 = vmatprep.subr.mxu0 0.0
      %5406 = vmatpush1.msra.mxu0 0.0
      %5407 = vmatprep.subr.mxu0 0.0
      %5408 = vmatpush1.msra.mxu0 0.0
      %5409 = vmatprep.subr.mxu0 0.0
      %5410 = vmatpush1.msra.mxu0 0.0
      %5411 = vmatprep.subr.mxu0 0.0
      %5412 = vmatpush1.msra.mxu0 0.0
      %5413 = vmatprep.subr.mxu0 0.0
      %5414 = vmatpush1.msra.mxu0 0.0
      %5415 = vmatprep.subr.mxu0 0.0
      %5416 = vmatpush1.msra.mxu0 %v5044
      %5417 = vmatprep.subr.mxu0 0.0
      %5418 = vmatpush1.msra.mxu0 %v5043
      %5419 = vmatprep.subr.mxu0 0.0
      %5420 = vmatpush1.msra.mxu0 %v5042
      %5421 = vmatprep.subr.mxu0 0.0
      %5422 = vmatpush1.msra.mxu0 %v5041
      %5423 = vmatprep.subr.mxu0 0.0
      %5424 = vmatpush1.msra.mxu0 %v5040
      %5425 = vmatprep.subr.mxu0 0.0
      %5426 = vmatpush1.msra.mxu0 %v5039
      %5427 = vmatprep.subr.mxu0 0.0
      %5428 = vmatpush1.msra.mxu0 %v5038
      %5429 = vmatprep.subr.mxu0 0.0
      %5430 = vmatpush1.msra.mxu0 %v5037
      %5431 = vmatprep.subr.mxu0 0.0
      %5432 = vmatpush2.msra.mxu0 0.0
      %5433 = vmatprep.subr.mxu0 0.0
      %5434 = vmatpush2.msra.mxu0 0.0
      %5435 = vmatprep.subr.mxu0 0.0
      %5436 = vmatpush2.msra.mxu0 0.0
      %5437 = vmatprep.subr.mxu0 0.0
      %5438 = vmatpush2.msra.mxu0 0.0
      %5439 = vmatprep.subr.mxu0 0.0
      %5440 = vmatpush2.msra.mxu0 0.0
      %5441 = vmatprep.subr.mxu0 0.0
      %5442 = vmatpush2.msra.mxu0 0.0
      %5443 = vmatprep.subr.mxu0 0.0
      %5444 = vmatpush2.msra.mxu0 0.0
      %5445 = vmatprep.subr.mxu0 0.0
      %5446 = vmatpush2.msra.mxu0 0.0
      %5447 = vmatprep.subr.mxu0 0.0
      %5448 = vmatpush2.msra.mxu0 0.0
      %5449 = vmatprep.subr.mxu0 0.0
      %5450 = vmatpush2.msra.mxu0 0.0
      %5451 = vmatprep.subr.mxu0 0.0
      %5452 = vmatpush2.msra.mxu0 0.0
      %5453 = vmatprep.subr.mxu0 0.0
      %5454 = vmatpush2.msra.mxu0 0.0
      %5455 = vmatprep.subr.mxu0 0.0
      %5456 = vmatpush2.msra.mxu0 0.0
      %5457 = vmatprep.subr.mxu0 0.0
      %5458 = vmatpush2.msra.mxu0 0.0
      %5459 = vmatprep.subr.mxu0 0.0
      %5460 = vmatpush2.msra.mxu0 0.0
      %5461 = vmatprep.subr.mxu0 0.0
      %5462 = vmatpush2.msra.mxu0 0.0
      %5463 = vmatprep.mubr.f32.mxu0 0.0
      %5464 = vmatmul.mubr.f32.gmra.mxu0 %v5062
      %v5465 = vpop.f32.mrf.mxu0
      %v5466 = vadd.f32 %v5321, %v5465
      %v5467 = vpop.f32.mrf.mxu0
      %5468 = vmatprep.mubr.f32.mxu0 0.0
      %5469 = vmatmul.mubr.f32.gmra.mxu0 %v5065
      %v5470 = vpop.f32.mrf.mxu0
      %v5471 = vadd.f32 %v5326, %v5470
      %v5472 = vpop.f32.mrf.mxu0
      %5473 = vmatprep.mubr.f32.mxu0 0.0
      %5474 = vmatmul.mubr.f32.gmra.mxu0 %v5068
      %v5475 = vpop.f32.mrf.mxu0
      %v5476 = vadd.f32 %v5331, %v5475
      %v5477 = vpop.f32.mrf.mxu0
      %5478 = vmatprep.mubr.f32.mxu0 0.0
      %5479 = vmatmul.mubr.f32.gmra.mxu0 %v5071
      %v5480 = vpop.f32.mrf.mxu0
      %v5481 = vadd.f32 %v5336, %v5480
      %v5482 = vpop.f32.mrf.mxu0
      %5483 = vmatprep.mubr.f32.mxu0 0.0
      %5484 = vmatmul.mubr.f32.gmra.mxu0 %v5074
      %v5485 = vpop.f32.mrf.mxu0
      %v5486 = vadd.f32 %v5341, %v5485
      %v5487 = vpop.f32.mrf.mxu0
      %5488 = vmatprep.mubr.f32.mxu0 0.0
      %5489 = vmatmul.mubr.f32.gmra.mxu0 %v5077
      %v5490 = vpop.f32.mrf.mxu0
      %v5491 = vadd.f32 %v5346, %v5490
      %v5492 = vpop.f32.mrf.mxu0
      %5493 = vmatprep.mubr.f32.mxu0 0.0
      %5494 = vmatmul.mubr.f32.gmra.mxu0 %v5080
      %v5495 = vpop.f32.mrf.mxu0
      %v5496 = vadd.f32 %v5351, %v5495
      %v5497 = vpop.f32.mrf.mxu0
      %5498 = vmatprep.mubr.f32.mxu0 0.0
      %5499 = vmatmul.mubr.f32.gmra.mxu0 %v5083
      %v5500 = vpop.f32.mrf.mxu0
      %v5501 = vadd.f32 %v5356, %v5500
      %v5502 = vpop.f32.mrf.mxu0
      %5503 = vmatprep.mubr.f32.mxu0 0.0
      %5504 = vmatmul.mubr.f32.gmra.mxu0 %v5086
      %v5505 = vpop.f32.mrf.mxu0
      %v5506 = vadd.f32 %v5361, %v5505
      %v5507 = vpop.f32.mrf.mxu0
      %5508 = vmatprep.mubr.f32.mxu0 0.0
      %5509 = vmatmul.mubr.f32.gmra.mxu0 %v5089
      %v5510 = vpop.f32.mrf.mxu0
      %v5511 = vadd.f32 %v5366, %v5510
      %v5512 = vpop.f32.mrf.mxu0
      %5513 = vmatprep.mubr.f32.mxu0 0.0
      %5514 = vmatmul.mubr.f32.gmra.mxu0 %v5092
      %v5515 = vpop.f32.mrf.mxu0
      %v5516 = vadd.f32 %v5371, %v5515
      %v5517 = vpop.f32.mrf.mxu0
      %5518 = vmatprep.mubr.f32.mxu0 0.0
      %5519 = vmatmul.mubr.f32.gmra.mxu0 %v5095
      %v5520 = vpop.f32.mrf.mxu0
      %v5521 = vadd.f32 %v5376, %v5520
      %v5522 = vpop.f32.mrf.mxu0
      %5523 = vmatprep.mubr.f32.mxu0 0.0
      %5524 = vmatmul.mubr.f32.gmra.mxu0 %v5098
      %v5525 = vpop.f32.mrf.mxu0
      %v5526 = vadd.f32 %v5381, %v5525
      %v5527 = vpop.f32.mrf.mxu0
      %5528 = vmatprep.mubr.f32.mxu0 0.0
      %5529 = vmatmul.mubr.f32.gmra.mxu0 %v5101
      %v5530 = vpop.f32.mrf.mxu0
      %v5531 = vadd.f32 %v5386, %v5530
      %v5532 = vpop.f32.mrf.mxu0
      %5533 = vmatprep.mubr.f32.mxu0 0.0
      %5534 = vmatmul.mubr.f32.gmra.mxu0 %v5104
      %v5535 = vpop.f32.mrf.mxu0
      %v5536 = vadd.f32 %v5391, %v5535
      %v5537 = vpop.f32.mrf.mxu0
      %5538 = vmatprep.mubr.f32.mxu0 0.0
      %5539 = vmatmul.mubr.f32.gmra.mxu0 %v5107
      %v5540 = vpop.f32.mrf.mxu0
      %v5541 = vadd.f32 %v5396, %v5540
      %v5542 = vpop.f32.mrf.mxu0
      %5543 = vdwg.mxu0
      %v5544 = vmax.f32 %v5466, 0.0
      %v5545 = vmax.f32 %v5471, 0.0
      %v5546 = vmax.f32 %v5476, 0.0
      %v5547 = vmax.f32 %v5481, 0.0
      %v5548 = vmax.f32 %v5486, 0.0
      %v5549 = vmax.f32 %v5491, 0.0
      %v5550 = vmax.f32 %v5496, 0.0
      %v5551 = vmax.f32 %v5501, 0.0
      %v5552 = vmax.f32 %v5506, 0.0
      %v5553 = vmax.f32 %v5511, 0.0
      %v5554 = vmax.f32 %v5516, 0.0
      %v5555 = vmax.f32 %v5521, 0.0
      %v5556 = vmax.f32 %v5526, 0.0
      %v5557 = vmax.f32 %v5531, 0.0
      %v5558 = vmax.f32 %v5536, 0.0
      %v5559 = vmax.f32 %v5541, 0.0
      %5561 = vset.pattern.permute.xlu0 9
      %5562 = vperm.xlu0 %5561, %v5045
      %v5563 = vpop.permute.xlu0 %5562
      %5566 = vset.pattern.permute.xlu0 9
      %5567 = vperm.xlu0 %5566, %v5046
      %v5568 = vpop.permute.xlu0 %5567
      %5571 = vset.pattern.permute.xlu0 9
      %5572 = vperm.xlu0 %5571, %v5047
      %v5573 = vpop.permute.xlu0 %5572
      %5576 = vset.pattern.permute.xlu0 9
      %5577 = vperm.xlu0 %5576, %v5048
      %v5578 = vpop.permute.xlu0 %5577
      %5581 = vset.pattern.permute.xlu0 9
      %5582 = vperm.xlu0 %5581, %v5049
      %v5583 = vpop.permute.xlu0 %5582
      %5586 = vset.pattern.permute.xlu0 9
      %5587 = vperm.xlu0 %5586, %v5050
      %v5588 = vpop.permute.xlu0 %5587
      %5591 = vset.pattern.permute.xlu0 9
      %5592 = vperm.xlu0 %5591, %v5051
      %v5593 = vpop.permute.xlu0 %5592
      %5596 = vset.pattern.permute.xlu0 9
      %5597 = vperm.xlu0 %5596, %v5052
      %v5598 = vpop.permute.xlu0 %5597
      %5601 = vset.pattern.permute.xlu0 9
      %5602 = vperm.xlu0 %5601, %v5053
      %v5603 = vpop.permute.xlu0 %5602
      %5606 = vset.pattern.permute.xlu0 9
      %5607 = vperm.xlu0 %5606, %v5054
      %v5608 = vpop.permute.xlu0 %5607
      %5611 = vset.pattern.permute.xlu0 9
      %5612 = vperm.xlu0 %5611, %v5055
      %v5613 = vpop.permute.xlu0 %5612
      %5616 = vset.pattern.permute.xlu0 9
      %5617 = vperm.xlu0 %5616, %v5056
      %v5618 = vpop.permute.xlu0 %5617
      %5621 = vset.pattern.permute.xlu0 9
      %5622 = vperm.xlu0 %5621, %v5057
      %v5623 = vpop.permute.xlu0 %5622
      %5626 = vset.pattern.permute.xlu0 9
      %5627 = vperm.xlu0 %5626, %v5058
      %v5628 = vpop.permute.xlu0 %5627
      %5631 = vset.pattern.permute.xlu0 9
      %5632 = vperm.xlu0 %5631, %v5059
      %v5633 = vpop.permute.xlu0 %5632
      %5636 = vset.pattern.permute.xlu0 9
      %5637 = vperm.xlu0 %5636, %v5060
      %v5638 = vpop.permute.xlu0 %5637
      %v5640 = vmul.f32 %v5544, %v5563
      %v5641 = vmul.f32 %v5545, %v5568
      %v5642 = vmul.f32 %v5546, %v5573
      %v5643 = vmul.f32 %v5547, %v5578
      %v5644 = vmul.f32 %v5548, %v5583
      %v5645 = vmul.f32 %v5549, %v5588
      %v5646 = vmul.f32 %v5550, %v5593
      %v5647 = vmul.f32 %v5551, %v5598
      %v5648 = vmul.f32 %v5552, %v5603
      %v5649 = vmul.f32 %v5553, %v5608
      %v5650 = vmul.f32 %v5554, %v5613
      %v5651 = vmul.f32 %v5555, %v5618
      %v5652 = vmul.f32 %v5556, %v5623
      %v5653 = vmul.f32 %v5557, %v5628
      %v5654 = vmul.f32 %v5558, %v5633
      %v5655 = vmul.f32 %v5559, %v5638
      %v5657 = vsel %vm256, %v5640, 0
      %v5660 = vsel %vm256, %v5641, 0
      %v5663 = vsel %vm256, %v5642, 0
      %v5666 = vsel %vm256, %v5643, 0
      %v5669 = vsel %vm256, %v5644, 0
      %v5672 = vsel %vm256, %v5645, 0
      %v5675 = vsel %vm256, %v5646, 0
      %v5678 = vsel %vm256, %v5647, 0
      %v5681 = vsel %vm256, %v5648, 0
      %v5684 = vsel %vm256, %v5649, 0
      %v5687 = vsel %vm256, %v5650, 0
      %v5690 = vsel %vm256, %v5651, 0
      %v5693 = vsel %vm256, %v5652, 0
      %v5696 = vsel %vm256, %v5653, 0
      %v5699 = vsel %vm256, %v5654, 0
      %v5702 = vsel %vm256, %v5655, 0
      %5704 = vmatprep.subr.mxu0 0.0
      %5705 = vmatpush1.msra.mxu0 0.0
      %5706 = vmatprep.subr.mxu0 0.0
      %5707 = vmatpush1.msra.mxu0 0.0
      %5708 = vmatprep.subr.mxu0 0.0
      %5709 = vmatpush1.msra.mxu0 0.0
      %5710 = vmatprep.subr.mxu0 0.0
      %5711 = vmatpush1.msra.mxu0 0.0
      %5712 = vmatprep.subr.mxu0 0.0
      %5713 = vmatpush1.msra.mxu0 0.0
      %5714 = vmatprep.subr.mxu0 0.0
      %5715 = vmatpush1.msra.mxu0 0.0
      %5716 = vmatprep.subr.mxu0 0.0
      %5717 = vmatpush1.msra.mxu0 0.0
      %5718 = vmatprep.subr.mxu0 0.0
      %5719 = vmatpush1.msra.mxu0 0.0
      %5720 = vmatprep.subr.mxu0 0.0
      %5721 = vmatpush1.msra.mxu0 %v2903
      %5722 = vmatprep.subr.mxu0 0.0
      %5723 = vmatpush1.msra.mxu0 %v2902
      %5724 = vmatprep.subr.mxu0 0.0
      %5725 = vmatpush1.msra.mxu0 %v2901
      %5726 = vmatprep.subr.mxu0 0.0
      %5727 = vmatpush1.msra.mxu0 %v2900
      %5728 = vmatprep.subr.mxu0 0.0
      %5729 = vmatpush1.msra.mxu0 %v2899
      %5730 = vmatprep.subr.mxu0 0.0
      %5731 = vmatpush1.msra.mxu0 %v2898
      %5732 = vmatprep.subr.mxu0 0.0
      %5733 = vmatpush1.msra.mxu0 %v2897
      %5734 = vmatprep.subr.mxu0 0.0
      %5735 = vmatpush1.msra.mxu0 %v2896
      %5736 = vmatprep.subr.mxu0 0.0
      %5737 = vmatpush2.msra.mxu0 0.0
      %5738 = vmatprep.subr.mxu0 0.0
      %5739 = vmatpush2.msra.mxu0 0.0
      %5740 = vmatprep.subr.mxu0 0.0
      %5741 = vmatpush2.msra.mxu0 0.0
      %5742 = vmatprep.subr.mxu0 0.0
      %5743 = vmatpush2.msra.mxu0 0.0
      %5744 = vmatprep.subr.mxu0 0.0
      %5745 = vmatpush2.msra.mxu0 0.0
      %5746 = vmatprep.subr.mxu0 0.0
      %5747 = vmatpush2.msra.mxu0 0.0
      %5748 = vmatprep.subr.mxu0 0.0
      %5749 = vmatpush2.msra.mxu0 0.0
      %5750 = vmatprep.subr.mxu0 0.0
      %5751 = vmatpush2.msra.mxu0 0.0
      %5752 = vmatprep.subr.mxu0 0.0
      %5753 = vmatpush2.msra.mxu0 0.0
      %5754 = vmatprep.subr.mxu0 0.0
      %5755 = vmatpush2.msra.mxu0 0.0
      %5756 = vmatprep.subr.mxu0 0.0
      %5757 = vmatpush2.msra.mxu0 0.0
      %5758 = vmatprep.subr.mxu0 0.0
      %5759 = vmatpush2.msra.mxu0 0.0
      %5760 = vmatprep.subr.mxu0 0.0
      %5761 = vmatpush2.msra.mxu0 0.0
      %5762 = vmatprep.subr.mxu0 0.0
      %5763 = vmatpush2.msra.mxu0 0.0
      %5764 = vmatprep.subr.mxu0 0.0
      %5765 = vmatpush2.msra.mxu0 0.0
      %5766 = vmatprep.subr.mxu0 0.0
      %5767 = vmatpush2.msra.mxu0 0.0
      %5768 = vmatprep.mubr.f32.mxu0 0.0
      %5769 = vmatmul.mubr.f32.gmra.mxu0 %v5657
      %v5770 = vpop.f32.mrf.mxu0
      %v5771 = vadd.f32 %v3678, %v5770
      %v5772 = vpop.f32.mrf.mxu0
      %5773 = vmatprep.mubr.f32.mxu0 0.0
      %5774 = vmatmul.mubr.f32.gmra.mxu0 %v5660
      %v5775 = vpop.f32.mrf.mxu0
      %v5776 = vadd.f32 %v3678, %v5775
      %v5777 = vpop.f32.mrf.mxu0
      %5778 = vmatprep.mubr.f32.mxu0 0.0
      %5779 = vmatmul.mubr.f32.gmra.mxu0 %v5663
      %v5780 = vpop.f32.mrf.mxu0
      %v5781 = vadd.f32 %v3678, %v5780
      %v5782 = vpop.f32.mrf.mxu0
      %5783 = vmatprep.mubr.f32.mxu0 0.0
      %5784 = vmatmul.mubr.f32.gmra.mxu0 %v5666
      %v5785 = vpop.f32.mrf.mxu0
      %v5786 = vadd.f32 %v3678, %v5785
      %v5787 = vpop.f32.mrf.mxu0
      %5788 = vmatprep.mubr.f32.mxu0 0.0
      %5789 = vmatmul.mubr.f32.gmra.mxu0 %v5669
      %v5790 = vpop.f32.mrf.mxu0
      %v5791 = vadd.f32 %v3678, %v5790
      %v5792 = vpop.f32.mrf.mxu0
      %5793 = vmatprep.mubr.f32.mxu0 0.0
      %5794 = vmatmul.mubr.f32.gmra.mxu0 %v5672
      %v5795 = vpop.f32.mrf.mxu0
      %v5796 = vadd.f32 %v3678, %v5795
      %v5797 = vpop.f32.mrf.mxu0
      %5798 = vmatprep.mubr.f32.mxu0 0.0
      %5799 = vmatmul.mubr.f32.gmra.mxu0 %v5675
      %v5800 = vpop.f32.mrf.mxu0
      %v5801 = vadd.f32 %v3678, %v5800
      %v5802 = vpop.f32.mrf.mxu0
      %5803 = vmatprep.mubr.f32.mxu0 0.0
      %5804 = vmatmul.mubr.f32.gmra.mxu0 %v5678
      %v5805 = vpop.f32.mrf.mxu0
      %v5806 = vadd.f32 %v3678, %v5805
      %v5807 = vpop.f32.mrf.mxu0
      %5808 = vmatprep.mubr.f32.mxu0 0.0
      %5809 = vmatmul.mubr.f32.gmra.mxu0 %v5681
      %v5810 = vpop.f32.mrf.mxu0
      %v5811 = vadd.f32 %v3678, %v5810
      %v5812 = vpop.f32.mrf.mxu0
      %5813 = vmatprep.mubr.f32.mxu0 0.0
      %5814 = vmatmul.mubr.f32.gmra.mxu0 %v5684
      %v5815 = vpop.f32.mrf.mxu0
      %v5816 = vadd.f32 %v3678, %v5815
      %v5817 = vpop.f32.mrf.mxu0
      %5818 = vmatprep.mubr.f32.mxu0 0.0
      %5819 = vmatmul.mubr.f32.gmra.mxu0 %v5687
      %v5820 = vpop.f32.mrf.mxu0
      %v5821 = vadd.f32 %v3678, %v5820
      %v5822 = vpop.f32.mrf.mxu0
      %5823 = vmatprep.mubr.f32.mxu0 0.0
      %5824 = vmatmul.mubr.f32.gmra.mxu0 %v5690
      %v5825 = vpop.f32.mrf.mxu0
      %v5826 = vadd.f32 %v3678, %v5825
      %v5827 = vpop.f32.mrf.mxu0
      %5828 = vmatprep.mubr.f32.mxu0 0.0
      %5829 = vmatmul.mubr.f32.gmra.mxu0 %v5693
      %v5830 = vpop.f32.mrf.mxu0
      %v5831 = vadd.f32 %v3678, %v5830
      %v5832 = vpop.f32.mrf.mxu0
      %5833 = vmatprep.mubr.f32.mxu0 0.0
      %5834 = vmatmul.mubr.f32.gmra.mxu0 %v5696
      %v5835 = vpop.f32.mrf.mxu0
      %v5836 = vadd.f32 %v3678, %v5835
      %v5837 = vpop.f32.mrf.mxu0
      %5838 = vmatprep.mubr.f32.mxu0 0.0
      %5839 = vmatmul.mubr.f32.gmra.mxu0 %v5699
      %v5840 = vpop.f32.mrf.mxu0
      %v5841 = vadd.f32 %v3678, %v5840
      %v5842 = vpop.f32.mrf.mxu0
      %5843 = vmatprep.mubr.f32.mxu0 0.0
      %5844 = vmatmul.mubr.f32.gmra.mxu0 %v5702
      %v5845 = vpop.f32.mrf.mxu0
      %v5846 = vadd.f32 %v3678, %v5845
      %v5847 = vpop.f32.mrf.mxu0
      %5848 = vdwg.mxu0
      %v5849 = vmax.f32 %v5771, 0.0
      %v5850 = vmax.f32 %v5776, 0.0
      %v5851 = vmax.f32 %v5781, 0.0
      %v5852 = vmax.f32 %v5786, 0.0
      %v5853 = vmax.f32 %v5791, 0.0
      %v5854 = vmax.f32 %v5796, 0.0
      %v5855 = vmax.f32 %v5801, 0.0
      %v5856 = vmax.f32 %v5806, 0.0
      %v5857 = vmax.f32 %v5811, 0.0
      %v5858 = vmax.f32 %v5816, 0.0
      %v5859 = vmax.f32 %v5821, 0.0
      %v5860 = vmax.f32 %v5826, 0.0
      %v5861 = vmax.f32 %v5831, 0.0
      %v5862 = vmax.f32 %v5836, 0.0
      %v5863 = vmax.f32 %v5841, 0.0
      %v5864 = vmax.f32 %v5846, 0.0
      %5865 = vst [vmem:[%s251 + $0x100] sm:$0xff] %v5849
      %5866 = vst [vmem:[%s251 + $0x108] sm:$0xff] %v5850
      %5867 = vst [vmem:[%s251 + $0x110] sm:$0xff] %v5851
      %5868 = vst [vmem:[%s251 + $0x118] sm:$0xff] %v5852
      %5869 = vst [vmem:[%s251 + $0x120] sm:$0xff] %v5853
      %5870 = vst [vmem:[%s251 + $0x128] sm:$0xff] %v5854
      %5871 = vst [vmem:[%s251 + $0x130] sm:$0xff] %v5855
      %5872 = vst [vmem:[%s251 + $0x138] sm:$0xff] %v5856
      %5873 = vst [vmem:[%s251 + $0x140] sm:$0xff] %v5857
      %5874 = vst [vmem:[%s251 + $0x148] sm:$0xff] %v5858
      %5875 = vst [vmem:[%s251 + $0x150] sm:$0xff] %v5859
      %5876 = vst [vmem:[%s251 + $0x158] sm:$0xff] %v5860
      %5877 = vst [vmem:[%s251 + $0x160] sm:$0xff] %v5861
      %5878 = vst [vmem:[%s251 + $0x168] sm:$0xff] %v5862
      %5879 = vst [vmem:[%s251 + $0x170] sm:$0xff] %v5863
      %5880 = vst [vmem:[%s251 + $0x178] sm:$0xff] %v5864
      %p5881 = scmp.lt.s32.totalorder %s17, 1
      %s5882 = scalar_select %p5881, %s17, 1
      %s5883 = smul.addr %s5882, 48
      %s5884 = smul.addr %s5883, 8
      %s5885 = scalar_lea.vmem %s6, %s5884
      // Predicated region
      $region45: #{model_forward.1} parent=43 // pred_check
        %p5886 = pneg %p166
      $region46: #{model_forward.1} parent=43 // pred_check_branch
        %5888 = sbr.rel (%p5886) target = $region48
      $region47: #{model_forward.1} parent=43 // pred_region
        _
      $region48: #{model_forward.1} parent=43 // pred_fallthru
        _
    $region44: #{model_forward.1} parent=5 // pred_fallthru
      _
    %p5889 = scmp.le.s32.totalorder 2, %s12
    // Predicated region
    $region49: #{model_forward.1} parent=5 // pred_check
      %p5890 = pneg %p5889
    $region50: #{model_forward.1} parent=5 // pred_check_branch
      %5892 = sbr.rel (%p5890) target = $region52
    $region51: #{model_forward.1} parent=5 // pred_region
      %s5893 = ssub.s32 %s12, 2
      // Predicated region
      $region53: #{model_forward.1} parent=51 // pred_check
        %p5894 = pneg %p172
      $region54: #{model_forward.1} parent=51 // pred_check_branch
        %5896 = sbr.rel (%p5894) target = $region56
      $region55: #{model_forward.1} parent=51 // pred_region
        %p5897 = scmp.lt.s32.totalorder %s18, 1
        %s5898 = scalar_select %p5897, %s18, 1
        %s5899 = smul.addr %s5898, 48
        %s5900 = smul.addr %s5899, 8
        %s5901 = scalar_lea.vmem %s6, %s5900
      $region56: #{model_forward.1} parent=51 // pred_fallthru
        _
    $region52: #{model_forward.1} parent=5 // pred_fallthru
      _
  $region6: #{model_forward.1} parent=0 // loop_footer
    %s16 = sadd.s32 1, %s12
  $region7: #{model_forward.1} parent=0 // loop_footer_branch
    %11 = sbr.rel target = $region3
  $region8: #{model_forward.1} parent=0 // loop_exit
    _

</llo_original>
